<compile_context>
chip_gen: v5e
topology: v5e:2x2
jax: 0.10.0
libtpu: 0.0.40
codegen_flags: <defaults>
</compile_context>

<pallas_src>
import functools

import jax
import jax.numpy as jnp
from jax.experimental import pallas as pl
from jax.experimental.pallas import tpu as pltpu


def _round_up(x, m):
    return ((x + m - 1) // m) * m


def _pad_lanes(a, width):
    """Zero-pad the last (lane) dim of a 2-D f32 array to `width`."""
    a = a.astype(jnp.float32)
    return jnp.zeros((a.shape[0], width), jnp.float32).at[:, :a.shape[1]].set(a)


# ----------------------------------------------------------------------------
# Fused kernel: lin0 + edge-MLP + 3x(NNConv mean-aggr + GRU) + Set2Set(3 steps)
# One grid step == one independent graph-batch (leading batch axis).
# ----------------------------------------------------------------------------
def _infograph_kernel(nf_ref, ef_ref, g_ref, s_ref, mm_ref,
                      w0_ref, b0_ref, we1_ref, be1_ref, we2_ref, be2_ref,
                      cb_ref, wih_ref, bih_ref, whh_ref, bhh_ref,
                      ws2s_ref, sb_ref, rexp_ref, rsum_ref,
                      emb_ref, fmap_ref, *, D, conv_steps, s2s_steps):
    f32 = jnp.float32
    bf16 = jnp.bfloat16

    Np = nf_ref.shape[0]
    Gp = mm_ref.shape[0]
    GW = wih_ref.shape[1]      # padded GRU gate width (>= 3D, multiple of 128)
    SW = ws2s_ref.shape[1]     # padded LSTM gate width (>= 4D, multiple of 128)

    # ---- lin0 + ReLU (bf16 MXU, f32 accumulation & elementwise) -------------
    out = jnp.maximum(
        jnp.dot(nf_ref[...], w0_ref[...], preferred_element_type=f32) + b0_ref[...],
        0.0)                                                            # (Np, D) f32
    h = out

    # ---- edge network (computed once; w2 kept resident in bf16 only) --------
    e1 = jnp.maximum(
        jnp.dot(ef_ref[...], we1_ref[...], preferred_element_type=f32) + be1_ref[...],
        0.0)                                                            # (Ep, 128)
    w2 = (jnp.dot(e1.astype(bf16), we2_ref[...], preferred_element_type=f32)
          + be2_ref[...]).astype(bf16)                                  # (Ep, D*D) bf16

    gather = g_ref[...]            # (Ep, Np) bf16  one-hot src gather
    scatter = s_ref[...]           # (Np, Ep) bf16  mean-aggregation weights
    rexp = rexp_ref[...]           # (D, D*D)  bf16 xrep[e, d*D+f] = x_src[e, d]
    rsum = rsum_ref[...]           # (D*D, D)  bf16 sums the D blocks back down
    wih = wih_ref[...]             # (D, GW)   bf16 stacked GRU input weights
    whh = whh_ref[...]             # (D, GW)   bf16 stacked GRU hidden weights

    # loop-invariant broadcasts hoisted out of the (unrolled) conv loop
    convb = jnp.broadcast_to(cb_ref[...], (Np, D))
    bih = jnp.broadcast_to(bih_ref[...], (Np, GW))
    bhh = jnp.broadcast_to(bhh_ref[...], (Np, GW))

    for _ in range(conv_steps):
        # NNConv (aggr='mean', root_weight=False) followed by ReLU.
        # msg[e,f] = sum_d x_src[e,d] * w2[e, d*D+f] via two kron matmuls.
        x_src = jnp.dot(gather, out.astype(bf16), preferred_element_type=f32)   # (Ep, D)
        xrep = jnp.dot(x_src.astype(bf16), rexp, preferred_element_type=f32)    # (Ep, D*D)
        msg = jnp.dot((xrep * w2).astype(bf16), rsum, preferred_element_type=f32)  # (Ep, D)
        agg = jnp.dot(scatter, msg.astype(bf16), preferred_element_type=f32)    # (Np, D)
        m = jnp.maximum(agg + convb, 0.0)

        # GRU cell (PyTorch gate order r, z, n), stacked gate weights.
        gi = jnp.dot(m.astype(bf16), wih, preferred_element_type=f32) + bih     # (Np, GW)
        gh = jnp.dot(h.astype(bf16), whh, preferred_element_type=f32) + bhh     # (Np, GW)
        sg = jax.nn.sigmoid(gi + gh)        # one full-width (128-lane) EUP pass
        r = sg[:, 0:D]
        z = sg[:, D:2 * D]
        n = jnp.tanh(gi[:, 2 * D:3 * D] + r * gh[:, 2 * D:3 * D])
        h = (1.0 - z) * n + z * h
        out = h

    fmap_ref[...] = out

    # ---- Set2Set pooling (1-layer LSTM, gate order i,f,g,o, masked softmax) --
    mm = mm_ref[...]                                   # (Gp, Np) bf16 membership
    mask = mm > 0                                      # hoisted out of the loop
    out_b = out.astype(bf16)                           # reused by both s2s dots
    ws2s = ws2s_ref[...]                               # (3D, SW) bf16 stacked [Wq;Wr;Wh]
    sbb = jnp.broadcast_to(sb_ref[...], (Gp, SW))

    hl = jnp.zeros((Gp, D), f32)
    c = jnp.zeros((Gp, D), f32)
    q = jnp.zeros((Gp, D), f32)
    r_ = jnp.zeros((Gp, D), f32)

    for _ in range(s2s_steps):
        qrh = jnp.concatenate([q, r_, hl], axis=1).astype(bf16)        # (Gp, 3D)
        pre = jnp.dot(qrh, ws2s, preferred_element_type=f32) + sbb     # (Gp, SW)
        sg = jax.nn.sigmoid(pre)                                       # full-width
        i_g = sg[:, 0:D]
        f_g = sg[:, D:2 * D]
        o_g = sg[:, 3 * D:4 * D]
        g_g = jnp.tanh(pre[:, 2 * D:3 * D])
        c = f_g * c + i_g * g_g
        hl = o_g * jnp.tanh(c)
        q = hl                                                         # (Gp, D)

        # scores[g, n] = <q[g], out[n]> — contract last dims, no transposed copy
        scores = jax.lax.dot_general(q.astype(bf16), out_b,
                                     (((1,), (1,)), ((), ())),
                                     preferred_element_type=f32)       # (Gp, Np)
        masked = jnp.where(mask, scores, jnp.float32(-1e30))
        mx = jnp.max(masked, axis=1, keepdims=True)                    # (Gp, 1)
        ex = jnp.exp(masked - mx)        # masked entries underflow to exactly 0
        denom = jnp.sum(ex, axis=1, keepdims=True)                     # (Gp, 1)
        alpha = ex * pl.reciprocal(denom, approx=True)                 # (Gp, Np)
        r_ = jnp.dot(alpha.astype(bf16), out_b, preferred_element_type=f32)  # (Gp, D)

    # single lane-dense store of the (Gp, 2D) embedding
    emb_ref[...] = jnp.concatenate([q, r_], axis=1)


# ----------------------------------------------------------------------------
# Parameter construction (deterministic, synthetic; matches module shapes).
# ----------------------------------------------------------------------------
def init_params(key, num_features, edge_feat_dim, D):
    ks = jax.random.split(key, 16)

    def f(k, shape, fan_in):
        return (jax.random.normal(k, shape, jnp.float32) /
                jnp.sqrt(jnp.float32(fan_in)))

    return {
        # lin0: Linear(num_features, D)
        'lin0_w': f(ks[0], (num_features, D), num_features),
        'lin0_b': f(ks[1], (D,), num_features),
        # edge nn: Linear(edge_feat, 128) -> ReLU -> Linear(128, D*D)
        'edge_w1': f(ks[2], (edge_feat_dim, 128), edge_feat_dim),
        'edge_b1': f(ks[3], (128,), edge_feat_dim),
        'edge_w2': f(ks[4], (128, D * D), 128),
        'edge_b2': f(ks[5], (D * D,), 128),
        # NNConv bias (root_weight=False, bias=True)
        'conv_b': f(ks[6], (D,), D),
        # GRU(D, D): gate order r, z, n
        'gru_wih': f(ks[7], (3, D, D), D),
        'gru_whh': f(ks[8], (3, D, D), D),
        'gru_bih': f(ks[9], (3, D), D),
        'gru_bhh': f(ks[10], (3, D), D),
        # Set2Set LSTM(2D -> D): gate order i, f, g, o; input split into q/r halves
        's2s_wiq': f(ks[11], (4, D, D), 2 * D),
        's2s_wir': f(ks[12], (4, D, D), 2 * D),
        's2s_whh': f(ks[13], (4, D, D), D),
        's2s_b': f(ks[14], (4, D), D),   # = b_ih + b_hh when loading a checkpoint
    }


# ----------------------------------------------------------------------------
# Glue: per-batch one-hot matrices (dense gather / mean-scatter / membership)
# ----------------------------------------------------------------------------
def _graph_mats(src, dst, gi, *, Np, Ep, Gp, E):
    f32 = jnp.float32
    e_valid = (jnp.arange(Ep) < E).astype(f32)
    gather = jax.nn.one_hot(src, Np, dtype=f32) * e_valid[:, None]     # (Ep, Np)
    dst_oh = jax.nn.one_hot(dst, Np, dtype=f32) * e_valid[:, None]     # (Ep, Np)
    deg = jnp.sum(dst_oh, axis=0)                                      # (Np,)
    scatter = dst_oh.T / jnp.maximum(deg, 1.0)[:, None]                # (Np, Ep)
    mm = jax.nn.one_hot(gi, Gp, dtype=f32).T                           # (Gp, Np)
    return gather, scatter, mm


# ----------------------------------------------------------------------------
# Batched forward: inputs carry a leading axis B of independent graph-batches.
#   node_features (B,N,F), edge_index (B,2,E), edge_features (B,E,Fe),
#   graph_index (B,N), num_graphs: int (graphs per batch).
# Returns emb (B,G,2D), fmap (B,N,D).
# ----------------------------------------------------------------------------
def infograph_encoder_forward_batched(params, node_features, edge_index,
                                      edge_features, graph_index, num_graphs):
    f32, bf16 = jnp.float32, jnp.bfloat16
    B, N, F = node_features.shape
    E = edge_index.shape[-1]
    Fe = edge_features.shape[-1]
    G = int(num_graphs)
    D = params['lin0_w'].shape[1]

    Np = _round_up(N, 8)
    Ep = _round_up(E, 8)
    Gp = _round_up(G, 8)
    GW = _round_up(3 * D, 128)   # padded GRU gate width
    SW = _round_up(4 * D, 128)   # padded Set2Set LSTM gate width

    # ---- sublane-pad node / edge axes (bf16 MXU operands) -------------------
    nf_p = jnp.zeros((B, Np, F), bf16).at[:, :N].set(node_features.astype(bf16))
    ef_p = jnp.zeros((B, Ep, Fe), bf16).at[:, :E].set(edge_features.astype(bf16))

    src_p = jnp.zeros((B, Ep), jnp.int32).at[:, :E].set(edge_index[:, 0].astype(jnp.int32))
    dst_p = jnp.zeros((B, Ep), jnp.int32).at[:, :E].set(edge_index[:, 1].astype(jnp.int32))
    gi_p = jnp.full((B, Np), Gp, jnp.int32).at[:, :N].set(graph_index.astype(jnp.int32))

    gather, scatter, mm = jax.vmap(
        functools.partial(_graph_mats, Np=Np, Ep=Ep, Gp=Gp, E=E))(src_p, dst_p, gi_p)
    gather = gather.astype(bf16)
    scatter = scatter.astype(bf16)
    mm = mm.astype(bf16)

    # ---- pack parameters: stacked, lane-padded gate matrices (bf16) ---------
    w0 = params['lin0_w'].astype(bf16)
    b0 = params['lin0_b'].reshape(1, D).astype(f32)
    we1 = params['edge_w1'].astype(bf16)
    be1 = params['edge_b1'].reshape(1, -1).astype(f32)
    we2 = params['edge_w2'].astype(bf16)
    be2 = params['edge_b2'].reshape(1, -1).astype(f32)
    cb = params['conv_b'].reshape(1, D).astype(f32)

    def stack_gates(w):          # (K, D, D) -> (D, K*D)
        k = w.shape[0]
        return w.transpose(1, 0, 2).reshape(D, k * D)

    wih = _pad_lanes(stack_gates(params['gru_wih']), GW).astype(bf16)
    whh = _pad_lanes(stack_gates(params['gru_whh']), GW).astype(bf16)
    bih = _pad_lanes(params['gru_bih'].reshape(1, 3 * D), GW)   # f32
    bhh = _pad_lanes(params['gru_bhh'].reshape(1, 3 * D), GW)   # f32

    # Set2Set LSTM: single stacked (3D, SW) weight so [q, r, h] @ W is 1 matmul
    ws2s = _pad_lanes(jnp.concatenate([stack_gates(params['s2s_wiq']),
                                       stack_gates(params['s2s_wir']),
                                       stack_gates(params['s2s_whh'])], axis=0),
                      SW).astype(bf16)                          # (3D, SW)
    sb = _pad_lanes(params['s2s_b'].reshape(1, 4 * D), SW)      # f32

    # constant kron matrices turning the per-edge message contraction into 2
    # matmuls (0/1 entries -> exact in bf16)
    rexp = jnp.kron(jnp.eye(D, dtype=f32), jnp.ones((1, D), f32)).astype(bf16)  # (D, D*D)
    rsum = jnp.kron(jnp.ones((D, 1), f32), jnp.eye(D, dtype=f32)).astype(bf16)  # (D*D, D)

    def batched(shape):
        return pl.BlockSpec((None,) + shape, lambda b: (b,) + (0,) * len(shape))

    def shared(a):
        return pl.BlockSpec(a.shape, lambda b: (0,) * a.ndim)

    emb_p, fmap_p = pl.pallas_call(
        functools.partial(_infograph_kernel, D=D, conv_steps=3, s2s_steps=3),
        grid=(B,),
        in_specs=[
            batched((Np, F)), batched((Ep, Fe)),
            batched((Ep, Np)), batched((Np, Ep)), batched((Gp, Np)),
            shared(w0), shared(b0), shared(we1), shared(be1),
            shared(we2), shared(be2), shared(cb),
            shared(wih), shared(bih), shared(whh), shared(bhh),
            shared(ws2s), shared(sb), shared(rexp), shared(rsum),
        ],
        out_specs=[batched((Gp, 2 * D)), batched((Np, D))],
        out_shape=(jax.ShapeDtypeStruct((B, Gp, 2 * D), f32),
                   jax.ShapeDtypeStruct((B, Np, D), f32)),
        compiler_params=pltpu.CompilerParams(
            dimension_semantics=("parallel",),
            vmem_limit_bytes=48 * 1024 * 1024),
    )(nf_p, ef_p, gather, scatter, mm,
      w0, b0, we1, be1, we2, be2, cb,
      wih, bih, whh, bhh,
      ws2s, sb, rexp, rsum)

    return emb_p[:, :G], fmap_p[:, :N]


# Single graph-batch forward: matches the PyTorch module's forward(data).
def infograph_encoder_forward(params, node_features, edge_index, edge_features,
                              graph_index, num_graphs):
    emb, fmap = infograph_encoder_forward_batched(
        params, node_features[None], edge_index[None], edge_features[None],
        graph_index[None], num_graphs)
    return emb[0], fmap[0]


# ----------------------------------------------------------------------------
if __name__ == "__main__":
    key = jax.random.PRNGKey(0)
    num_features, edge_feat_dim, D = 16, 8, 32
    N, E, G = 12, 16, 2

    k_nodes, k_edges, k_params = jax.random.split(key, 3)
    node_features = jax.random.normal(k_nodes, (N, num_features), jnp.float32)
    edge_features = jax.random.normal(k_edges, (E, edge_feat_dim), jnp.float32)

    # 2 graphs: nodes 0..5 in graph 0, nodes 6..11 in graph 1
    graph_index = jnp.array([0] * 6 + [1] * 6, dtype=jnp.int32)
    src = jnp.array([0, 1, 2, 3, 4, 5, 0, 2, 6, 7, 8, 9, 10, 11, 6, 8],
                    dtype=jnp.int32)
    dst = jnp.array([1, 2, 3, 4, 5, 0, 3, 5, 7, 8, 9, 10, 11, 6, 9, 11],
                    dtype=jnp.int32)
    edge_index = jnp.stack([src, dst])

    params = init_params(k_params, num_features, edge_feat_dim, D)

    # --- single graph-batch (module semantics) -------------------------------
    emb, feat_map = infograph_encoder_forward(
        params, node_features, edge_index, edge_features, graph_index, G)
    emb = jax.block_until_ready(emb)
    feat_map = jax.block_until_ready(feat_map)

    assert emb.shape == (G, 2 * D), emb.shape          # Set2Set output (G, 64)
    assert feat_map.shape == (N, D), feat_map.shape    # node feature map (N, 32)
    assert bool(jnp.all(jnp.isfinite(emb))) and bool(jnp.all(jnp.isfinite(feat_map)))

    # --- batched call (B=2 independent graph-batches -> parallel grid) -------
    B = 2
    emb_b, fmap_b = infograph_encoder_forward_batched(
        params,
        jnp.broadcast_to(node_features, (B, N, num_features)),
        jnp.broadcast_to(edge_index, (B, 2, E)),
        jnp.broadcast_to(edge_features, (B, E, edge_feat_dim)),
        jnp.broadcast_to(graph_index, (B, N)), G)
    emb_b = jax.block_until_ready(emb_b)
    fmap_b = jax.block_until_ready(fmap_b)

    assert emb_b.shape == (B, G, 2 * D) and fmap_b.shape == (B, N, D)
    # identical graph-batches must produce identical results on both grid steps
    assert bool(jnp.allclose(emb_b[0], emb_b[1], atol=1e-5))
    assert bool(jnp.allclose(emb_b[0], emb, atol=5e-2))
    assert bool(jnp.all(jnp.isfinite(emb_b))) and bool(jnp.all(jnp.isfinite(fmap_b)))

    print("KERNEL_OK")
</pallas_src>

<mosaic_0001>
module attributes {stable_mosaic.version = 11 : i64} {
  func.func @_infograph_kernel(%arg0: i32, %arg1: memref<1x16x16xbf16, #tpu.memory_space<vmem>>, %arg2: memref<1x16x8xbf16, #tpu.memory_space<vmem>>, %arg3: memref<1x16x16xbf16, #tpu.memory_space<vmem>>, %arg4: memref<1x16x16xbf16, #tpu.memory_space<vmem>>, %arg5: memref<1x8x16xbf16, #tpu.memory_space<vmem>>, %arg6: memref<16x32xbf16, #tpu.memory_space<vmem>>, %arg7: memref<1x32xf32, #tpu.memory_space<vmem>>, %arg8: memref<8x128xbf16, #tpu.memory_space<vmem>>, %arg9: memref<1x128xf32, #tpu.memory_space<vmem>>, %arg10: memref<128x1024xbf16, #tpu.memory_space<vmem>>, %arg11: memref<1x1024xf32, #tpu.memory_space<vmem>>, %arg12: memref<1x32xf32, #tpu.memory_space<vmem>>, %arg13: memref<32x128xbf16, #tpu.memory_space<vmem>>, %arg14: memref<1x128xf32, #tpu.memory_space<vmem>>, %arg15: memref<32x128xbf16, #tpu.memory_space<vmem>>, %arg16: memref<1x128xf32, #tpu.memory_space<vmem>>, %arg17: memref<96x128xbf16, #tpu.memory_space<vmem>>, %arg18: memref<1x128xf32, #tpu.memory_space<vmem>>, %arg19: memref<32x1024xbf16, #tpu.memory_space<vmem>>, %arg20: memref<1024x32xbf16, #tpu.memory_space<vmem>>, %arg21: memref<1x8x64xf32, #tpu.memory_space<vmem>>, %arg22: memref<1x16x32xf32, #tpu.memory_space<vmem>>) attributes {dimension_semantics = [#tpu.dimension_semantics<parallel>], iteration_bounds = array<i64: 1>, scalar_prefetch = 0 : i64, scratch_operands = 0 : i64, tpu.core_type = #tpu.core_type<tc>, window_params = [{transform_indices = @transform_0, window_bounds = array<i64: 1, 16, 16>}, {transform_indices = @transform_1, window_bounds = array<i64: 1, 16, 8>}, {transform_indices = @transform_2, window_bounds = array<i64: 1, 16, 16>}, {transform_indices = @transform_3, window_bounds = array<i64: 1, 16, 16>}, {transform_indices = @transform_4, window_bounds = array<i64: 1, 8, 16>}, {pipeline_mode = #tpu.pipeline_mode<synchronous>, transform_indices = @transform_5, window_bounds = array<i64: 16, 32>}, {pipeline_mode = #tpu.pipeline_mode<synchronous>, transform_indices = @transform_6, window_bounds = array<i64: 1, 32>}, {pipeline_mode = #tpu.pipeline_mode<synchronous>, transform_indices = @transform_7, window_bounds = array<i64: 8, 128>}, {pipeline_mode = #tpu.pipeline_mode<synchronous>, transform_indices = @transform_8, window_bounds = array<i64: 1, 128>}, {pipeline_mode = #tpu.pipeline_mode<synchronous>, transform_indices = @transform_9, window_bounds = array<i64: 128, 1024>}, {pipeline_mode = #tpu.pipeline_mode<synchronous>, transform_indices = @transform_10, window_bounds = array<i64: 1, 1024>}, {pipeline_mode = #tpu.pipeline_mode<synchronous>, transform_indices = @transform_11, window_bounds = array<i64: 1, 32>}, {pipeline_mode = #tpu.pipeline_mode<synchronous>, transform_indices = @transform_12, window_bounds = array<i64: 32, 128>}, {pipeline_mode = #tpu.pipeline_mode<synchronous>, transform_indices = @transform_13, window_bounds = array<i64: 1, 128>}, {pipeline_mode = #tpu.pipeline_mode<synchronous>, transform_indices = @transform_14, window_bounds = array<i64: 32, 128>}, {pipeline_mode = #tpu.pipeline_mode<synchronous>, transform_indices = @transform_15, window_bounds = array<i64: 1, 128>}, {pipeline_mode = #tpu.pipeline_mode<synchronous>, transform_indices = @transform_16, window_bounds = array<i64: 96, 128>}, {pipeline_mode = #tpu.pipeline_mode<synchronous>, transform_indices = @transform_17, window_bounds = array<i64: 1, 128>}, {pipeline_mode = #tpu.pipeline_mode<synchronous>, transform_indices = @transform_18, window_bounds = array<i64: 32, 1024>}, {pipeline_mode = #tpu.pipeline_mode<synchronous>, transform_indices = @transform_19, window_bounds = array<i64: 1024, 32>}, {transform_indices = @transform_20, window_bounds = array<i64: 1, 8, 64>}, {transform_indices = @transform_21, window_bounds = array<i64: 1, 16, 32>}]} {
    %c0 = arith.constant 0 : index
    %c0_0 = arith.constant 0 : index
    %c0_1 = arith.constant 0 : index
    %0 = vector.load %arg1[%c0, %c0_0, %c0_1] : memref<1x16x16xbf16, #tpu.memory_space<vmem>>, vector<1x16x16xbf16>
    %1 = vector.shape_cast %0 : vector<1x16x16xbf16> to vector<16x16xbf16>
    %c0_2 = arith.constant 0 : index
    %c0_3 = arith.constant 0 : index
    %2 = vector.load %arg6[%c0_2, %c0_3] : memref<16x32xbf16, #tpu.memory_space<vmem>>, vector<16x32xbf16>
    %cst = arith.constant dense<0.000000e+00> : vector<16x32xf32>
    %3 = tpu.matmul %1, %2, %cst {dimension_numbers = #tpu.dot_dimension_numbers<[1], [0], [0], [1], [0, 0, 1, 1], [], []>} : vector<16x16xbf16>, vector<16x32xbf16>, vector<16x32xf32> -> vector<16x32xf32>
    %c0_4 = arith.constant 0 : index
    %c0_5 = arith.constant 0 : index
    %4 = vector.load %arg7[%c0_4, %c0_5] : memref<1x32xf32, #tpu.memory_space<vmem>>, vector<1x32xf32>
    %5 = vector.broadcast %4 : vector<1x32xf32> to vector<16x32xf32>
    %6 = arith.addf %3, %5 : vector<16x32xf32>
    %cst_6 = arith.constant 0.000000e+00 : f32
    %7 = vector.broadcast %cst_6 : f32 to vector<16x32xf32>
    %8 = arith.maximumf %6, %7 : vector<16x32xf32>
    %c0_7 = arith.constant 0 : index
    %c0_8 = arith.constant 0 : index
    %c0_9 = arith.constant 0 : index
    %9 = vector.load %arg2[%c0_7, %c0_8, %c0_9] : memref<1x16x8xbf16, #tpu.memory_space<vmem>>, vector<1x16x8xbf16>
    %10 = vector.shape_cast %9 : vector<1x16x8xbf16> to vector<16x8xbf16>
    %c0_10 = arith.constant 0 : index
    %c0_11 = arith.constant 0 : index
    %11 = vector.load %arg8[%c0_10, %c0_11] : memref<8x128xbf16, #tpu.memory_space<vmem>>, vector<8x128xbf16>
    %cst_12 = arith.constant dense<0.000000e+00> : vector<16x128xf32>
    %12 = tpu.matmul %10, %11, %cst_12 {dimension_numbers = #tpu.dot_dimension_numbers<[1], [0], [0], [1], [0, 0, 1, 1], [], []>} : vector<16x8xbf16>, vector<8x128xbf16>, vector<16x128xf32> -> vector<16x128xf32>
    %c0_13 = arith.constant 0 : index
    %c0_14 = arith.constant 0 : index
    %13 = vector.load %arg9[%c0_13, %c0_14] : memref<1x128xf32, #tpu.memory_space<vmem>>, vector<1x128xf32>
    %14 = vector.broadcast %13 : vector<1x128xf32> to vector<16x128xf32>
    %15 = arith.addf %12, %14 : vector<16x128xf32>
    %cst_15 = arith.constant 0.000000e+00 : f32
    %16 = vector.broadcast %cst_15 : f32 to vector<16x128xf32>
    %17 = arith.maximumf %15, %16 : vector<16x128xf32>
    %18 = arith.truncf %17 : vector<16x128xf32> to vector<16x128xbf16>
    %c0_16 = arith.constant 0 : index
    %c0_17 = arith.constant 0 : index
    %19 = vector.load %arg10[%c0_16, %c0_17] : memref<128x1024xbf16, #tpu.memory_space<vmem>>, vector<128x1024xbf16>
    %cst_18 = arith.constant dense<0.000000e+00> : vector<16x1024xf32>
    %20 = tpu.matmul %18, %19, %cst_18 {dimension_numbers = #tpu.dot_dimension_numbers<[1], [0], [0], [1], [0, 0, 1, 1], [], []>} : vector<16x128xbf16>, vector<128x1024xbf16>, vector<16x1024xf32> -> vector<16x1024xf32>
    %c0_19 = arith.constant 0 : index
    %c0_20 = arith.constant 0 : index
    %21 = vector.load %arg11[%c0_19, %c0_20] : memref<1x1024xf32, #tpu.memory_space<vmem>>, vector<1x1024xf32>
    %22 = vector.broadcast %21 : vector<1x1024xf32> to vector<16x1024xf32>
    %23 = arith.addf %20, %22 : vector<16x1024xf32>
    %24 = arith.truncf %23 : vector<16x1024xf32> to vector<16x1024xbf16>
    %c0_21 = arith.constant 0 : index
    %c0_22 = arith.constant 0 : index
    %c0_23 = arith.constant 0 : index
    %25 = vector.load %arg3[%c0_21, %c0_22, %c0_23] : memref<1x16x16xbf16, #tpu.memory_space<vmem>>, vector<1x16x16xbf16>
    %26 = vector.shape_cast %25 : vector<1x16x16xbf16> to vector<16x16xbf16>
    %c0_24 = arith.constant 0 : index
    %c0_25 = arith.constant 0 : index
    %c0_26 = arith.constant 0 : index
    %27 = vector.load %arg4[%c0_24, %c0_25, %c0_26] : memref<1x16x16xbf16, #tpu.memory_space<vmem>>, vector<1x16x16xbf16>
    %28 = vector.shape_cast %27 : vector<1x16x16xbf16> to vector<16x16xbf16>
    %c0_27 = arith.constant 0 : index
    %c0_28 = arith.constant 0 : index
    %29 = vector.load %arg19[%c0_27, %c0_28] : memref<32x1024xbf16, #tpu.memory_space<vmem>>, vector<32x1024xbf16>
    %c0_29 = arith.constant 0 : index
    %c0_30 = arith.constant 0 : index
    %30 = vector.load %arg20[%c0_29, %c0_30] : memref<1024x32xbf16, #tpu.memory_space<vmem>>, vector<1024x32xbf16>
    %c0_31 = arith.constant 0 : index
    %c0_32 = arith.constant 0 : index
    %31 = vector.load %arg13[%c0_31, %c0_32] : memref<32x128xbf16, #tpu.memory_space<vmem>>, vector<32x128xbf16>
    %c0_33 = arith.constant 0 : index
    %c0_34 = arith.constant 0 : index
    %32 = vector.load %arg15[%c0_33, %c0_34] : memref<32x128xbf16, #tpu.memory_space<vmem>>, vector<32x128xbf16>
    %c0_35 = arith.constant 0 : index
    %c0_36 = arith.constant 0 : index
    %33 = vector.load %arg12[%c0_35, %c0_36] : memref<1x32xf32, #tpu.memory_space<vmem>>, vector<1x32xf32>
    %34 = vector.shape_cast %33 : vector<1x32xf32> to vector<1x32xf32>
    %35 = vector.broadcast %34 : vector<1x32xf32> to vector<16x32xf32>
    %c0_37 = arith.constant 0 : index
    %c0_38 = arith.constant 0 : index
    %36 = vector.load %arg14[%c0_37, %c0_38] : memref<1x128xf32, #tpu.memory_space<vmem>>, vector<1x128xf32>
    %37 = vector.shape_cast %36 : vector<1x128xf32> to vector<1x128xf32>
    %38 = vector.broadcast %37 : vector<1x128xf32> to vector<16x128xf32>
    %c0_39 = arith.constant 0 : index
    %c0_40 = arith.constant 0 : index
    %39 = vector.load %arg16[%c0_39, %c0_40] : memref<1x128xf32, #tpu.memory_space<vmem>>, vector<1x128xf32>
    %40 = vector.shape_cast %39 : vector<1x128xf32> to vector<1x128xf32>
    %41 = vector.broadcast %40 : vector<1x128xf32> to vector<16x128xf32>
    %42 = arith.truncf %8 : vector<16x32xf32> to vector<16x32xbf16>
    %cst_41 = arith.constant dense<0.000000e+00> : vector<16x32xf32>
    %43 = tpu.matmul %26, %42, %cst_41 {dimension_numbers = #tpu.dot_dimension_numbers<[1], [0], [0], [1], [0, 0, 1, 1], [], []>} : vector<16x16xbf16>, vector<16x32xbf16>, vector<16x32xf32> -> vector<16x32xf32>
    %44 = arith.truncf %43 : vector<16x32xf32> to vector<16x32xbf16>
    %cst_42 = arith.constant dense<0.000000e+00> : vector<16x1024xf32>
    %45 = tpu.matmul %44, %29, %cst_42 {dimension_numbers = #tpu.dot_dimension_numbers<[1], [0], [0], [1], [0, 0, 1, 1], [], []>} : vector<16x32xbf16>, vector<32x1024xbf16>, vector<16x1024xf32> -> vector<16x1024xf32>
    %46 = arith.extf %24 : vector<16x1024xbf16> to vector<16x1024xf32>
    %47 = arith.mulf %45, %46 : vector<16x1024xf32>
    %48 = arith.truncf %47 : vector<16x1024xf32> to vector<16x1024xbf16>
    %cst_43 = arith.constant dense<0.000000e+00> : vector<16x32xf32>
    %49 = tpu.matmul %48, %30, %cst_43 {dimension_numbers = #tpu.dot_dimension_numbers<[1], [0], [0], [1], [0, 0, 1, 1], [], []>} : vector<16x1024xbf16>, vector<1024x32xbf16>, vector<16x32xf32> -> vector<16x32xf32>
    %50 = arith.truncf %49 : vector<16x32xf32> to vector<16x32xbf16>
    %cst_44 = arith.constant dense<0.000000e+00> : vector<16x32xf32>
    %51 = tpu.matmul %28, %50, %cst_44 {dimension_numbers = #tpu.dot_dimension_numbers<[1], [0], [0], [1], [0, 0, 1, 1], [], []>} : vector<16x16xbf16>, vector<16x32xbf16>, vector<16x32xf32> -> vector<16x32xf32>
    %52 = arith.addf %51, %35 : vector<16x32xf32>
    %cst_45 = arith.constant 0.000000e+00 : f32
    %53 = vector.broadcast %cst_45 : f32 to vector<16x32xf32>
    %54 = arith.maximumf %52, %53 : vector<16x32xf32>
    %55 = arith.truncf %54 : vector<16x32xf32> to vector<16x32xbf16>
    %cst_46 = arith.constant dense<0.000000e+00> : vector<16x128xf32>
    %56 = tpu.matmul %55, %31, %cst_46 {dimension_numbers = #tpu.dot_dimension_numbers<[1], [0], [0], [1], [0, 0, 1, 1], [], []>} : vector<16x32xbf16>, vector<32x128xbf16>, vector<16x128xf32> -> vector<16x128xf32>
    %57 = arith.addf %56, %38 : vector<16x128xf32>
    %58 = arith.truncf %8 : vector<16x32xf32> to vector<16x32xbf16>
    %cst_47 = arith.constant dense<0.000000e+00> : vector<16x128xf32>
    %59 = tpu.matmul %58, %32, %cst_47 {dimension_numbers = #tpu.dot_dimension_numbers<[1], [0], [0], [1], [0, 0, 1, 1], [], []>} : vector<16x32xbf16>, vector<32x128xbf16>, vector<16x128xf32> -> vector<16x128xf32>
    %60 = arith.addf %59, %41 : vector<16x128xf32>
    %61 = arith.addf %57, %60 : vector<16x128xf32>
    %62 = arith.negf %61 : vector<16x128xf32>
    %63 = math.exp %62 : vector<16x128xf32>
    %cst_48 = arith.constant 1.000000e+00 : f32
    %64 = vector.broadcast %cst_48 : f32 to vector<16x128xf32>
    %65 = arith.addf %64, %63 : vector<16x128xf32>
    %66 = arith.divf %64, %65 : vector<16x128xf32>
    %67 = vector.extract_strided_slice %66 {offsets = [0, 0], sizes = [16, 32], strides = [1, 1]} : vector<16x128xf32> to vector<16x32xf32>
    %68 = vector.extract_strided_slice %66 {offsets = [0, 32], sizes = [16, 32], strides = [1, 1]} : vector<16x128xf32> to vector<16x32xf32>
    %69 = vector.extract_strided_slice %57 {offsets = [0, 64], sizes = [16, 32], strides = [1, 1]} : vector<16x128xf32> to vector<16x32xf32>
    %70 = vector.extract_strided_slice %60 {offsets = [0, 64], sizes = [16, 32], strides = [1, 1]} : vector<16x128xf32> to vector<16x32xf32>
    %71 = arith.mulf %67, %70 : vector<16x32xf32>
    %72 = arith.addf %69, %71 : vector<16x32xf32>
    %73 = math.tanh %72 : vector<16x32xf32>
    %cst_49 = arith.constant 1.000000e+00 : f32
    %74 = vector.broadcast %cst_49 : f32 to vector<16x32xf32>
    %75 = arith.subf %74, %68 : vector<16x32xf32>
    %76 = arith.mulf %75, %73 : vector<16x32xf32>
    %77 = arith.mulf %68, %8 : vector<16x32xf32>
    %78 = arith.addf %76, %77 : vector<16x32xf32>
    %79 = arith.truncf %78 : vector<16x32xf32> to vector<16x32xbf16>
    %cst_50 = arith.constant dense<0.000000e+00> : vector<16x32xf32>
    %80 = tpu.matmul %26, %79, %cst_50 {dimension_numbers = #tpu.dot_dimension_numbers<[1], [0], [0], [1], [0, 0, 1, 1], [], []>} : vector<16x16xbf16>, vector<16x32xbf16>, vector<16x32xf32> -> vector<16x32xf32>
    %81 = arith.truncf %80 : vector<16x32xf32> to vector<16x32xbf16>
    %cst_51 = arith.constant dense<0.000000e+00> : vector<16x1024xf32>
    %82 = tpu.matmul %81, %29, %cst_51 {dimension_numbers = #tpu.dot_dimension_numbers<[1], [0], [0], [1], [0, 0, 1, 1], [], []>} : vector<16x32xbf16>, vector<32x1024xbf16>, vector<16x1024xf32> -> vector<16x1024xf32>
    %83 = arith.extf %24 : vector<16x1024xbf16> to vector<16x1024xf32>
    %84 = arith.mulf %82, %83 : vector<16x1024xf32>
    %85 = arith.truncf %84 : vector<16x1024xf32> to vector<16x1024xbf16>
    %cst_52 = arith.constant dense<0.000000e+00> : vector<16x32xf32>
    %86 = tpu.matmul %85, %30, %cst_52 {dimension_numbers = #tpu.dot_dimension_numbers<[1], [0], [0], [1], [0, 0, 1, 1], [], []>} : vector<16x1024xbf16>, vector<1024x32xbf16>, vector<16x32xf32> -> vector<16x32xf32>
    %87 = arith.truncf %86 : vector<16x32xf32> to vector<16x32xbf16>
    %cst_53 = arith.constant dense<0.000000e+00> : vector<16x32xf32>
    %88 = tpu.matmul %28, %87, %cst_53 {dimension_numbers = #tpu.dot_dimension_numbers<[1], [0], [0], [1], [0, 0, 1, 1], [], []>} : vector<16x16xbf16>, vector<16x32xbf16>, vector<16x32xf32> -> vector<16x32xf32>
    %89 = arith.addf %88, %35 : vector<16x32xf32>
    %cst_54 = arith.constant 0.000000e+00 : f32
    %90 = vector.broadcast %cst_54 : f32 to vector<16x32xf32>
    %91 = arith.maximumf %89, %90 : vector<16x32xf32>
    %92 = arith.truncf %91 : vector<16x32xf32> to vector<16x32xbf16>
    %cst_55 = arith.constant dense<0.000000e+00> : vector<16x128xf32>
    %93 = tpu.matmul %92, %31, %cst_55 {dimension_numbers = #tpu.dot_dimension_numbers<[1], [0], [0], [1], [0, 0, 1, 1], [], []>} : vector<16x32xbf16>, vector<32x128xbf16>, vector<16x128xf32> -> vector<16x128xf32>
    %94 = arith.addf %93, %38 : vector<16x128xf32>
    %95 = arith.truncf %78 : vector<16x32xf32> to vector<16x32xbf16>
    %cst_56 = arith.constant dense<0.000000e+00> : vector<16x128xf32>
    %96 = tpu.matmul %95, %32, %cst_56 {dimension_numbers = #tpu.dot_dimension_numbers<[1], [0], [0], [1], [0, 0, 1, 1], [], []>} : vector<16x32xbf16>, vector<32x128xbf16>, vector<16x128xf32> -> vector<16x128xf32>
    %97 = arith.addf %96, %41 : vector<16x128xf32>
    %98 = arith.addf %94, %97 : vector<16x128xf32>
    %99 = arith.negf %98 : vector<16x128xf32>
    %100 = math.exp %99 : vector<16x128xf32>
    %cst_57 = arith.constant 1.000000e+00 : f32
    %101 = vector.broadcast %cst_57 : f32 to vector<16x128xf32>
    %102 = arith.addf %101, %100 : vector<16x128xf32>
    %103 = arith.divf %101, %102 : vector<16x128xf32>
    %104 = vector.extract_strided_slice %103 {offsets = [0, 0], sizes = [16, 32], strides = [1, 1]} : vector<16x128xf32> to vector<16x32xf32>
    %105 = vector.extract_strided_slice %103 {offsets = [0, 32], sizes = [16, 32], strides = [1, 1]} : vector<16x128xf32> to vector<16x32xf32>
    %106 = vector.extract_strided_slice %94 {offsets = [0, 64], sizes = [16, 32], strides = [1, 1]} : vector<16x128xf32> to vector<16x32xf32>
    %107 = vector.extract_strided_slice %97 {offsets = [0, 64], sizes = [16, 32], strides = [1, 1]} : vector<16x128xf32> to vector<16x32xf32>
    %108 = arith.mulf %104, %107 : vector<16x32xf32>
    %109 = arith.addf %106, %108 : vector<16x32xf32>
    %110 = math.tanh %109 : vector<16x32xf32>
    %cst_58 = arith.constant 1.000000e+00 : f32
    %111 = vector.broadcast %cst_58 : f32 to vector<16x32xf32>
    %112 = arith.subf %111, %105 : vector<16x32xf32>
    %113 = arith.mulf %112, %110 : vector<16x32xf32>
    %114 = arith.mulf %105, %78 : vector<16x32xf32>
    %115 = arith.addf %113, %114 : vector<16x32xf32>
    %116 = arith.truncf %115 : vector<16x32xf32> to vector<16x32xbf16>
    %cst_59 = arith.constant dense<0.000000e+00> : vector<16x32xf32>
    %117 = tpu.matmul %26, %116, %cst_59 {dimension_numbers = #tpu.dot_dimension_numbers<[1], [0], [0], [1], [0, 0, 1, 1], [], []>} : vector<16x16xbf16>, vector<16x32xbf16>, vector<16x32xf32> -> vector<16x32xf32>
    %118 = arith.truncf %117 : vector<16x32xf32> to vector<16x32xbf16>
    %cst_60 = arith.constant dense<0.000000e+00> : vector<16x1024xf32>
    %119 = tpu.matmul %118, %29, %cst_60 {dimension_numbers = #tpu.dot_dimension_numbers<[1], [0], [0], [1], [0, 0, 1, 1], [], []>} : vector<16x32xbf16>, vector<32x1024xbf16>, vector<16x1024xf32> -> vector<16x1024xf32>
    %120 = arith.extf %24 : vector<16x1024xbf16> to vector<16x1024xf32>
    %121 = arith.mulf %119, %120 : vector<16x1024xf32>
    %122 = arith.truncf %121 : vector<16x1024xf32> to vector<16x1024xbf16>
    %cst_61 = arith.constant dense<0.000000e+00> : vector<16x32xf32>
    %123 = tpu.matmul %122, %30, %cst_61 {dimension_numbers = #tpu.dot_dimension_numbers<[1], [0], [0], [1], [0, 0, 1, 1], [], []>} : vector<16x1024xbf16>, vector<1024x32xbf16>, vector<16x32xf32> -> vector<16x32xf32>
    %124 = arith.truncf %123 : vector<16x32xf32> to vector<16x32xbf16>
    %cst_62 = arith.constant dense<0.000000e+00> : vector<16x32xf32>
    %125 = tpu.matmul %28, %124, %cst_62 {dimension_numbers = #tpu.dot_dimension_numbers<[1], [0], [0], [1], [0, 0, 1, 1], [], []>} : vector<16x16xbf16>, vector<16x32xbf16>, vector<16x32xf32> -> vector<16x32xf32>
    %126 = arith.addf %125, %35 : vector<16x32xf32>
    %cst_63 = arith.constant 0.000000e+00 : f32
    %127 = vector.broadcast %cst_63 : f32 to vector<16x32xf32>
    %128 = arith.maximumf %126, %127 : vector<16x32xf32>
    %129 = arith.truncf %128 : vector<16x32xf32> to vector<16x32xbf16>
    %cst_64 = arith.constant dense<0.000000e+00> : vector<16x128xf32>
    %130 = tpu.matmul %129, %31, %cst_64 {dimension_numbers = #tpu.dot_dimension_numbers<[1], [0], [0], [1], [0, 0, 1, 1], [], []>} : vector<16x32xbf16>, vector<32x128xbf16>, vector<16x128xf32> -> vector<16x128xf32>
    %131 = arith.addf %130, %38 : vector<16x128xf32>
    %132 = arith.truncf %115 : vector<16x32xf32> to vector<16x32xbf16>
    %cst_65 = arith.constant dense<0.000000e+00> : vector<16x128xf32>
    %133 = tpu.matmul %132, %32, %cst_65 {dimension_numbers = #tpu.dot_dimension_numbers<[1], [0], [0], [1], [0, 0, 1, 1], [], []>} : vector<16x32xbf16>, vector<32x128xbf16>, vector<16x128xf32> -> vector<16x128xf32>
    %134 = arith.addf %133, %41 : vector<16x128xf32>
    %135 = arith.addf %131, %134 : vector<16x128xf32>
    %136 = arith.negf %135 : vector<16x128xf32>
    %137 = math.exp %136 : vector<16x128xf32>
    %cst_66 = arith.constant 1.000000e+00 : f32
    %138 = vector.broadcast %cst_66 : f32 to vector<16x128xf32>
    %139 = arith.addf %138, %137 : vector<16x128xf32>
    %140 = arith.divf %138, %139 : vector<16x128xf32>
    %141 = vector.extract_strided_slice %140 {offsets = [0, 0], sizes = [16, 32], strides = [1, 1]} : vector<16x128xf32> to vector<16x32xf32>
    %142 = vector.extract_strided_slice %140 {offsets = [0, 32], sizes = [16, 32], strides = [1, 1]} : vector<16x128xf32> to vector<16x32xf32>
    %143 = vector.extract_strided_slice %131 {offsets = [0, 64], sizes = [16, 32], strides = [1, 1]} : vector<16x128xf32> to vector<16x32xf32>
    %144 = vector.extract_strided_slice %134 {offsets = [0, 64], sizes = [16, 32], strides = [1, 1]} : vector<16x128xf32> to vector<16x32xf32>
    %145 = arith.mulf %141, %144 : vector<16x32xf32>
    %146 = arith.addf %143, %145 : vector<16x32xf32>
    %147 = math.tanh %146 : vector<16x32xf32>
    %cst_67 = arith.constant 1.000000e+00 : f32
    %148 = vector.broadcast %cst_67 : f32 to vector<16x32xf32>
    %149 = arith.subf %148, %142 : vector<16x32xf32>
    %150 = arith.mulf %149, %147 : vector<16x32xf32>
    %151 = arith.mulf %142, %115 : vector<16x32xf32>
    %152 = arith.addf %150, %151 : vector<16x32xf32>
    %c0_68 = arith.constant 0 : index
    %c0_69 = arith.constant 0 : index
    %c0_70 = arith.constant 0 : index
    %153 = vector.load %arg22[%c0_68, %c0_69, %c0_70] : memref<1x16x32xf32, #tpu.memory_space<vmem>>, vector<1x16x32xf32>
    %154 = vector.shape_cast %153 : vector<1x16x32xf32> to vector<16x32xf32>
    %155 = vector.shape_cast %152 : vector<16x32xf32> to vector<1x16x32xf32>
    tpu.vector_store %arg22[%c0_68, %c0_69, %c0_70], %155 {strides = array<i32>} : memref<1x16x32xf32, #tpu.memory_space<vmem>>, vector<1x16x32xf32>,
    %c0_71 = arith.constant 0 : index
    %c0_72 = arith.constant 0 : index
    %c0_73 = arith.constant 0 : index
    %156 = vector.load %arg5[%c0_71, %c0_72, %c0_73] : memref<1x8x16xbf16, #tpu.memory_space<vmem>>, vector<1x8x16xbf16>
    %157 = vector.shape_cast %156 : vector<1x8x16xbf16> to vector<8x16xbf16>
    %cst_74 = arith.constant 0.000000e+00 : bf16
    %158 = vector.broadcast %cst_74 : bf16 to vector<8x16xbf16>
    %159 = arith.cmpf ogt, %157, %158 : vector<8x16xbf16>
    %160 = arith.truncf %152 : vector<16x32xf32> to vector<16x32xbf16>
    %c0_75 = arith.constant 0 : index
    %c0_76 = arith.constant 0 : index
    %161 = vector.load %arg17[%c0_75, %c0_76] : memref<96x128xbf16, #tpu.memory_space<vmem>>, vector<96x128xbf16>
    %c0_77 = arith.constant 0 : index
    %c0_78 = arith.constant 0 : index
    %162 = vector.load %arg18[%c0_77, %c0_78] : memref<1x128xf32, #tpu.memory_space<vmem>>, vector<1x128xf32>
    %163 = vector.shape_cast %162 : vector<1x128xf32> to vector<1x128xf32>
    %164 = vector.broadcast %163 : vector<1x128xf32> to vector<8x128xf32>
    %cst_79 = arith.constant 0.000000e+00 : f32
    %165 = vector.broadcast %cst_79 : f32 to vector<8x32xf32>
    %cst_80 = arith.constant 0.000000e+00 : f32
    %166 = vector.broadcast %cst_80 : f32 to vector<8x32xf32>
    %cst_81 = arith.constant 0.000000e+00 : f32
    %167 = vector.broadcast %cst_81 : f32 to vector<8x32xf32>
    %cst_82 = arith.constant 0.000000e+00 : f32
    %168 = vector.broadcast %cst_82 : f32 to vector<8x32xf32>
    %169 = tpu.concatenate %167, %168, %165 in 1 : vector<8x32xf32>, vector<8x32xf32>, vector<8x32xf32> -> vector<8x96xf32>
    %170 = arith.truncf %169 : vector<8x96xf32> to vector<8x96xbf16>
    %cst_83 = arith.constant dense<0.000000e+00> : vector<8x128xf32>
    %171 = tpu.matmul %170, %161, %cst_83 {dimension_numbers = #tpu.dot_dimension_numbers<[1], [0], [0], [1], [0, 0, 1, 1], [], []>} : vector<8x96xbf16>, vector<96x128xbf16>, vector<8x128xf32> -> vector<8x128xf32>
    %172 = arith.addf %171, %164 : vector<8x128xf32>
    %173 = arith.negf %172 : vector<8x128xf32>
    %174 = math.exp %173 : vector<8x128xf32>
    %cst_84 = arith.constant 1.000000e+00 : f32
    %175 = vector.broadcast %cst_84 : f32 to vector<8x128xf32>
    %176 = arith.addf %175, %174 : vector<8x128xf32>
    %177 = arith.divf %175, %176 : vector<8x128xf32>
    %178 = vector.extract_strided_slice %177 {offsets = [0, 0], sizes = [8, 32], strides = [1, 1]} : vector<8x128xf32> to vector<8x32xf32>
    %179 = vector.extract_strided_slice %177 {offsets = [0, 32], sizes = [8, 32], strides = [1, 1]} : vector<8x128xf32> to vector<8x32xf32>
    %180 = vector.extract_strided_slice %177 {offsets = [0, 96], sizes = [8, 32], strides = [1, 1]} : vector<8x128xf32> to vector<8x32xf32>
    %181 = vector.extract_strided_slice %172 {offsets = [0, 64], sizes = [8, 32], strides = [1, 1]} : vector<8x128xf32> to vector<8x32xf32>
    %182 = math.tanh %181 : vector<8x32xf32>
    %183 = arith.mulf %179, %166 : vector<8x32xf32>
    %184 = arith.mulf %178, %182 : vector<8x32xf32>
    %185 = arith.addf %183, %184 : vector<8x32xf32>
    %186 = math.tanh %185 : vector<8x32xf32>
    %187 = arith.mulf %180, %186 : vector<8x32xf32>
    %188 = arith.truncf %187 : vector<8x32xf32> to vector<8x32xbf16>
    %cst_85 = arith.constant dense<0.000000e+00> : vector<8x16xf32>
    %189 = tpu.matmul %188, %160, %cst_85 {dimension_numbers = #tpu.dot_dimension_numbers<[1], [1], [0], [0], [0, 0, 1, 0], [], []>} : vector<8x32xbf16>, vector<16x32xbf16>, vector<8x16xf32> -> vector<8x16xf32>
    %cst_86 = arith.constant -1.000000e+30 : f32
    %190 = vector.broadcast %cst_86 : f32 to vector<8x16xf32>
    %191 = arith.select %159, %189, %190 : vector<8x16xi1>, vector<8x16xf32>
    %cst_87 = arith.constant dense<0xFF800000> : vector<8xf32>
    %192 = vector.multi_reduction <maximumf>, %191, %cst_87 [1] : vector<8x16xf32> to vector<8xf32>
    %193 = vector.shape_cast %192 : vector<8xf32> to vector<8x1xf32>
    %194 = vector.broadcast %193 : vector<8x1xf32> to vector<8x16xf32>
    %195 = arith.subf %191, %194 : vector<8x16xf32>
    %196 = math.exp %195 : vector<8x16xf32>
    %cst_88 = arith.constant dense<0.000000e+00> : vector<8xf32>
    %197 = vector.multi_reduction <add>, %196, %cst_88 [1] : vector<8x16xf32> to vector<8xf32>
    %198 = vector.shape_cast %197 : vector<8xf32> to vector<8x1xf32>
    %199 = tpu.reciprocal %198 {approx = true} : vector<8x1xf32> -> vector<8x1xf32>
    %200 = vector.broadcast %199 : vector<8x1xf32> to vector<8x16xf32>
    %201 = arith.mulf %196, %200 : vector<8x16xf32>
    %202 = arith.truncf %201 : vector<8x16xf32> to vector<8x16xbf16>
    %cst_89 = arith.constant dense<0.000000e+00> : vector<8x32xf32>
    %203 = tpu.matmul %202, %160, %cst_89 {dimension_numbers = #tpu.dot_dimension_numbers<[1], [0], [0], [1], [0, 0, 1, 1], [], []>} : vector<8x16xbf16>, vector<16x32xbf16>, vector<8x32xf32> -> vector<8x32xf32>
    %204 = tpu.concatenate %187, %203, %187 in 1 : vector<8x32xf32>, vector<8x32xf32>, vector<8x32xf32> -> vector<8x96xf32>
    %205 = arith.truncf %204 : vector<8x96xf32> to vector<8x96xbf16>
    %cst_90 = arith.constant dense<0.000000e+00> : vector<8x128xf32>
    %206 = tpu.matmul %205, %161, %cst_90 {dimension_numbers = #tpu.dot_dimension_numbers<[1], [0], [0], [1], [0, 0, 1, 1], [], []>} : vector<8x96xbf16>, vector<96x128xbf16>, vector<8x128xf32> -> vector<8x128xf32>
    %207 = arith.addf %206, %164 : vector<8x128xf32>
    %208 = arith.negf %207 : vector<8x128xf32>
    %209 = math.exp %208 : vector<8x128xf32>
    %cst_91 = arith.constant 1.000000e+00 : f32
    %210 = vector.broadcast %cst_91 : f32 to vector<8x128xf32>
    %211 = arith.addf %210, %209 : vector<8x128xf32>
    %212 = arith.divf %210, %211 : vector<8x128xf32>
    %213 = vector.extract_strided_slice %212 {offsets = [0, 0], sizes = [8, 32], strides = [1, 1]} : vector<8x128xf32> to vector<8x32xf32>
    %214 = vector.extract_strided_slice %212 {offsets = [0, 32], sizes = [8, 32], strides = [1, 1]} : vector<8x128xf32> to vector<8x32xf32>
    %215 = vector.extract_strided_slice %212 {offsets = [0, 96], sizes = [8, 32], strides = [1, 1]} : vector<8x128xf32> to vector<8x32xf32>
    %216 = vector.extract_strided_slice %207 {offsets = [0, 64], sizes = [8, 32], strides = [1, 1]} : vector<8x128xf32> to vector<8x32xf32>
    %217 = math.tanh %216 : vector<8x32xf32>
    %218 = arith.mulf %214, %185 : vector<8x32xf32>
    %219 = arith.mulf %213, %217 : vector<8x32xf32>
    %220 = arith.addf %218, %219 : vector<8x32xf32>
    %221 = math.tanh %220 : vector<8x32xf32>
    %222 = arith.mulf %215, %221 : vector<8x32xf32>
    %223 = arith.truncf %222 : vector<8x32xf32> to vector<8x32xbf16>
    %cst_92 = arith.constant dense<0.000000e+00> : vector<8x16xf32>
    %224 = tpu.matmul %223, %160, %cst_92 {dimension_numbers = #tpu.dot_dimension_numbers<[1], [1], [0], [0], [0, 0, 1, 0], [], []>} : vector<8x32xbf16>, vector<16x32xbf16>, vector<8x16xf32> -> vector<8x16xf32>
    %cst_93 = arith.constant -1.000000e+30 : f32
    %225 = vector.broadcast %cst_93 : f32 to vector<8x16xf32>
    %226 = arith.select %159, %224, %225 : vector<8x16xi1>, vector<8x16xf32>
    %cst_94 = arith.constant dense<0xFF800000> : vector<8xf32>
    %227 = vector.multi_reduction <maximumf>, %226, %cst_94 [1] : vector<8x16xf32> to vector<8xf32>
    %228 = vector.shape_cast %227 : vector<8xf32> to vector<8x1xf32>
    %229 = vector.broadcast %228 : vector<8x1xf32> to vector<8x16xf32>
    %230 = arith.subf %226, %229 : vector<8x16xf32>
    %231 = math.exp %230 : vector<8x16xf32>
    %cst_95 = arith.constant dense<0.000000e+00> : vector<8xf32>
    %232 = vector.multi_reduction <add>, %231, %cst_95 [1] : vector<8x16xf32> to vector<8xf32>
    %233 = vector.shape_cast %232 : vector<8xf32> to vector<8x1xf32>
    %234 = tpu.reciprocal %233 {approx = true} : vector<8x1xf32> -> vector<8x1xf32>
    %235 = vector.broadcast %234 : vector<8x1xf32> to vector<8x16xf32>
    %236 = arith.mulf %231, %235 : vector<8x16xf32>
    %237 = arith.truncf %236 : vector<8x16xf32> to vector<8x16xbf16>
    %cst_96 = arith.constant dense<0.000000e+00> : vector<8x32xf32>
    %238 = tpu.matmul %237, %160, %cst_96 {dimension_numbers = #tpu.dot_dimension_numbers<[1], [0], [0], [1], [0, 0, 1, 1], [], []>} : vector<8x16xbf16>, vector<16x32xbf16>, vector<8x32xf32> -> vector<8x32xf32>
    %239 = tpu.concatenate %222, %238, %222 in 1 : vector<8x32xf32>, vector<8x32xf32>, vector<8x32xf32> -> vector<8x96xf32>
    %240 = arith.truncf %239 : vector<8x96xf32> to vector<8x96xbf16>
    %cst_97 = arith.constant dense<0.000000e+00> : vector<8x128xf32>
    %241 = tpu.matmul %240, %161, %cst_97 {dimension_numbers = #tpu.dot_dimension_numbers<[1], [0], [0], [1], [0, 0, 1, 1], [], []>} : vector<8x96xbf16>, vector<96x128xbf16>, vector<8x128xf32> -> vector<8x128xf32>
    %242 = arith.addf %241, %164 : vector<8x128xf32>
    %243 = arith.negf %242 : vector<8x128xf32>
    %244 = math.exp %243 : vector<8x128xf32>
    %cst_98 = arith.constant 1.000000e+00 : f32
    %245 = vector.broadcast %cst_98 : f32 to vector<8x128xf32>
    %246 = arith.addf %245, %244 : vector<8x128xf32>
    %247 = arith.divf %245, %246 : vector<8x128xf32>
    %248 = vector.extract_strided_slice %247 {offsets = [0, 0], sizes = [8, 32], strides = [1, 1]} : vector<8x128xf32> to vector<8x32xf32>
    %249 = vector.extract_strided_slice %247 {offsets = [0, 32], sizes = [8, 32], strides = [1, 1]} : vector<8x128xf32> to vector<8x32xf32>
    %250 = vector.extract_strided_slice %247 {offsets = [0, 96], sizes = [8, 32], strides = [1, 1]} : vector<8x128xf32> to vector<8x32xf32>
    %251 = vector.extract_strided_slice %242 {offsets = [0, 64], sizes = [8, 32], strides = [1, 1]} : vector<8x128xf32> to vector<8x32xf32>
    %252 = math.tanh %251 : vector<8x32xf32>
    %253 = arith.mulf %249, %220 : vector<8x32xf32>
    %254 = arith.mulf %248, %252 : vector<8x32xf32>
    %255 = arith.addf %253, %254 : vector<8x32xf32>
    %256 = math.tanh %255 : vector<8x32xf32>
    %257 = arith.mulf %250, %256 : vector<8x32xf32>
    %258 = arith.truncf %257 : vector<8x32xf32> to vector<8x32xbf16>
    %cst_99 = arith.constant dense<0.000000e+00> : vector<8x16xf32>
    %259 = tpu.matmul %258, %160, %cst_99 {dimension_numbers = #tpu.dot_dimension_numbers<[1], [1], [0], [0], [0, 0, 1, 0], [], []>} : vector<8x32xbf16>, vector<16x32xbf16>, vector<8x16xf32> -> vector<8x16xf32>
    %cst_100 = arith.constant -1.000000e+30 : f32
    %260 = vector.broadcast %cst_100 : f32 to vector<8x16xf32>
    %261 = arith.select %159, %259, %260 : vector<8x16xi1>, vector<8x16xf32>
    %cst_101 = arith.constant dense<0xFF800000> : vector<8xf32>
    %262 = vector.multi_reduction <maximumf>, %261, %cst_101 [1] : vector<8x16xf32> to vector<8xf32>
    %263 = vector.shape_cast %262 : vector<8xf32> to vector<8x1xf32>
    %264 = vector.broadcast %263 : vector<8x1xf32> to vector<8x16xf32>
    %265 = arith.subf %261, %264 : vector<8x16xf32>
    %266 = math.exp %265 : vector<8x16xf32>
    %cst_102 = arith.constant dense<0.000000e+00> : vector<8xf32>
    %267 = vector.multi_reduction <add>, %266, %cst_102 [1] : vector<8x16xf32> to vector<8xf32>
    %268 = vector.shape_cast %267 : vector<8xf32> to vector<8x1xf32>
    %269 = tpu.reciprocal %268 {approx = true} : vector<8x1xf32> -> vector<8x1xf32>
    %270 = vector.broadcast %269 : vector<8x1xf32> to vector<8x16xf32>
    %271 = arith.mulf %266, %270 : vector<8x16xf32>
    %272 = arith.truncf %271 : vector<8x16xf32> to vector<8x16xbf16>
    %cst_103 = arith.constant dense<0.000000e+00> : vector<8x32xf32>
    %273 = tpu.matmul %272, %160, %cst_103 {dimension_numbers = #tpu.dot_dimension_numbers<[1], [0], [0], [1], [0, 0, 1, 1], [], []>} : vector<8x16xbf16>, vector<16x32xbf16>, vector<8x32xf32> -> vector<8x32xf32>
    %274 = tpu.concatenate %257, %273 in 1 : vector<8x32xf32>, vector<8x32xf32> -> vector<8x64xf32>
    %c0_104 = arith.constant 0 : index
    %c0_105 = arith.constant 0 : index
    %c0_106 = arith.constant 0 : index
    %275 = vector.load %arg21[%c0_104, %c0_105, %c0_106] : memref<1x8x64xf32, #tpu.memory_space<vmem>>, vector<1x8x64xf32>
    %276 = vector.shape_cast %275 : vector<1x8x64xf32> to vector<8x64xf32>
    %277 = vector.shape_cast %274 : vector<8x64xf32> to vector<1x8x64xf32>
    tpu.vector_store %arg21[%c0_104, %c0_105, %c0_106], %277 {strides = array<i32>} : memref<1x8x64xf32, #tpu.memory_space<vmem>>, vector<1x8x64xf32>,
    return
  }
  func.func @transform_0(%arg0: i32) -> (i32, i32, i32) {
    %c0_i32 = arith.constant 0 : i32
    %c0_i32_0 = arith.constant 0 : i32
    %c0_i32_1 = arith.constant 0 : i32
    return %arg0, %c0_i32, %c0_i32_0 : i32, i32, i32
  }
  func.func @transform_1(%arg0: i32) -> (i32, i32, i32) {
    %c0_i32 = arith.constant 0 : i32
    %c0_i32_0 = arith.constant 0 : i32
    %c0_i32_1 = arith.constant 0 : i32
    return %arg0, %c0_i32, %c0_i32_0 : i32, i32, i32
  }
  func.func @transform_2(%arg0: i32) -> (i32, i32, i32) {
    %c0_i32 = arith.constant 0 : i32
    %c0_i32_0 = arith.constant 0 : i32
    %c0_i32_1 = arith.constant 0 : i32
    return %arg0, %c0_i32, %c0_i32_0 : i32, i32, i32
  }
  func.func @transform_3(%arg0: i32) -> (i32, i32, i32) {
    %c0_i32 = arith.constant 0 : i32
    %c0_i32_0 = arith.constant 0 : i32
    %c0_i32_1 = arith.constant 0 : i32
    return %arg0, %c0_i32, %c0_i32_0 : i32, i32, i32
  }
  func.func @transform_4(%arg0: i32) -> (i32, i32, i32) {
    %c0_i32 = arith.constant 0 : i32
    %c0_i32_0 = arith.constant 0 : i32
    %c0_i32_1 = arith.constant 0 : i32
    return %arg0, %c0_i32, %c0_i32_0 : i32, i32, i32
  }
  func.func @transform_5(%arg0: i32) -> (i32, i32) {
    %c0_i32 = arith.constant 0 : i32
    %c0_i32_0 = arith.constant 0 : i32
    %c0_i32_1 = arith.constant 0 : i32
    return %c0_i32, %c0_i32_0 : i32, i32
  }
  func.func @transform_6(%arg0: i32) -> (i32, i32) {
    %c0_i32 = arith.constant 0 : i32
    %c0_i32_0 = arith.constant 0 : i32
    %c0_i32_1 = arith.constant 0 : i32
    return %c0_i32, %c0_i32_0 : i32, i32
  }
  func.func @transform_7(%arg0: i32) -> (i32, i32) {
    %c0_i32 = arith.constant 0 : i32
    %c0_i32_0 = arith.constant 0 : i32
    %c0_i32_1 = arith.constant 0 : i32
    return %c0_i32, %c0_i32_0 : i32, i32
  }
  func.func @transform_8(%arg0: i32) -> (i32, i32) {
    %c0_i32 = arith.constant 0 : i32
    %c0_i32_0 = arith.constant 0 : i32
    %c0_i32_1 = arith.constant 0 : i32
    return %c0_i32, %c0_i32_0 : i32, i32
  }
  func.func @transform_9(%arg0: i32) -> (i32, i32) {
    %c0_i32 = arith.constant 0 : i32
    %c0_i32_0 = arith.constant 0 : i32
    %c0_i32_1 = arith.constant 0 : i32
    return %c0_i32, %c0_i32_0 : i32, i32
  }
  func.func @transform_10(%arg0: i32) -> (i32, i32) {
    %c0_i32 = arith.constant 0 : i32
    %c0_i32_0 = arith.constant 0 : i32
    %c0_i32_1 = arith.constant 0 : i32
    return %c0_i32, %c0_i32_0 : i32, i32
  }
  func.func @transform_11(%arg0: i32) -> (i32, i32) {
    %c0_i32 = arith.constant 0 : i32
    %c0_i32_0 = arith.constant 0 : i32
    %c0_i32_1 = arith.constant 0 : i32
    return %c0_i32, %c0_i32_0 : i32, i32
  }
  func.func @transform_12(%arg0: i32) -> (i32, i32) {
    %c0_i32 = arith.constant 0 : i32
    %c0_i32_0 = arith.constant 0 : i32
    %c0_i32_1 = arith.constant 0 : i32
    return %c0_i32, %c0_i32_0 : i32, i32
  }
  func.func @transform_13(%arg0: i32) -> (i32, i32) {
    %c0_i32 = arith.constant 0 : i32
    %c0_i32_0 = arith.constant 0 : i32
    %c0_i32_1 = arith.constant 0 : i32
    return %c0_i32, %c0_i32_0 : i32, i32
  }
  func.func @transform_14(%arg0: i32) -> (i32, i32) {
    %c0_i32 = arith.constant 0 : i32
    %c0_i32_0 = arith.constant 0 : i32
    %c0_i32_1 = arith.constant 0 : i32
    return %c0_i32, %c0_i32_0 : i32, i32
  }
  func.func @transform_15(%arg0: i32) -> (i32, i32) {
    %c0_i32 = arith.constant 0 : i32
    %c0_i32_0 = arith.constant 0 : i32
    %c0_i32_1 = arith.constant 0 : i32
    return %c0_i32, %c0_i32_0 : i32, i32
  }
  func.func @transform_16(%arg0: i32) -> (i32, i32) {
    %c0_i32 = arith.constant 0 : i32
    %c0_i32_0 = arith.constant 0 : i32
    %c0_i32_1 = arith.constant 0 : i32
    return %c0_i32, %c0_i32_0 : i32, i32
  }
  func.func @transform_17(%arg0: i32) -> (i32, i32) {
    %c0_i32 = arith.constant 0 : i32
    %c0_i32_0 = arith.constant 0 : i32
    %c0_i32_1 = arith.constant 0 : i32
    return %c0_i32, %c0_i32_0 : i32, i32
  }
  func.func @transform_18(%arg0: i32) -> (i32, i32) {
    %c0_i32 = arith.constant 0 : i32
    %c0_i32_0 = arith.constant 0 : i32
    %c0_i32_1 = arith.constant 0 : i32
    return %c0_i32, %c0_i32_0 : i32, i32
  }
  func.func @transform_19(%arg0: i32) -> (i32, i32) {
    %c0_i32 = arith.constant 0 : i32
    %c0_i32_0 = arith.constant 0 : i32
    %c0_i32_1 = arith.constant 0 : i32
    return %c0_i32, %c0_i32_0 : i32, i32
  }
  func.func @transform_20(%arg0: i32) -> (i32, i32, i32) {
    %c0_i32 = arith.constant 0 : i32
    %c0_i32_0 = arith.constant 0 : i32
    %c0_i32_1 = arith.constant 0 : i32
    return %arg0, %c0_i32, %c0_i32_0 : i32, i32, i32
  }
  func.func @transform_21(%arg0: i32) -> (i32, i32, i32) {
    %c0_i32 = arith.constant 0 : i32
    %c0_i32_0 = arith.constant 0 : i32
    %c0_i32_1 = arith.constant 0 : i32
    return %arg0, %c0_i32, %c0_i32_0 : i32, i32, i32
  }
}

</mosaic_0001>

<llo_original>
// kernel: tpu_custom_call.1
$region0: #{tpu_custom_call.1}
  #allocation0 [shape = 'u32[]', space=smem, size = 0x4, offset = 0x4, fixed_abs, tag = 'smem constant byte address 0x4 - core index']
  #allocation1 [shape = 'u32[72,128]{1,0:T(1,128)}', space=vmem, size = 0x9000, scoped, tag = 'internal scratch']
  %s0 = inlined_call_operand.hbm [shape: bf16[1,16,16], index: 0, kind: input, shape index: {}]
  %s1 = inlined_call_operand.vmem [shape: bf16[1,16,8], index: 1, kind: input, shape index: {}]
  %s2 = inlined_call_operand.hbm [shape: bf16[1,16,16], index: 2, kind: input, shape index: {}]
  %s3 = inlined_call_operand.hbm [shape: bf16[1,16,16], index: 3, kind: input, shape index: {}]
  %s4 = inlined_call_operand.vmem [shape: bf16[1,8,16], index: 4, kind: input, shape index: {}]
  %s5 = inlined_call_operand.hbm [shape: bf16[16,32], index: 5, kind: input, shape index: {}]
  %s6 = inlined_call_operand.hbm [shape: f32[1,32], index: 6, kind: input, shape index: {}]
  %s7 = inlined_call_operand.hbm [shape: bf16[8,128], index: 7, kind: input, shape index: {}]
  %s8 = inlined_call_operand.hbm [shape: f32[1,128], index: 8, kind: input, shape index: {}]
  %s9 = inlined_call_operand.vmem [shape: bf16[128,1024], index: 9, kind: input, shape index: {}]
  %s10 = inlined_call_operand.hbm [shape: f32[1,1024], index: 10, kind: input, shape index: {}]
  %s11 = inlined_call_operand.hbm [shape: f32[1,32], index: 11, kind: input, shape index: {}]
  %s12 = inlined_call_operand.vmem [shape: bf16[32,128], index: 12, kind: input, shape index: {}]
  %s13 = inlined_call_operand.hbm [shape: f32[1,128], index: 13, kind: input, shape index: {}]
  %s14 = inlined_call_operand.hbm [shape: bf16[32,128], index: 14, kind: input, shape index: {}]
  %s15 = inlined_call_operand.vmem [shape: f32[1,128], index: 15, kind: input, shape index: {}]
  %s16 = inlined_call_operand.hbm [shape: bf16[96,128], index: 16, kind: input, shape index: {}]
  %s17 = inlined_call_operand.vmem [shape: f32[1,128], index: 17, kind: input, shape index: {}]
  %s18 = inlined_call_operand.vmem [shape: bf16[32,1024], index: 18, kind: input, shape index: {}]
  %s19 = inlined_call_operand.vmem [shape: bf16[1024,32], index: 19, kind: input, shape index: {}]
  %s20 = inlined_call_operand.hbm [shape: f32[1,8,64], index: 20, kind: output, shape index: {0}]
  %s21 = inlined_call_operand.hbm [shape: f32[1,16,32], index: 21, kind: output, shape index: {1}]
  %22 = xla_tuple %s20, %s21
  %s23 = sld [smem:[#allocation0]]
  $region146: #{tpu_custom_call.1} parent=0
    _
  %s25 = ssub.s32 1, %s23
  %s26 = scalar_select 0, %s25, %s23
  $region1: #{tpu_custom_call.1} parent=0
    #allocation2 [shape = 'u8[4096]{0}', space=vmem, size = 0x1000, scoped, tag = 'input window, operand 0, single buffered']
    #allocation3 [shape = 's32[1]{0}', space=sflag, size = 0x4, scoped, tag = 'scoped memory for tpu_custom_call.1']
    #allocation4 [shape = 's32[1]{0}', space=sflag, size = 0x4, scoped, tag = 'scoped memory for tpu_custom_call.1']
    #allocation5 [shape = 'u8[4096]{0}', space=vmem, size = 0x1000, scoped, tag = 'input window, operand 2, single buffered']
    #allocation6 [shape = 's32[1]{0}', space=sflag, size = 0x4, scoped, tag = 'scoped memory for tpu_custom_call.1']
    #allocation7 [shape = 'u8[4096]{0}', space=vmem, size = 0x1000, scoped, tag = 'input window, operand 3, single buffered']
    #allocation8 [shape = 'u8[4096]{0}', space=vmem, size = 0x1000, scoped, tag = 'input window, operand 5, single buffered']
    #allocation9 [shape = 's32[1]{0}', space=sflag, size = 0x4, scoped, tag = 'scoped memory for tpu_custom_call.1']
    #allocation10 [shape = 'u8[512]{0}', space=vmem, size = 0x400, scoped, tag = 'input window, operand 6, single buffered']
    #allocation11 [shape = 'u8[2048]{0}', space=vmem, size = 0x800, scoped, tag = 'input window, operand 7, single buffered']
    #allocation12 [shape = 's32[1]{0}', space=sflag, size = 0x4, scoped, tag = 'scoped memory for tpu_custom_call.1']
    #allocation13 [shape = 'u8[512]{0}', space=vmem, size = 0x400, scoped, tag = 'input window, operand 8, single buffered']
    #allocation14 [shape = 'u8[4096]{0}', space=vmem, size = 0x1000, scoped, tag = 'input window, operand 10, single buffered']
    #allocation15 [shape = 's32[1]{0}', space=sflag, size = 0x4, scoped, tag = 'scoped memory for tpu_custom_call.1']
    #allocation16 [shape = 'u8[512]{0}', space=vmem, size = 0x400, scoped, tag = 'input window, operand 11, single buffered']
    #allocation17 [shape = 'u8[512]{0}', space=vmem, size = 0x400, scoped, tag = 'input window, operand 13, single buffered']
    #allocation18 [shape = 's32[1]{0}', space=sflag, size = 0x4, scoped, tag = 'scoped memory for tpu_custom_call.1']
    #allocation19 [shape = 'u8[8192]{0}', space=vmem, size = 0x2000, scoped, tag = 'input window, operand 14, single buffered']
    #allocation20 [shape = 'u8[24576]{0}', space=vmem, size = 0x6000, scoped, tag = 'input window, operand 16, single buffered']
    #allocation21 [shape = 's32[1]{0}', space=sflag, size = 0x4, scoped, tag = 'scoped memory for tpu_custom_call.1']
    #allocation22 [shape = 'u8[4096]{0}', space=vmem, size = 0x1000, scoped, tag = 'output window, operand 0, single buffered']
    #allocation23 [shape = 'u8[8192]{0}', space=vmem, size = 0x2000, scoped, tag = 'output window, operand 1, single buffered']
    #allocation24 [shape = 's32[1]{0}', space=sflag, size = 0x4, scoped, tag = 'scoped memory for tpu_custom_call.1']
    %27 = vsyncpa [#allocation3], 0
    %28 = vsyncpa [#allocation6], 0
    %29 = vsyncpa [#allocation9], 0
    %30 = vsyncpa [#allocation12], 0
    %31 = vsyncpa [#allocation15], 0
    %32 = vsyncpa [#allocation18], 0
    %33 = vsyncpa [#allocation21], 0
    %34 = vsyncpa [#allocation4], 0
    %35 = vsyncpa [#allocation24], 0
    // Predicated region
    $region2: #{tpu_custom_call.1} parent=1 // pred_check
      _
    $region3: #{tpu_custom_call.1} parent=1 // pred_check_branch
      %37 = sbr.rel (0) target = $region5
    $region4: #{tpu_custom_call.1} parent=1 // pred_region
      %39 = vsyncadd [#allocation3], 0
      %s40 = sshll.u32 %s0, 4
      %s41 = int_to_ptr.hbm [resolvable:$true] %s40
      %s42 = sshll.u32 [#allocation2], 4
      %s43 = int_to_ptr.vmem [resolvable:$true] %s42
      %48 = dma.hbm_to_vmem [thread:$0]  %s41, 128, %s43, [#allocation3], 64, 64, 4
    $region5: #{tpu_custom_call.1} parent=1 // pred_fallthru
      _
    // Predicated region
    $region6: #{tpu_custom_call.1} parent=1 // pred_check
      _
    $region7: #{tpu_custom_call.1} parent=1 // pred_check_branch
      %50 = sbr.rel (0) target = $region9
    $region8: #{tpu_custom_call.1} parent=1 // pred_region
      _
    $region9: #{tpu_custom_call.1} parent=1 // pred_fallthru
      _
    // Predicated region
    $region10: #{tpu_custom_call.1} parent=1 // pred_check
      _
    $region11: #{tpu_custom_call.1} parent=1 // pred_check_branch
      %52 = sbr.rel (0) target = $region13
    $region12: #{tpu_custom_call.1} parent=1 // pred_region
      %54 = vsyncadd [#allocation6], 0
      %s55 = sshll.u32 %s2, 4
      %s56 = int_to_ptr.hbm [resolvable:$true] %s55
      %s57 = sshll.u32 [#allocation5], 4
      %s58 = int_to_ptr.vmem [resolvable:$true] %s57
      %63 = dma.hbm_to_vmem [thread:$0]  %s56, 128, %s58, [#allocation6], 64, 64, 4
    $region13: #{tpu_custom_call.1} parent=1 // pred_fallthru
      _
    // Predicated region
    $region14: #{tpu_custom_call.1} parent=1 // pred_check
      _
    $region15: #{tpu_custom_call.1} parent=1 // pred_check_branch
      %65 = sbr.rel (0) target = $region17
    $region16: #{tpu_custom_call.1} parent=1 // pred_region
      %67 = vsyncadd [#allocation6], 0
      %s68 = sshll.u32 %s3, 4
      %s69 = int_to_ptr.hbm [resolvable:$true] %s68
      %s70 = sshll.u32 [#allocation7], 4
      %s71 = int_to_ptr.vmem [resolvable:$true] %s70
      %76 = dma.hbm_to_vmem [thread:$0]  %s69, 128, %s71, [#allocation6], 64, 64, 4
    $region17: #{tpu_custom_call.1} parent=1 // pred_fallthru
      _
    // Predicated region
    $region18: #{tpu_custom_call.1} parent=1 // pred_check
      _
    $region19: #{tpu_custom_call.1} parent=1 // pred_check_branch
      %78 = sbr.rel (0) target = $region21
    $region20: #{tpu_custom_call.1} parent=1 // pred_region
      _
    $region21: #{tpu_custom_call.1} parent=1 // pred_fallthru
      _
    // Predicated region
    $region22: #{tpu_custom_call.1} parent=1 // pred_check
      _
    $region23: #{tpu_custom_call.1} parent=1 // pred_check_branch
      %80 = sbr.rel (0) target = $region25
    $region24: #{tpu_custom_call.1} parent=1 // pred_region
      %82 = vsyncadd [#allocation9], 0
      %s83 = sshll.u32 %s5, 4
      %s84 = int_to_ptr.hbm [resolvable:$true] %s83
      %s85 = sshll.u32 [#allocation8], 4
      %s86 = int_to_ptr.vmem [resolvable:$true] %s85
      %91 = dma.hbm_to_vmem [thread:$0]  %s84, 128, %s86, [#allocation9], 64, 64, 4
    $region25: #{tpu_custom_call.1} parent=1 // pred_fallthru
      _
    // Predicated region
    $region26: #{tpu_custom_call.1} parent=1 // pred_check
      _
    $region27: #{tpu_custom_call.1} parent=1 // pred_check_branch
      %93 = sbr.rel (0) target = $region29
    $region28: #{tpu_custom_call.1} parent=1 // pred_region
      %95 = vsyncadd [#allocation9], 0
      %s97 = sshll.u32 %s6, 4
      %s98 = int_to_ptr.hbm [resolvable:$true] %s97
      %s99 = sshll.u32 [#allocation10], 4
      %s100 = int_to_ptr.vmem [resolvable:$true] %s99
      %102 = dma.hbm_to_vmem [thread:$0]  %s98, 16, %s100, [#allocation9]
    $region29: #{tpu_custom_call.1} parent=1 // pred_fallthru
      _
    // Predicated region
    $region30: #{tpu_custom_call.1} parent=1 // pred_check
      _
    $region31: #{tpu_custom_call.1} parent=1 // pred_check_branch
      %104 = sbr.rel (0) target = $region33
    $region32: #{tpu_custom_call.1} parent=1 // pred_region
      %106 = vsyncadd [#allocation12], 0
      %s108 = sshll.u32 %s7, 4
      %s109 = int_to_ptr.hbm [resolvable:$true] %s108
      %s110 = sshll.u32 [#allocation11], 4
      %s111 = int_to_ptr.vmem [resolvable:$true] %s110
      %113 = dma.hbm_to_vmem [thread:$0]  %s109, 64, %s111, [#allocation12]
    $region33: #{tpu_custom_call.1} parent=1 // pred_fallthru
      _
    // Predicated region
    $region34: #{tpu_custom_call.1} parent=1 // pred_check
      _
    $region35: #{tpu_custom_call.1} parent=1 // pred_check_branch
      %115 = sbr.rel (0) target = $region37
    $region36: #{tpu_custom_call.1} parent=1 // pred_region
      %117 = vsyncadd [#allocation12], 0
      %s119 = sshll.u32 %s8, 4
      %s120 = int_to_ptr.hbm [resolvable:$true] %s119
      %s121 = sshll.u32 [#allocation13], 4
      %s122 = int_to_ptr.vmem [resolvable:$true] %s121
      %124 = dma.hbm_to_vmem [thread:$0]  %s120, 16, %s122, [#allocation12]
    $region37: #{tpu_custom_call.1} parent=1 // pred_fallthru
      _
    // Predicated region
    $region38: #{tpu_custom_call.1} parent=1 // pred_check
      _
    $region39: #{tpu_custom_call.1} parent=1 // pred_check_branch
      %126 = sbr.rel (0) target = $region41
    $region40: #{tpu_custom_call.1} parent=1 // pred_region
      _
    $region41: #{tpu_custom_call.1} parent=1 // pred_fallthru
      _
    // Predicated region
    $region42: #{tpu_custom_call.1} parent=1 // pred_check
      _
    $region43: #{tpu_custom_call.1} parent=1 // pred_check_branch
      %128 = sbr.rel (0) target = $region45
    $region44: #{tpu_custom_call.1} parent=1 // pred_region
      %130 = vsyncadd [#allocation15], 0
      %s132 = sshll.u32 %s10, 4
      %s133 = int_to_ptr.hbm [resolvable:$true] %s132
      %s134 = sshll.u32 [#allocation14], 4
      %s135 = int_to_ptr.vmem [resolvable:$true] %s134
      %137 = dma.hbm_to_vmem [thread:$0]  %s133, 128, %s135, [#allocation15]
    $region45: #{tpu_custom_call.1} parent=1 // pred_fallthru
      _
    // Predicated region
    $region46: #{tpu_custom_call.1} parent=1 // pred_check
      _
    $region47: #{tpu_custom_call.1} parent=1 // pred_check_branch
      %139 = sbr.rel (0) target = $region49
    $region48: #{tpu_custom_call.1} parent=1 // pred_region
      %141 = vsyncadd [#allocation15], 0
      %s143 = sshll.u32 %s11, 4
      %s144 = int_to_ptr.hbm [resolvable:$true] %s143
      %s145 = sshll.u32 [#allocation16], 4
      %s146 = int_to_ptr.vmem [resolvable:$true] %s145
      %148 = dma.hbm_to_vmem [thread:$0]  %s144, 16, %s146, [#allocation15]
    $region49: #{tpu_custom_call.1} parent=1 // pred_fallthru
      _
    // Predicated region
    $region50: #{tpu_custom_call.1} parent=1 // pred_check
      _
    $region51: #{tpu_custom_call.1} parent=1 // pred_check_branch
      %150 = sbr.rel (0) target = $region53
    $region52: #{tpu_custom_call.1} parent=1 // pred_region
      _
    $region53: #{tpu_custom_call.1} parent=1 // pred_fallthru
      _
    // Predicated region
    $region54: #{tpu_custom_call.1} parent=1 // pred_check
      _
    $region55: #{tpu_custom_call.1} parent=1 // pred_check_branch
      %152 = sbr.rel (0) target = $region57
    $region56: #{tpu_custom_call.1} parent=1 // pred_region
      %154 = vsyncadd [#allocation18], 0
      %s156 = sshll.u32 %s13, 4
      %s157 = int_to_ptr.hbm [resolvable:$true] %s156
      %s158 = sshll.u32 [#allocation17], 4
      %s159 = int_to_ptr.vmem [resolvable:$true] %s158
      %161 = dma.hbm_to_vmem [thread:$0]  %s157, 16, %s159, [#allocation18]
    $region57: #{tpu_custom_call.1} parent=1 // pred_fallthru
      _
    // Predicated region
    $region58: #{tpu_custom_call.1} parent=1 // pred_check
      _
    $region59: #{tpu_custom_call.1} parent=1 // pred_check_branch
      %163 = sbr.rel (0) target = $region61
    $region60: #{tpu_custom_call.1} parent=1 // pred_region
      %165 = vsyncadd [#allocation18], 0
      %s166 = sshll.u32 %s14, 4
      %s167 = int_to_ptr.hbm [resolvable:$true] %s166
      %s168 = sshll.u32 [#allocation19], 4
      %s169 = int_to_ptr.vmem [resolvable:$true] %s168
      %174 = dma.hbm_to_vmem [thread:$0]  %s167, 256, %s169, [#allocation18], 64, 64, 4
    $region61: #{tpu_custom_call.1} parent=1 // pred_fallthru
      _
    // Predicated region
    $region62: #{tpu_custom_call.1} parent=1 // pred_check
      _
    $region63: #{tpu_custom_call.1} parent=1 // pred_check_branch
      %176 = sbr.rel (0) target = $region65
    $region64: #{tpu_custom_call.1} parent=1 // pred_region
      _
    $region65: #{tpu_custom_call.1} parent=1 // pred_fallthru
      _
    // Predicated region
    $region66: #{tpu_custom_call.1} parent=1 // pred_check
      _
    $region67: #{tpu_custom_call.1} parent=1 // pred_check_branch
      %178 = sbr.rel (0) target = $region69
    $region68: #{tpu_custom_call.1} parent=1 // pred_region
      %180 = vsyncadd [#allocation21], 0
      %s181 = sshll.u32 %s16, 4
      %s182 = int_to_ptr.hbm [resolvable:$true] %s181
      %s183 = sshll.u32 [#allocation20], 4
      %s184 = int_to_ptr.vmem [resolvable:$true] %s183
      %189 = dma.hbm_to_vmem [thread:$0]  %s182, 768, %s184, [#allocation21], 64, 64, 4
    $region69: #{tpu_custom_call.1} parent=1 // pred_fallthru
      _
    // Predicated region
    $region70: #{tpu_custom_call.1} parent=1 // pred_check
      _
    $region71: #{tpu_custom_call.1} parent=1 // pred_check_branch
      %191 = sbr.rel (0) target = $region73
    $region72: #{tpu_custom_call.1} parent=1 // pred_region
      _
    $region73: #{tpu_custom_call.1} parent=1 // pred_fallthru
      _
    // Predicated region
    $region74: #{tpu_custom_call.1} parent=1 // pred_check
      _
    $region75: #{tpu_custom_call.1} parent=1 // pred_check_branch
      %193 = sbr.rel (0) target = $region77
    $region76: #{tpu_custom_call.1} parent=1 // pred_region
      _
    $region77: #{tpu_custom_call.1} parent=1 // pred_fallthru
      _
    // Predicated region
    $region78: #{tpu_custom_call.1} parent=1 // pred_check
      _
    $region79: #{tpu_custom_call.1} parent=1 // pred_check_branch
      %195 = sbr.rel (0) target = $region81
    $region80: #{tpu_custom_call.1} parent=1 // pred_region
      _
    $region81: #{tpu_custom_call.1} parent=1 // pred_fallthru
      _
    // Predicated region
    $region82: #{tpu_custom_call.1} parent=1 // pred_check
      _
    $region83: #{tpu_custom_call.1} parent=1 // pred_check_branch
      %197 = sbr.rel (0) target = $region85
    $region84: #{tpu_custom_call.1} parent=1 // pred_region
      %199 = dma.done [#allocation3], 128
    $region85: #{tpu_custom_call.1} parent=1 // pred_fallthru
      _
    // Predicated region
    $region86: #{tpu_custom_call.1} parent=1 // pred_check
      _
    $region87: #{tpu_custom_call.1} parent=1 // pred_check_branch
      %201 = sbr.rel (0) target = $region89
    $region88: #{tpu_custom_call.1} parent=1 // pred_region
      %203 = dma.done [#allocation6], 128
    $region89: #{tpu_custom_call.1} parent=1 // pred_fallthru
      _
    // Predicated region
    $region90: #{tpu_custom_call.1} parent=1 // pred_check
      _
    $region91: #{tpu_custom_call.1} parent=1 // pred_check_branch
      %205 = sbr.rel (0) target = $region93
    $region92: #{tpu_custom_call.1} parent=1 // pred_region
      %207 = dma.done [#allocation6], 128
    $region93: #{tpu_custom_call.1} parent=1 // pred_fallthru
      _
    // Predicated region
    $region94: #{tpu_custom_call.1} parent=1 // pred_check
      _
    $region95: #{tpu_custom_call.1} parent=1 // pred_check_branch
      %209 = sbr.rel (0) target = $region97
    $region96: #{tpu_custom_call.1} parent=1 // pred_region
      %211 = dma.done [#allocation9], 128
    $region97: #{tpu_custom_call.1} parent=1 // pred_fallthru
      _
    // Predicated region
    $region98: #{tpu_custom_call.1} parent=1 // pred_check
      _
    $region99: #{tpu_custom_call.1} parent=1 // pred_check_branch
      %213 = sbr.rel (0) target = $region101
    $region100: #{tpu_custom_call.1} parent=1 // pred_region
      %215 = dma.done [#allocation9], 16
    $region101: #{tpu_custom_call.1} parent=1 // pred_fallthru
      _
    // Predicated region
    $region102: #{tpu_custom_call.1} parent=1 // pred_check
      _
    $region103: #{tpu_custom_call.1} parent=1 // pred_check_branch
      %217 = sbr.rel (0) target = $region105
    $region104: #{tpu_custom_call.1} parent=1 // pred_region
      %219 = dma.done [#allocation12], 64
    $region105: #{tpu_custom_call.1} parent=1 // pred_fallthru
      _
    // Predicated region
    $region106: #{tpu_custom_call.1} parent=1 // pred_check
      _
    $region107: #{tpu_custom_call.1} parent=1 // pred_check_branch
      %221 = sbr.rel (0) target = $region109
    $region108: #{tpu_custom_call.1} parent=1 // pred_region
      %223 = dma.done [#allocation12], 16
    $region109: #{tpu_custom_call.1} parent=1 // pred_fallthru
      _
    // Predicated region
    $region110: #{tpu_custom_call.1} parent=1 // pred_check
      _
    $region111: #{tpu_custom_call.1} parent=1 // pred_check_branch
      %225 = sbr.rel (0) target = $region113
    $region112: #{tpu_custom_call.1} parent=1 // pred_region
      %227 = dma.done [#allocation15], 128
    $region113: #{tpu_custom_call.1} parent=1 // pred_fallthru
      _
    // Predicated region
    $region114: #{tpu_custom_call.1} parent=1 // pred_check
      _
    $region115: #{tpu_custom_call.1} parent=1 // pred_check_branch
      %229 = sbr.rel (0) target = $region117
    $region116: #{tpu_custom_call.1} parent=1 // pred_region
      %231 = dma.done [#allocation15], 16
    $region117: #{tpu_custom_call.1} parent=1 // pred_fallthru
      _
    // Predicated region
    $region118: #{tpu_custom_call.1} parent=1 // pred_check
      _
    $region119: #{tpu_custom_call.1} parent=1 // pred_check_branch
      %233 = sbr.rel (0) target = $region121
    $region120: #{tpu_custom_call.1} parent=1 // pred_region
      %235 = dma.done [#allocation18], 16
    $region121: #{tpu_custom_call.1} parent=1 // pred_fallthru
      _
    // Predicated region
    $region122: #{tpu_custom_call.1} parent=1 // pred_check
      _
    $region123: #{tpu_custom_call.1} parent=1 // pred_check_branch
      %237 = sbr.rel (0) target = $region125
    $region124: #{tpu_custom_call.1} parent=1 // pred_region
      %239 = dma.done [#allocation18], 256
    $region125: #{tpu_custom_call.1} parent=1 // pred_fallthru
      _
    // Predicated region
    $region126: #{tpu_custom_call.1} parent=1 // pred_check
      _
    $region127: #{tpu_custom_call.1} parent=1 // pred_check_branch
      %241 = sbr.rel (0) target = $region129
    $region128: #{tpu_custom_call.1} parent=1 // pred_region
      %243 = dma.done [#allocation21], 768
    $region129: #{tpu_custom_call.1} parent=1 // pred_fallthru
      _
    %v245 = vld [vmem:[#allocation2] sm:$0xf]
    %v246 = vld [vmem:[#allocation2 + $0x4] sm:$0xf]
    %v247 = vld [vmem:[#allocation8] sm:$0xf]
    %v248 = vld [vmem:[#allocation8 + $0x4] sm:$0xf]
    %v249 = vld [vmem:[#allocation10] sm:$0x1]
    %v251 = vperm.slane %v249, 0
    %v255 = vunpack.c.l.b16 %v245
    %v256 = vunpack.c.l.b16 %v246
    %v257 = vpack.c.b16 %v256, %v255
    %v260 = vunpack.c.l.b16 %v247
    %v261 = vunpack.c.l.b16 %v248
    %v262 = vpack.c.b16 %v261, %v260
    %vm264 = vcmask 130048
    %v266 = vsel %vm264, %v257, 0
    %268 = vmatpush.bf16.msra.mxu0 0
    %269 = vmatpush.bf16.msra.mxu0 0
    %270 = vmatpush.bf16.msra.mxu0 0
    %271 = vmatpush.bf16.msra.mxu0 0
    %272 = vmatpush.bf16.msra.mxu0 0
    %273 = vmatpush.bf16.msra.mxu0 0
    %274 = vmatpush.bf16.msra.mxu0 0
    %275 = vmatpush.bf16.msra.mxu0 %v262
    %276 = vmatmul.bf16.gmra.mxu0 %v266
    %v277 = vpop.f32.mrf.mxu0
    %v278 = vadd.f32 %v251, %v277
    %v279 = vpop.f32.mrf.mxu0
    %v280 = vadd.f32 %v251, %v279
    %281 = vdwg.mxu0
    %v282 = vmax.f32 %v278, 0.0
    %v283 = vmax.f32 %v280, 0.0
    %v284 = vld [vmem:[%s1] sm:$0xf]
    %v285 = vld [vmem:[%s1 + $0x4] sm:$0xf]
    %v286 = vld [vmem:[#allocation11] sm:$0xf]
    %v287 = vld [vmem:[#allocation13] sm:$0x1]
    %v289 = vperm.slane %v287, 0
    %v293 = vunpack.c.l.b16 %v284
    %v294 = vunpack.c.l.b16 %v285
    %v295 = vpack.c.b16 %v294, %v293
    %vm296 = vcmask 64512
    %v298 = vsel %vm296, %v295, 0
    %vm300 = vcmask 1043456
    %v302 = vsel %vm300, %v286, 0
    %304 = vmatpush.bf16.msra.mxu0 0
    %305 = vmatpush.bf16.msra.mxu0 0
    %306 = vmatpush.bf16.msra.mxu0 0
    %307 = vmatpush.bf16.msra.mxu0 0
    %308 = vmatpush.bf16.msra.mxu0 0
    %309 = vmatpush.bf16.msra.mxu0 0
    %310 = vmatpush.bf16.msra.mxu0 0
    %311 = vmatpush.bf16.msra.mxu0 %v302
    %312 = vmatmul.bf16.gmra.mxu0 %v298
    %v313 = vpop.f32.mrf.mxu0
    %v314 = vadd.f32 %v289, %v313
    %v315 = vpop.f32.mrf.mxu0
    %v316 = vadd.f32 %v289, %v315
    %317 = vdwg.mxu0
    %v318 = vmax.f32 %v314, 0.0
    %v319 = vmax.f32 %v316, 0.0
    %v320 = vpack.c.bf16 %v319, %v318
    %v321 = vld [vmem:[%s9] sm:$0xff]
    %v322 = vld [vmem:[%s9 + $0x8] sm:$0xff]
    %v323 = vld [vmem:[%s9 + $0x10] sm:$0xff]
    %v324 = vld [vmem:[%s9 + $0x18] sm:$0xff]
    %v325 = vld [vmem:[%s9 + $0x20] sm:$0xff]
    %v326 = vld [vmem:[%s9 + $0x28] sm:$0xff]
    %v327 = vld [vmem:[%s9 + $0x30] sm:$0xff]
    %v328 = vld [vmem:[%s9 + $0x38] sm:$0xff]
    %v329 = vld [vmem:[%s9 + $0x40] sm:$0xff]
    %v330 = vld [vmem:[%s9 + $0x48] sm:$0xff]
    %v331 = vld [vmem:[%s9 + $0x50] sm:$0xff]
    %v332 = vld [vmem:[%s9 + $0x58] sm:$0xff]
    %v333 = vld [vmem:[%s9 + $0x60] sm:$0xff]
    %v334 = vld [vmem:[%s9 + $0x68] sm:$0xff]
    %v335 = vld [vmem:[%s9 + $0x70] sm:$0xff]
    %v336 = vld [vmem:[%s9 + $0x78] sm:$0xff]
    %v337 = vld [vmem:[%s9 + $0x80] sm:$0xff]
    %v338 = vld [vmem:[%s9 + $0x88] sm:$0xff]
    %v339 = vld [vmem:[%s9 + $0x90] sm:$0xff]
    %v340 = vld [vmem:[%s9 + $0x98] sm:$0xff]
    %v341 = vld [vmem:[%s9 + $0xa0] sm:$0xff]
    %v342 = vld [vmem:[%s9 + $0xa8] sm:$0xff]
    %v343 = vld [vmem:[%s9 + $0xb0] sm:$0xff]
    %v344 = vld [vmem:[%s9 + $0xb8] sm:$0xff]
    %v345 = vld [vmem:[%s9 + $0xc0] sm:$0xff]
    %v346 = vld [vmem:[%s9 + $0xc8] sm:$0xff]
    %v347 = vld [vmem:[%s9 + $0xd0] sm:$0xff]
    %v348 = vld [vmem:[%s9 + $0xd8] sm:$0xff]
    %v349 = vld [vmem:[%s9 + $0xe0] sm:$0xff]
    %v350 = vld [vmem:[%s9 + $0xe8] sm:$0xff]
    %v351 = vld [vmem:[%s9 + $0xf0] sm:$0xff]
    %v352 = vld [vmem:[%s9 + $0xf8] sm:$0xff]
    %v353 = vld [vmem:[%s9 + $0x100] sm:$0xff]
    %v354 = vld [vmem:[%s9 + $0x108] sm:$0xff]
    %v355 = vld [vmem:[%s9 + $0x110] sm:$0xff]
    %v356 = vld [vmem:[%s9 + $0x118] sm:$0xff]
    %v357 = vld [vmem:[%s9 + $0x120] sm:$0xff]
    %v358 = vld [vmem:[%s9 + $0x128] sm:$0xff]
    %v359 = vld [vmem:[%s9 + $0x130] sm:$0xff]
    %v360 = vld [vmem:[%s9 + $0x138] sm:$0xff]
    %v361 = vld [vmem:[%s9 + $0x140] sm:$0xff]
    %v362 = vld [vmem:[%s9 + $0x148] sm:$0xff]
    %v363 = vld [vmem:[%s9 + $0x150] sm:$0xff]
    %v364 = vld [vmem:[%s9 + $0x158] sm:$0xff]
    %v365 = vld [vmem:[%s9 + $0x160] sm:$0xff]
    %v366 = vld [vmem:[%s9 + $0x168] sm:$0xff]
    %v367 = vld [vmem:[%s9 + $0x170] sm:$0xff]
    %v368 = vld [vmem:[%s9 + $0x178] sm:$0xff]
    %v369 = vld [vmem:[%s9 + $0x180] sm:$0xff]
    %v370 = vld [vmem:[%s9 + $0x188] sm:$0xff]
    %v371 = vld [vmem:[%s9 + $0x190] sm:$0xff]
    %v372 = vld [vmem:[%s9 + $0x198] sm:$0xff]
    %v373 = vld [vmem:[%s9 + $0x1a0] sm:$0xff]
    %v374 = vld [vmem:[%s9 + $0x1a8] sm:$0xff]
    %v375 = vld [vmem:[%s9 + $0x1b0] sm:$0xff]
    %v376 = vld [vmem:[%s9 + $0x1b8] sm:$0xff]
    %v377 = vld [vmem:[%s9 + $0x1c0] sm:$0xff]
    %v378 = vld [vmem:[%s9 + $0x1c8] sm:$0xff]
    %v379 = vld [vmem:[%s9 + $0x1d0] sm:$0xff]
    %v380 = vld [vmem:[%s9 + $0x1d8] sm:$0xff]
    %v381 = vld [vmem:[%s9 + $0x1e0] sm:$0xff]
    %v382 = vld [vmem:[%s9 + $0x1e8] sm:$0xff]
    %v383 = vld [vmem:[%s9 + $0x1f0] sm:$0xff]
    %v384 = vld [vmem:[%s9 + $0x1f8] sm:$0xff]
    %v385 = vld [vmem:[#allocation14] sm:$0xff]
    %v387 = vperm.slane %v385, 0
    %v388 = vperm.slane %v385, 1
    %v389 = vperm.slane %v385, 2
    %v390 = vperm.slane %v385, 3
    %v391 = vperm.slane %v385, 4
    %v392 = vperm.slane %v385, 5
    %v393 = vperm.slane %v385, 6
    %v394 = vperm.slane %v385, 7
    %v467 = vunpack.c.l.b16 %v321
    %v468 = vunpack.c.h.b16 %v321
    %v469 = vunpack.c.l.b16 %v322
    %v470 = vunpack.c.h.b16 %v322
    %v471 = vunpack.c.l.b16 %v323
    %v472 = vunpack.c.h.b16 %v323
    %v473 = vunpack.c.l.b16 %v324
    %v474 = vunpack.c.h.b16 %v324
    %v475 = vunpack.c.l.b16 %v325
    %v476 = vunpack.c.h.b16 %v325
    %v477 = vunpack.c.l.b16 %v326
    %v478 = vunpack.c.h.b16 %v326
    %v479 = vunpack.c.l.b16 %v327
    %v480 = vunpack.c.h.b16 %v327
    %v481 = vunpack.c.l.b16 %v328
    %v482 = vunpack.c.h.b16 %v328
    %v483 = vunpack.c.l.b16 %v329
    %v484 = vunpack.c.h.b16 %v329
    %v485 = vunpack.c.l.b16 %v330
    %v486 = vunpack.c.h.b16 %v330
    %v487 = vunpack.c.l.b16 %v331
    %v488 = vunpack.c.h.b16 %v331
    %v489 = vunpack.c.l.b16 %v332
    %v490 = vunpack.c.h.b16 %v332
    %v491 = vunpack.c.l.b16 %v333
    %v492 = vunpack.c.h.b16 %v333
    %v493 = vunpack.c.l.b16 %v334
    %v494 = vunpack.c.h.b16 %v334
    %v495 = vunpack.c.l.b16 %v335
    %v496 = vunpack.c.h.b16 %v335
    %v497 = vunpack.c.l.b16 %v336
    %v498 = vunpack.c.h.b16 %v336
    %v499 = vunpack.c.l.b16 %v337
    %v500 = vunpack.c.h.b16 %v337
    %v501 = vunpack.c.l.b16 %v338
    %v502 = vunpack.c.h.b16 %v338
    %v503 = vunpack.c.l.b16 %v339
    %v504 = vunpack.c.h.b16 %v339
    %v505 = vunpack.c.l.b16 %v340
    %v506 = vunpack.c.h.b16 %v340
    %v507 = vunpack.c.l.b16 %v341
    %v508 = vunpack.c.h.b16 %v341
    %v509 = vunpack.c.l.b16 %v342
    %v510 = vunpack.c.h.b16 %v342
    %v511 = vunpack.c.l.b16 %v343
    %v512 = vunpack.c.h.b16 %v343
    %v513 = vunpack.c.l.b16 %v344
    %v514 = vunpack.c.h.b16 %v344
    %v515 = vunpack.c.l.b16 %v345
    %v516 = vunpack.c.h.b16 %v345
    %v517 = vunpack.c.l.b16 %v346
    %v518 = vunpack.c.h.b16 %v346
    %v519 = vunpack.c.l.b16 %v347
    %v520 = vunpack.c.h.b16 %v347
    %v521 = vunpack.c.l.b16 %v348
    %v522 = vunpack.c.h.b16 %v348
    %v523 = vunpack.c.l.b16 %v349
    %v524 = vunpack.c.h.b16 %v349
    %v525 = vunpack.c.l.b16 %v350
    %v526 = vunpack.c.h.b16 %v350
    %v527 = vunpack.c.l.b16 %v351
    %v528 = vunpack.c.h.b16 %v351
    %v529 = vunpack.c.l.b16 %v352
    %v530 = vunpack.c.h.b16 %v352
    %v531 = vunpack.c.l.b16 %v353
    %v532 = vunpack.c.h.b16 %v353
    %v533 = vunpack.c.l.b16 %v354
    %v534 = vunpack.c.h.b16 %v354
    %v535 = vunpack.c.l.b16 %v355
    %v536 = vunpack.c.h.b16 %v355
    %v537 = vunpack.c.l.b16 %v356
    %v538 = vunpack.c.h.b16 %v356
    %v539 = vunpack.c.l.b16 %v357
    %v540 = vunpack.c.h.b16 %v357
    %v541 = vunpack.c.l.b16 %v358
    %v542 = vunpack.c.h.b16 %v358
    %v543 = vunpack.c.l.b16 %v359
    %v544 = vunpack.c.h.b16 %v359
    %v545 = vunpack.c.l.b16 %v360
    %v546 = vunpack.c.h.b16 %v360
    %v547 = vunpack.c.l.b16 %v361
    %v548 = vunpack.c.h.b16 %v361
    %v549 = vunpack.c.l.b16 %v362
    %v550 = vunpack.c.h.b16 %v362
    %v551 = vunpack.c.l.b16 %v363
    %v552 = vunpack.c.h.b16 %v363
    %v553 = vunpack.c.l.b16 %v364
    %v554 = vunpack.c.h.b16 %v364
    %v555 = vunpack.c.l.b16 %v365
    %v556 = vunpack.c.h.b16 %v365
    %v557 = vunpack.c.l.b16 %v366
    %v558 = vunpack.c.h.b16 %v366
    %v559 = vunpack.c.l.b16 %v367
    %v560 = vunpack.c.h.b16 %v367
    %v561 = vunpack.c.l.b16 %v368
    %v562 = vunpack.c.h.b16 %v368
    %v563 = vunpack.c.l.b16 %v369
    %v564 = vunpack.c.h.b16 %v369
    %v565 = vunpack.c.l.b16 %v370
    %v566 = vunpack.c.h.b16 %v370
    %v567 = vunpack.c.l.b16 %v371
    %v568 = vunpack.c.h.b16 %v371
    %v569 = vunpack.c.l.b16 %v372
    %v570 = vunpack.c.h.b16 %v372
    %v571 = vunpack.c.l.b16 %v373
    %v572 = vunpack.c.h.b16 %v373
    %v573 = vunpack.c.l.b16 %v374
    %v574 = vunpack.c.h.b16 %v374
    %v575 = vunpack.c.l.b16 %v375
    %v576 = vunpack.c.h.b16 %v375
    %v577 = vunpack.c.l.b16 %v376
    %v578 = vunpack.c.h.b16 %v376
    %v579 = vunpack.c.l.b16 %v377
    %v580 = vunpack.c.h.b16 %v377
    %v581 = vunpack.c.l.b16 %v378
    %v582 = vunpack.c.h.b16 %v378
    %v583 = vunpack.c.l.b16 %v379
    %v584 = vunpack.c.h.b16 %v379
    %v585 = vunpack.c.l.b16 %v380
    %v586 = vunpack.c.h.b16 %v380
    %v587 = vunpack.c.l.b16 %v381
    %v588 = vunpack.c.h.b16 %v381
    %v589 = vunpack.c.l.b16 %v382
    %v590 = vunpack.c.h.b16 %v382
    %v591 = vunpack.c.l.b16 %v383
    %v592 = vunpack.c.h.b16 %v383
    %v593 = vunpack.c.l.b16 %v384
    %v594 = vunpack.c.h.b16 %v384
    %v595 = vpack.c.b16 %v475, %v467
    %v596 = vpack.c.b16 %v476, %v468
    %v597 = vpack.c.b16 %v477, %v469
    %v598 = vpack.c.b16 %v478, %v470
    %v599 = vpack.c.b16 %v479, %v471
    %v600 = vpack.c.b16 %v480, %v472
    %v601 = vpack.c.b16 %v481, %v473
    %v602 = vpack.c.b16 %v482, %v474
    %v603 = vpack.c.b16 %v491, %v483
    %v604 = vpack.c.b16 %v492, %v484
    %v605 = vpack.c.b16 %v493, %v485
    %v606 = vpack.c.b16 %v494, %v486
    %v607 = vpack.c.b16 %v495, %v487
    %v608 = vpack.c.b16 %v496, %v488
    %v609 = vpack.c.b16 %v497, %v489
    %v610 = vpack.c.b16 %v498, %v490
    %v611 = vpack.c.b16 %v507, %v499
    %v612 = vpack.c.b16 %v508, %v500
    %v613 = vpack.c.b16 %v509, %v501
    %v614 = vpack.c.b16 %v510, %v502
    %v615 = vpack.c.b16 %v511, %v503
    %v616 = vpack.c.b16 %v512, %v504
    %v617 = vpack.c.b16 %v513, %v505
    %v618 = vpack.c.b16 %v514, %v506
    %v619 = vpack.c.b16 %v523, %v515
    %v620 = vpack.c.b16 %v524, %v516
    %v621 = vpack.c.b16 %v525, %v517
    %v622 = vpack.c.b16 %v526, %v518
    %v623 = vpack.c.b16 %v527, %v519
    %v624 = vpack.c.b16 %v528, %v520
    %v625 = vpack.c.b16 %v529, %v521
    %v626 = vpack.c.b16 %v530, %v522
    %v627 = vpack.c.b16 %v539, %v531
    %v628 = vpack.c.b16 %v540, %v532
    %v629 = vpack.c.b16 %v541, %v533
    %v630 = vpack.c.b16 %v542, %v534
    %v631 = vpack.c.b16 %v543, %v535
    %v632 = vpack.c.b16 %v544, %v536
    %v633 = vpack.c.b16 %v545, %v537
    %v634 = vpack.c.b16 %v546, %v538
    %v635 = vpack.c.b16 %v555, %v547
    %v636 = vpack.c.b16 %v556, %v548
    %v637 = vpack.c.b16 %v557, %v549
    %v638 = vpack.c.b16 %v558, %v550
    %v639 = vpack.c.b16 %v559, %v551
    %v640 = vpack.c.b16 %v560, %v552
    %v641 = vpack.c.b16 %v561, %v553
    %v642 = vpack.c.b16 %v562, %v554
    %v643 = vpack.c.b16 %v571, %v563
    %v644 = vpack.c.b16 %v572, %v564
    %v645 = vpack.c.b16 %v573, %v565
    %v646 = vpack.c.b16 %v574, %v566
    %v647 = vpack.c.b16 %v575, %v567
    %v648 = vpack.c.b16 %v576, %v568
    %v649 = vpack.c.b16 %v577, %v569
    %v650 = vpack.c.b16 %v578, %v570
    %v651 = vpack.c.b16 %v587, %v579
    %v652 = vpack.c.b16 %v588, %v580
    %v653 = vpack.c.b16 %v589, %v581
    %v654 = vpack.c.b16 %v590, %v582
    %v655 = vpack.c.b16 %v591, %v583
    %v656 = vpack.c.b16 %v592, %v584
    %v657 = vpack.c.b16 %v593, %v585
    %v658 = vpack.c.b16 %v594, %v586
    %723 = vmatpush.bf16.msra.mxu0 %v651
    %724 = vmatpush.bf16.msra.mxu0 %v643
    %725 = vmatpush.bf16.msra.mxu0 %v635
    %726 = vmatpush.bf16.msra.mxu0 %v627
    %727 = vmatpush.bf16.msra.mxu0 %v619
    %728 = vmatpush.bf16.msra.mxu0 %v611
    %729 = vmatpush.bf16.msra.mxu0 %v603
    %730 = vmatpush.bf16.msra.mxu0 %v595
    %731 = vmatmul.bf16.gmra.mxu0 %v320
    %v732 = vpop.f32.mrf.mxu0
    %v733 = vadd.f32 %v387, %v732
    %v734 = vpop.f32.mrf.mxu0
    %v735 = vadd.f32 %v387, %v734
    %736 = vdwg.mxu0
    %737 = vmatpush.bf16.msra.mxu0 %v652
    %738 = vmatpush.bf16.msra.mxu0 %v644
    %739 = vmatpush.bf16.msra.mxu0 %v636
    %740 = vmatpush.bf16.msra.mxu0 %v628
    %741 = vmatpush.bf16.msra.mxu0 %v620
    %742 = vmatpush.bf16.msra.mxu0 %v612
    %743 = vmatpush.bf16.msra.mxu0 %v604
    %744 = vmatpush.bf16.msra.mxu0 %v596
    %745 = vmatmul.bf16.gmra.mxu0 %v320
    %v746 = vpop.f32.mrf.mxu0
    %v747 = vadd.f32 %v388, %v746
    %v748 = vpop.f32.mrf.mxu0
    %v749 = vadd.f32 %v388, %v748
    %750 = vdwg.mxu0
    %751 = vmatpush.bf16.msra.mxu0 %v653
    %752 = vmatpush.bf16.msra.mxu0 %v645
    %753 = vmatpush.bf16.msra.mxu0 %v637
    %754 = vmatpush.bf16.msra.mxu0 %v629
    %755 = vmatpush.bf16.msra.mxu0 %v621
    %756 = vmatpush.bf16.msra.mxu0 %v613
    %757 = vmatpush.bf16.msra.mxu0 %v605
    %758 = vmatpush.bf16.msra.mxu0 %v597
    %759 = vmatmul.bf16.gmra.mxu0 %v320
    %v760 = vpop.f32.mrf.mxu0
    %v761 = vadd.f32 %v389, %v760
    %v762 = vpop.f32.mrf.mxu0
    %v763 = vadd.f32 %v389, %v762
    %764 = vdwg.mxu0
    %765 = vmatpush.bf16.msra.mxu0 %v654
    %766 = vmatpush.bf16.msra.mxu0 %v646
    %767 = vmatpush.bf16.msra.mxu0 %v638
    %768 = vmatpush.bf16.msra.mxu0 %v630
    %769 = vmatpush.bf16.msra.mxu0 %v622
    %770 = vmatpush.bf16.msra.mxu0 %v614
    %771 = vmatpush.bf16.msra.mxu0 %v606
    %772 = vmatpush.bf16.msra.mxu0 %v598
    %773 = vmatmul.bf16.gmra.mxu0 %v320
    %v774 = vpop.f32.mrf.mxu0
    %v775 = vadd.f32 %v390, %v774
    %v776 = vpop.f32.mrf.mxu0
    %v777 = vadd.f32 %v390, %v776
    %778 = vdwg.mxu0
    %779 = vmatpush.bf16.msra.mxu0 %v655
    %780 = vmatpush.bf16.msra.mxu0 %v647
    %781 = vmatpush.bf16.msra.mxu0 %v639
    %782 = vmatpush.bf16.msra.mxu0 %v631
    %783 = vmatpush.bf16.msra.mxu0 %v623
    %784 = vmatpush.bf16.msra.mxu0 %v615
    %785 = vmatpush.bf16.msra.mxu0 %v607
    %786 = vmatpush.bf16.msra.mxu0 %v599
    %787 = vmatmul.bf16.gmra.mxu0 %v320
    %v788 = vpop.f32.mrf.mxu0
    %v789 = vadd.f32 %v391, %v788
    %v790 = vpop.f32.mrf.mxu0
    %v791 = vadd.f32 %v391, %v790
    %792 = vdwg.mxu0
    %793 = vmatpush.bf16.msra.mxu0 %v656
    %794 = vmatpush.bf16.msra.mxu0 %v648
    %795 = vmatpush.bf16.msra.mxu0 %v640
    %796 = vmatpush.bf16.msra.mxu0 %v632
    %797 = vmatpush.bf16.msra.mxu0 %v624
    %798 = vmatpush.bf16.msra.mxu0 %v616
    %799 = vmatpush.bf16.msra.mxu0 %v608
    %800 = vmatpush.bf16.msra.mxu0 %v600
    %801 = vmatmul.bf16.gmra.mxu0 %v320
    %v802 = vpop.f32.mrf.mxu0
    %v803 = vadd.f32 %v392, %v802
    %v804 = vpop.f32.mrf.mxu0
    %v805 = vadd.f32 %v392, %v804
    %806 = vdwg.mxu0
    %807 = vmatpush.bf16.msra.mxu0 %v657
    %808 = vmatpush.bf16.msra.mxu0 %v649
    %809 = vmatpush.bf16.msra.mxu0 %v641
    %810 = vmatpush.bf16.msra.mxu0 %v633
    %811 = vmatpush.bf16.msra.mxu0 %v625
    %812 = vmatpush.bf16.msra.mxu0 %v617
    %813 = vmatpush.bf16.msra.mxu0 %v609
    %814 = vmatpush.bf16.msra.mxu0 %v601
    %815 = vmatmul.bf16.gmra.mxu0 %v320
    %v816 = vpop.f32.mrf.mxu0
    %v817 = vadd.f32 %v393, %v816
    %v818 = vpop.f32.mrf.mxu0
    %v819 = vadd.f32 %v393, %v818
    %820 = vdwg.mxu0
    %821 = vmatpush.bf16.msra.mxu0 %v658
    %822 = vmatpush.bf16.msra.mxu0 %v650
    %823 = vmatpush.bf16.msra.mxu0 %v642
    %824 = vmatpush.bf16.msra.mxu0 %v634
    %825 = vmatpush.bf16.msra.mxu0 %v626
    %826 = vmatpush.bf16.msra.mxu0 %v618
    %827 = vmatpush.bf16.msra.mxu0 %v610
    %828 = vmatpush.bf16.msra.mxu0 %v602
    %829 = vmatmul.bf16.gmra.mxu0 %v320
    %v830 = vpop.f32.mrf.mxu0
    %v831 = vadd.f32 %v394, %v830
    %v832 = vpop.f32.mrf.mxu0
    %v833 = vadd.f32 %v394, %v832
    %834 = vdwg.mxu0
    %v835 = vpack.c.bf16 %v747, %v733
    %v836 = vpack.c.bf16 %v775, %v761
    %v837 = vpack.c.bf16 %v803, %v789
    %v838 = vpack.c.bf16 %v831, %v817
    %v839 = vpack.c.bf16 %v749, %v735
    %v840 = vpack.c.bf16 %v777, %v763
    %v841 = vpack.c.bf16 %v805, %v791
    %v842 = vpack.c.bf16 %v833, %v819
    %v843 = vld [vmem:[#allocation5] sm:$0xf]
    %v844 = vld [vmem:[#allocation5 + $0x4] sm:$0xf]
    %v845 = vld [vmem:[#allocation7] sm:$0xf]
    %v846 = vld [vmem:[#allocation7 + $0x4] sm:$0xf]
    %v847 = vld [vmem:[%s18] sm:$0xff]
    %v848 = vld [vmem:[%s18 + $0x8] sm:$0xff]
    %v849 = vld [vmem:[%s18 + $0x10] sm:$0xff]
    %v850 = vld [vmem:[%s18 + $0x18] sm:$0xff]
    %v851 = vld [vmem:[%s18 + $0x20] sm:$0xff]
    %v852 = vld [vmem:[%s18 + $0x28] sm:$0xff]
    %v853 = vld [vmem:[%s18 + $0x30] sm:$0xff]
    %v854 = vld [vmem:[%s18 + $0x38] sm:$0xff]
    %v855 = vld [vmem:[%s18 + $0x40] sm:$0xff]
    %v856 = vld [vmem:[%s18 + $0x48] sm:$0xff]
    %v857 = vld [vmem:[%s18 + $0x50] sm:$0xff]
    %v858 = vld [vmem:[%s18 + $0x58] sm:$0xff]
    %v859 = vld [vmem:[%s18 + $0x60] sm:$0xff]
    %v860 = vld [vmem:[%s18 + $0x68] sm:$0xff]
    %v861 = vld [vmem:[%s18 + $0x70] sm:$0xff]
    %v862 = vld [vmem:[%s18 + $0x78] sm:$0xff]
    %v863 = vld [vmem:[%s19] sm:$0xf]
    %v864 = vld [vmem:[%s19 + $0x4] sm:$0xf]
    %v865 = vld [vmem:[%s19 + $0x8] sm:$0xf]
    %v866 = vld [vmem:[%s19 + $0xc] sm:$0xf]
    %v867 = vld [vmem:[%s19 + $0x10] sm:$0xf]
    %v868 = vld [vmem:[%s19 + $0x14] sm:$0xf]
    %v869 = vld [vmem:[%s19 + $0x18] sm:$0xf]
    %v870 = vld [vmem:[%s19 + $0x1c] sm:$0xf]
    %v871 = vld [vmem:[%s19 + $0x20] sm:$0xf]
    %v872 = vld [vmem:[%s19 + $0x24] sm:$0xf]
    %v873 = vld [vmem:[%s19 + $0x28] sm:$0xf]
    %v874 = vld [vmem:[%s19 + $0x2c] sm:$0xf]
    %v875 = vld [vmem:[%s19 + $0x30] sm:$0xf]
    %v876 = vld [vmem:[%s19 + $0x34] sm:$0xf]
    %v877 = vld [vmem:[%s19 + $0x38] sm:$0xf]
    %v878 = vld [vmem:[%s19 + $0x3c] sm:$0xf]
    %v879 = vld [vmem:[%s19 + $0x40] sm:$0xf]
    %v880 = vld [vmem:[%s19 + $0x44] sm:$0xf]
    %v881 = vld [vmem:[%s19 + $0x48] sm:$0xf]
    %v882 = vld [vmem:[%s19 + $0x4c] sm:$0xf]
    %v883 = vld [vmem:[%s19 + $0x50] sm:$0xf]
    %v884 = vld [vmem:[%s19 + $0x54] sm:$0xf]
    %v885 = vld [vmem:[%s19 + $0x58] sm:$0xf]
    %v886 = vld [vmem:[%s19 + $0x5c] sm:$0xf]
    %v887 = vld [vmem:[%s19 + $0x60] sm:$0xf]
    %v888 = vld [vmem:[%s19 + $0x64] sm:$0xf]
    %v889 = vld [vmem:[%s19 + $0x68] sm:$0xf]
    %v890 = vld [vmem:[%s19 + $0x6c] sm:$0xf]
    %v891 = vld [vmem:[%s19 + $0x70] sm:$0xf]
    %v892 = vld [vmem:[%s19 + $0x74] sm:$0xf]
    %v893 = vld [vmem:[%s19 + $0x78] sm:$0xf]
    %v894 = vld [vmem:[%s19 + $0x7c] sm:$0xf]
    %v895 = vld [vmem:[%s19 + $0x80] sm:$0xf]
    %v896 = vld [vmem:[%s19 + $0x84] sm:$0xf]
    %v897 = vld [vmem:[%s19 + $0x88] sm:$0xf]
    %v898 = vld [vmem:[%s19 + $0x8c] sm:$0xf]
    %v899 = vld [vmem:[%s19 + $0x90] sm:$0xf]
    %v900 = vld [vmem:[%s19 + $0x94] sm:$0xf]
    %v901 = vld [vmem:[%s19 + $0x98] sm:$0xf]
    %v902 = vld [vmem:[%s19 + $0x9c] sm:$0xf]
    %v903 = vld [vmem:[%s19 + $0xa0] sm:$0xf]
    %v904 = vld [vmem:[%s19 + $0xa4] sm:$0xf]
    %v905 = vld [vmem:[%s19 + $0xa8] sm:$0xf]
    %v906 = vld [vmem:[%s19 + $0xac] sm:$0xf]
    %v907 = vld [vmem:[%s19 + $0xb0] sm:$0xf]
    %v908 = vld [vmem:[%s19 + $0xb4] sm:$0xf]
    %v909 = vld [vmem:[%s19 + $0xb8] sm:$0xf]
    %v910 = vld [vmem:[%s19 + $0xbc] sm:$0xf]
    %v911 = vld [vmem:[%s19 + $0xc0] sm:$0xf]
    %v912 = vld [vmem:[%s19 + $0xc4] sm:$0xf]
    %v913 = vld [vmem:[%s19 + $0xc8] sm:$0xf]
    %v914 = vld [vmem:[%s19 + $0xcc] sm:$0xf]
    %v915 = vld [vmem:[%s19 + $0xd0] sm:$0xf]
    %v916 = vld [vmem:[%s19 + $0xd4] sm:$0xf]
    %v917 = vld [vmem:[%s19 + $0xd8] sm:$0xf]
    %v918 = vld [vmem:[%s19 + $0xdc] sm:$0xf]
    %v919 = vld [vmem:[%s19 + $0xe0] sm:$0xf]
    %v920 = vld [vmem:[%s19 + $0xe4] sm:$0xf]
    %v921 = vld [vmem:[%s19 + $0xe8] sm:$0xf]
    %v922 = vld [vmem:[%s19 + $0xec] sm:$0xf]
    %v923 = vld [vmem:[%s19 + $0xf0] sm:$0xf]
    %v924 = vld [vmem:[%s19 + $0xf4] sm:$0xf]
    %v925 = vld [vmem:[%s19 + $0xf8] sm:$0xf]
    %v926 = vld [vmem:[%s19 + $0xfc] sm:$0xf]
    %v927 = vld [vmem:[%s19 + $0x100] sm:$0xf]
    %v928 = vld [vmem:[%s19 + $0x104] sm:$0xf]
    %v929 = vld [vmem:[%s19 + $0x108] sm:$0xf]
    %v930 = vld [vmem:[%s19 + $0x10c] sm:$0xf]
    %v931 = vld [vmem:[%s19 + $0x110] sm:$0xf]
    %v932 = vld [vmem:[%s19 + $0x114] sm:$0xf]
    %v933 = vld [vmem:[%s19 + $0x118] sm:$0xf]
    %v934 = vld [vmem:[%s19 + $0x11c] sm:$0xf]
    %v935 = vld [vmem:[%s19 + $0x120] sm:$0xf]
    %v936 = vld [vmem:[%s19 + $0x124] sm:$0xf]
    %v937 = vld [vmem:[%s19 + $0x128] sm:$0xf]
    %v938 = vld [vmem:[%s19 + $0x12c] sm:$0xf]
    %v939 = vld [vmem:[%s19 + $0x130] sm:$0xf]
    %v940 = vld [vmem:[%s19 + $0x134] sm:$0xf]
    %v941 = vld [vmem:[%s19 + $0x138] sm:$0xf]
    %v942 = vld [vmem:[%s19 + $0x13c] sm:$0xf]
    %v943 = vld [vmem:[%s19 + $0x140] sm:$0xf]
    %v944 = vld [vmem:[%s19 + $0x144] sm:$0xf]
    %v945 = vld [vmem:[%s19 + $0x148] sm:$0xf]
    %v946 = vld [vmem:[%s19 + $0x14c] sm:$0xf]
    %v947 = vld [vmem:[%s19 + $0x150] sm:$0xf]
    %v948 = vld [vmem:[%s19 + $0x154] sm:$0xf]
    %v949 = vld [vmem:[%s19 + $0x158] sm:$0xf]
    %v950 = vld [vmem:[%s19 + $0x15c] sm:$0xf]
    %v951 = vld [vmem:[%s19 + $0x160] sm:$0xf]
    %v952 = vld [vmem:[%s19 + $0x164] sm:$0xf]
    %v953 = vld [vmem:[%s19 + $0x168] sm:$0xf]
    %v954 = vld [vmem:[%s19 + $0x16c] sm:$0xf]
    %v955 = vld [vmem:[%s19 + $0x170] sm:$0xf]
    %v956 = vld [vmem:[%s19 + $0x174] sm:$0xf]
    %v957 = vld [vmem:[%s19 + $0x178] sm:$0xf]
    %v958 = vld [vmem:[%s19 + $0x17c] sm:$0xf]
    %v959 = vld [vmem:[%s19 + $0x180] sm:$0xf]
    %v960 = vld [vmem:[%s19 + $0x184] sm:$0xf]
    %v961 = vld [vmem:[%s19 + $0x188] sm:$0xf]
    %v962 = vld [vmem:[%s19 + $0x18c] sm:$0xf]
    %v963 = vld [vmem:[%s19 + $0x190] sm:$0xf]
    %v964 = vld [vmem:[%s19 + $0x194] sm:$0xf]
    %v965 = vld [vmem:[%s19 + $0x198] sm:$0xf]
    %v966 = vld [vmem:[%s19 + $0x19c] sm:$0xf]
    %v967 = vld [vmem:[%s19 + $0x1a0] sm:$0xf]
    %v968 = vld [vmem:[%s19 + $0x1a4] sm:$0xf]
    %v969 = vld [vmem:[%s19 + $0x1a8] sm:$0xf]
    %v970 = vld [vmem:[%s19 + $0x1ac] sm:$0xf]
    %v971 = vld [vmem:[%s19 + $0x1b0] sm:$0xf]
    %v972 = vld [vmem:[%s19 + $0x1b4] sm:$0xf]
    %v973 = vld [vmem:[%s19 + $0x1b8] sm:$0xf]
    %v974 = vld [vmem:[%s19 + $0x1bc] sm:$0xf]
    %v975 = vld [vmem:[%s19 + $0x1c0] sm:$0xf]
    %v976 = vld [vmem:[%s19 + $0x1c4] sm:$0xf]
    %v977 = vld [vmem:[%s19 + $0x1c8] sm:$0xf]
    %v978 = vld [vmem:[%s19 + $0x1cc] sm:$0xf]
    %v979 = vld [vmem:[%s19 + $0x1d0] sm:$0xf]
    %v980 = vld [vmem:[%s19 + $0x1d4] sm:$0xf]
    %v981 = vld [vmem:[%s19 + $0x1d8] sm:$0xf]
    %v982 = vld [vmem:[%s19 + $0x1dc] sm:$0xf]
    %v983 = vld [vmem:[%s19 + $0x1e0] sm:$0xf]
    %v984 = vld [vmem:[%s19 + $0x1e4] sm:$0xf]
    %v985 = vld [vmem:[%s19 + $0x1e8] sm:$0xf]
    %v986 = vld [vmem:[%s19 + $0x1ec] sm:$0xf]
    %v987 = vld [vmem:[%s19 + $0x1f0] sm:$0xf]
    %v988 = vld [vmem:[%s19 + $0x1f4] sm:$0xf]
    %v989 = vld [vmem:[%s19 + $0x1f8] sm:$0xf]
    %v990 = vld [vmem:[%s19 + $0x1fc] sm:$0xf]
    %v991 = vld [vmem:[%s12] sm:$0xf]
    %v992 = vld [vmem:[%s12 + $0x4] sm:$0xf]
    %v993 = vld [vmem:[%s12 + $0x8] sm:$0xf]
    %v994 = vld [vmem:[%s12 + $0xc] sm:$0xf]
    %v995 = vld [vmem:[#allocation19] sm:$0xf]
    %v996 = vld [vmem:[#allocation19 + $0x4] sm:$0xf]
    %v997 = vld [vmem:[#allocation19 + $0x8] sm:$0xf]
    %v998 = vld [vmem:[#allocation19 + $0xc] sm:$0xf]
    %v999 = vld [vmem:[#allocation16] sm:$0x1]
    %v1001 = vperm.slane %v999, 0
    %v1003 = vld [vmem:[#allocation17] sm:$0x1]
    %v1005 = vperm.slane %v1003, 0
    %v1007 = vld [vmem:[%s15] sm:$0x1]
    %v1009 = vperm.slane %v1007, 0
    %v1011 = vpack.c.bf16 %v283, %v282
    %v1014 = vunpack.c.l.b16 %v843
    %v1015 = vunpack.c.l.b16 %v844
    %v1016 = vpack.c.b16 %v1015, %v1014
    %v1018 = vsel %vm264, %v1016, 0
    %1020 = vmatpush.bf16.msra.mxu0 0
    %1021 = vmatpush.bf16.msra.mxu0 0
    %1022 = vmatpush.bf16.msra.mxu0 0
    %1023 = vmatpush.bf16.msra.mxu0 0
    %1024 = vmatpush.bf16.msra.mxu0 0
    %1025 = vmatpush.bf16.msra.mxu0 0
    %1026 = vmatpush.bf16.msra.mxu0 0
    %1027 = vmatpush.bf16.msra.mxu0 %v1011
    %1028 = vmatmul.bf16.gmra.mxu0 %v1018
    %v1029 = vpop.f32.mrf.mxu0
    %v1030 = vadd.f32 0.0, %v1029
    %v1031 = vpop.f32.mrf.mxu0
    %v1032 = vadd.f32 0.0, %v1031
    %1033 = vdwg.mxu0
    %v1034 = vpack.c.bf16 %v1032, %v1030
    %v1051 = vunpack.c.l.b16 %v847
    %v1052 = vunpack.c.h.b16 %v847
    %v1053 = vunpack.c.l.b16 %v848
    %v1054 = vunpack.c.h.b16 %v848
    %v1055 = vunpack.c.l.b16 %v849
    %v1056 = vunpack.c.h.b16 %v849
    %v1057 = vunpack.c.l.b16 %v850
    %v1058 = vunpack.c.h.b16 %v850
    %v1059 = vunpack.c.l.b16 %v851
    %v1060 = vunpack.c.h.b16 %v851
    %v1061 = vunpack.c.l.b16 %v852
    %v1062 = vunpack.c.h.b16 %v852
    %v1063 = vunpack.c.l.b16 %v853
    %v1064 = vunpack.c.h.b16 %v853
    %v1065 = vunpack.c.l.b16 %v854
    %v1066 = vunpack.c.h.b16 %v854
    %v1067 = vunpack.c.l.b16 %v855
    %v1068 = vunpack.c.h.b16 %v855
    %v1069 = vunpack.c.l.b16 %v856
    %v1070 = vunpack.c.h.b16 %v856
    %v1071 = vunpack.c.l.b16 %v857
    %v1072 = vunpack.c.h.b16 %v857
    %v1073 = vunpack.c.l.b16 %v858
    %v1074 = vunpack.c.h.b16 %v858
    %v1075 = vunpack.c.l.b16 %v859
    %v1076 = vunpack.c.h.b16 %v859
    %v1077 = vunpack.c.l.b16 %v860
    %v1078 = vunpack.c.h.b16 %v860
    %v1079 = vunpack.c.l.b16 %v861
    %v1080 = vunpack.c.h.b16 %v861
    %v1081 = vunpack.c.l.b16 %v862
    %v1082 = vunpack.c.h.b16 %v862
    %v1083 = vpack.c.b16 %v1059, %v1051
    %v1084 = vpack.c.b16 %v1060, %v1052
    %v1085 = vpack.c.b16 %v1061, %v1053
    %v1086 = vpack.c.b16 %v1062, %v1054
    %v1087 = vpack.c.b16 %v1063, %v1055
    %v1088 = vpack.c.b16 %v1064, %v1056
    %v1089 = vpack.c.b16 %v1065, %v1057
    %v1090 = vpack.c.b16 %v1066, %v1058
    %v1091 = vpack.c.b16 %v1075, %v1067
    %v1092 = vpack.c.b16 %v1076, %v1068
    %v1093 = vpack.c.b16 %v1077, %v1069
    %v1094 = vpack.c.b16 %v1078, %v1070
    %v1095 = vpack.c.b16 %v1079, %v1071
    %v1096 = vpack.c.b16 %v1080, %v1072
    %v1097 = vpack.c.b16 %v1081, %v1073
    %v1098 = vpack.c.b16 %v1082, %v1074
    %vm1115 = vcmask 261120
    %v1117 = vsel %vm1115, %v1034, 0
    %1119 = vmatpush.bf16.msra.mxu0 0
    %1120 = vmatpush.bf16.msra.mxu0 0
    %1121 = vmatpush.bf16.msra.mxu0 0
    %1122 = vmatpush.bf16.msra.mxu0 0
    %1123 = vmatpush.bf16.msra.mxu0 0
    %1124 = vmatpush.bf16.msra.mxu0 0
    %1125 = vmatpush.bf16.msra.mxu0 %v1091
    %1126 = vmatpush.bf16.msra.mxu0 %v1083
    %1127 = vmatmul.bf16.gmra.mxu0 %v1117
    %v1128 = vpop.f32.mrf.mxu0
    %v1129 = vadd.f32 0.0, %v1128
    %v1130 = vpop.f32.mrf.mxu0
    %v1131 = vadd.f32 0.0, %v1130
    %1132 = vdwg.mxu0
    %1133 = vmatpush.bf16.msra.mxu0 0
    %1134 = vmatpush.bf16.msra.mxu0 0
    %1135 = vmatpush.bf16.msra.mxu0 0
    %1136 = vmatpush.bf16.msra.mxu0 0
    %1137 = vmatpush.bf16.msra.mxu0 0
    %1138 = vmatpush.bf16.msra.mxu0 0
    %1139 = vmatpush.bf16.msra.mxu0 %v1092
    %1140 = vmatpush.bf16.msra.mxu0 %v1084
    %1141 = vmatmul.bf16.gmra.mxu0 %v1117
    %v1142 = vpop.f32.mrf.mxu0
    %v1143 = vadd.f32 0.0, %v1142
    %v1144 = vpop.f32.mrf.mxu0
    %v1145 = vadd.f32 0.0, %v1144
    %1146 = vdwg.mxu0
    %1147 = vmatpush.bf16.msra.mxu0 0
    %1148 = vmatpush.bf16.msra.mxu0 0
    %1149 = vmatpush.bf16.msra.mxu0 0
    %1150 = vmatpush.bf16.msra.mxu0 0
    %1151 = vmatpush.bf16.msra.mxu0 0
    %1152 = vmatpush.bf16.msra.mxu0 0
    %1153 = vmatpush.bf16.msra.mxu0 %v1093
    %1154 = vmatpush.bf16.msra.mxu0 %v1085
    %1155 = vmatmul.bf16.gmra.mxu0 %v1117
    %v1156 = vpop.f32.mrf.mxu0
    %v1157 = vadd.f32 0.0, %v1156
    %v1158 = vpop.f32.mrf.mxu0
    %v1159 = vadd.f32 0.0, %v1158
    %1160 = vdwg.mxu0
    %1161 = vmatpush.bf16.msra.mxu0 0
    %1162 = vmatpush.bf16.msra.mxu0 0
    %1163 = vmatpush.bf16.msra.mxu0 0
    %1164 = vmatpush.bf16.msra.mxu0 0
    %1165 = vmatpush.bf16.msra.mxu0 0
    %1166 = vmatpush.bf16.msra.mxu0 0
    %1167 = vmatpush.bf16.msra.mxu0 %v1094
    %1168 = vmatpush.bf16.msra.mxu0 %v1086
    %1169 = vmatmul.bf16.gmra.mxu0 %v1117
    %v1170 = vpop.f32.mrf.mxu0
    %v1171 = vadd.f32 0.0, %v1170
    %v1172 = vpop.f32.mrf.mxu0
    %v1173 = vadd.f32 0.0, %v1172
    %1174 = vdwg.mxu0
    %1175 = vmatpush.bf16.msra.mxu0 0
    %1176 = vmatpush.bf16.msra.mxu0 0
    %1177 = vmatpush.bf16.msra.mxu0 0
    %1178 = vmatpush.bf16.msra.mxu0 0
    %1179 = vmatpush.bf16.msra.mxu0 0
    %1180 = vmatpush.bf16.msra.mxu0 0
    %1181 = vmatpush.bf16.msra.mxu0 %v1095
    %1182 = vmatpush.bf16.msra.mxu0 %v1087
    %1183 = vmatmul.bf16.gmra.mxu0 %v1117
    %v1184 = vpop.f32.mrf.mxu0
    %v1185 = vadd.f32 0.0, %v1184
    %v1186 = vpop.f32.mrf.mxu0
    %v1187 = vadd.f32 0.0, %v1186
    %1188 = vdwg.mxu0
    %1189 = vmatpush.bf16.msra.mxu0 0
    %1190 = vmatpush.bf16.msra.mxu0 0
    %1191 = vmatpush.bf16.msra.mxu0 0
    %1192 = vmatpush.bf16.msra.mxu0 0
    %1193 = vmatpush.bf16.msra.mxu0 0
    %1194 = vmatpush.bf16.msra.mxu0 0
    %1195 = vmatpush.bf16.msra.mxu0 %v1096
    %1196 = vmatpush.bf16.msra.mxu0 %v1088
    %1197 = vmatmul.bf16.gmra.mxu0 %v1117
    %v1198 = vpop.f32.mrf.mxu0
    %v1199 = vadd.f32 0.0, %v1198
    %v1200 = vpop.f32.mrf.mxu0
    %v1201 = vadd.f32 0.0, %v1200
    %1202 = vdwg.mxu0
    %1203 = vmatpush.bf16.msra.mxu0 0
    %1204 = vmatpush.bf16.msra.mxu0 0
    %1205 = vmatpush.bf16.msra.mxu0 0
    %1206 = vmatpush.bf16.msra.mxu0 0
    %1207 = vmatpush.bf16.msra.mxu0 0
    %1208 = vmatpush.bf16.msra.mxu0 0
    %1209 = vmatpush.bf16.msra.mxu0 %v1097
    %1210 = vmatpush.bf16.msra.mxu0 %v1089
    %1211 = vmatmul.bf16.gmra.mxu0 %v1117
    %v1212 = vpop.f32.mrf.mxu0
    %v1213 = vadd.f32 0.0, %v1212
    %v1214 = vpop.f32.mrf.mxu0
    %v1215 = vadd.f32 0.0, %v1214
    %1216 = vdwg.mxu0
    %1217 = vmatpush.bf16.msra.mxu0 0
    %1218 = vmatpush.bf16.msra.mxu0 0
    %1219 = vmatpush.bf16.msra.mxu0 0
    %1220 = vmatpush.bf16.msra.mxu0 0
    %1221 = vmatpush.bf16.msra.mxu0 0
    %1222 = vmatpush.bf16.msra.mxu0 0
    %1223 = vmatpush.bf16.msra.mxu0 %v1098
    %1224 = vmatpush.bf16.msra.mxu0 %v1090
    %1225 = vmatmul.bf16.gmra.mxu0 %v1117
    %v1226 = vpop.f32.mrf.mxu0
    %v1227 = vadd.f32 0.0, %v1226
    %v1228 = vpop.f32.mrf.mxu0
    %v1229 = vadd.f32 0.0, %v1228
    %1230 = vdwg.mxu0
    %v1231 = vunpack.c.l.bf16 %v835
    %v1232 = vunpack.c.h.bf16 %v835
    %v1233 = vunpack.c.l.bf16 %v836
    %v1234 = vunpack.c.h.bf16 %v836
    %v1235 = vunpack.c.l.bf16 %v837
    %v1236 = vunpack.c.h.bf16 %v837
    %v1237 = vunpack.c.l.bf16 %v838
    %v1238 = vunpack.c.h.bf16 %v838
    %v1239 = vunpack.c.l.bf16 %v839
    %v1240 = vunpack.c.h.bf16 %v839
    %v1241 = vunpack.c.l.bf16 %v840
    %v1242 = vunpack.c.h.bf16 %v840
    %v1243 = vunpack.c.l.bf16 %v841
    %v1244 = vunpack.c.h.bf16 %v841
    %v1245 = vunpack.c.l.bf16 %v842
    %v1246 = vunpack.c.h.bf16 %v842
    %v1247 = vmul.f32 %v1129, %v1231
    %v1248 = vmul.f32 %v1143, %v1232
    %v1249 = vmul.f32 %v1157, %v1233
    %v1250 = vmul.f32 %v1171, %v1234
    %v1251 = vmul.f32 %v1185, %v1235
    %v1252 = vmul.f32 %v1199, %v1236
    %v1253 = vmul.f32 %v1213, %v1237
    %v1254 = vmul.f32 %v1227, %v1238
    %v1255 = vmul.f32 %v1131, %v1239
    %v1256 = vmul.f32 %v1145, %v1240
    %v1257 = vmul.f32 %v1159, %v1241
    %v1258 = vmul.f32 %v1173, %v1242
    %v1259 = vmul.f32 %v1187, %v1243
    %v1260 = vmul.f32 %v1201, %v1244
    %v1261 = vmul.f32 %v1215, %v1245
    %v1262 = vmul.f32 %v1229, %v1246
    %v1263 = vpack.c.bf16 %v1255, %v1247
    %v1264 = vpack.c.bf16 %v1256, %v1248
    %v1265 = vpack.c.bf16 %v1257, %v1249
    %v1266 = vpack.c.bf16 %v1258, %v1250
    %v1267 = vpack.c.bf16 %v1259, %v1251
    %v1268 = vpack.c.bf16 %v1260, %v1252
    %v1269 = vpack.c.bf16 %v1261, %v1253
    %v1270 = vpack.c.bf16 %v1262, %v1254
    %v1399 = vunpack.c.l.b16 %v863
    %v1400 = vunpack.c.l.b16 %v864
    %v1401 = vunpack.c.l.b16 %v865
    %v1402 = vunpack.c.l.b16 %v866
    %v1403 = vunpack.c.l.b16 %v867
    %v1404 = vunpack.c.l.b16 %v868
    %v1405 = vunpack.c.l.b16 %v869
    %v1406 = vunpack.c.l.b16 %v870
    %v1407 = vunpack.c.l.b16 %v871
    %v1408 = vunpack.c.l.b16 %v872
    %v1409 = vunpack.c.l.b16 %v873
    %v1410 = vunpack.c.l.b16 %v874
    %v1411 = vunpack.c.l.b16 %v875
    %v1412 = vunpack.c.l.b16 %v876
    %v1413 = vunpack.c.l.b16 %v877
    %v1414 = vunpack.c.l.b16 %v878
    %v1415 = vunpack.c.l.b16 %v879
    %v1416 = vunpack.c.l.b16 %v880
    %v1417 = vunpack.c.l.b16 %v881
    %v1418 = vunpack.c.l.b16 %v882
    %v1419 = vunpack.c.l.b16 %v883
    %v1420 = vunpack.c.l.b16 %v884
    %v1421 = vunpack.c.l.b16 %v885
    %v1422 = vunpack.c.l.b16 %v886
    %v1423 = vunpack.c.l.b16 %v887
    %v1424 = vunpack.c.l.b16 %v888
    %v1425 = vunpack.c.l.b16 %v889
    %v1426 = vunpack.c.l.b16 %v890
    %v1427 = vunpack.c.l.b16 %v891
    %v1428 = vunpack.c.l.b16 %v892
    %v1429 = vunpack.c.l.b16 %v893
    %v1430 = vunpack.c.l.b16 %v894
    %v1431 = vunpack.c.l.b16 %v895
    %v1432 = vunpack.c.l.b16 %v896
    %v1433 = vunpack.c.l.b16 %v897
    %v1434 = vunpack.c.l.b16 %v898
    %v1435 = vunpack.c.l.b16 %v899
    %v1436 = vunpack.c.l.b16 %v900
    %v1437 = vunpack.c.l.b16 %v901
    %v1438 = vunpack.c.l.b16 %v902
    %v1439 = vunpack.c.l.b16 %v903
    %v1440 = vunpack.c.l.b16 %v904
    %v1441 = vunpack.c.l.b16 %v905
    %v1442 = vunpack.c.l.b16 %v906
    %v1443 = vunpack.c.l.b16 %v907
    %v1444 = vunpack.c.l.b16 %v908
    %v1445 = vunpack.c.l.b16 %v909
    %v1446 = vunpack.c.l.b16 %v910
    %v1447 = vunpack.c.l.b16 %v911
    %v1448 = vunpack.c.l.b16 %v912
    %v1449 = vunpack.c.l.b16 %v913
    %v1450 = vunpack.c.l.b16 %v914
    %v1451 = vunpack.c.l.b16 %v915
    %v1452 = vunpack.c.l.b16 %v916
    %v1453 = vunpack.c.l.b16 %v917
    %v1454 = vunpack.c.l.b16 %v918
    %v1455 = vunpack.c.l.b16 %v919
    %v1456 = vunpack.c.l.b16 %v920
    %v1457 = vunpack.c.l.b16 %v921
    %v1458 = vunpack.c.l.b16 %v922
    %v1459 = vunpack.c.l.b16 %v923
    %v1460 = vunpack.c.l.b16 %v924
    %v1461 = vunpack.c.l.b16 %v925
    %v1462 = vunpack.c.l.b16 %v926
    %v1463 = vunpack.c.l.b16 %v927
    %v1464 = vunpack.c.l.b16 %v928
    %v1465 = vunpack.c.l.b16 %v929
    %v1466 = vunpack.c.l.b16 %v930
    %v1467 = vunpack.c.l.b16 %v931
    %v1468 = vunpack.c.l.b16 %v932
    %v1469 = vunpack.c.l.b16 %v933
    %v1470 = vunpack.c.l.b16 %v934
    %v1471 = vunpack.c.l.b16 %v935
    %v1472 = vunpack.c.l.b16 %v936
    %v1473 = vunpack.c.l.b16 %v937
    %v1474 = vunpack.c.l.b16 %v938
    %v1475 = vunpack.c.l.b16 %v939
    %v1476 = vunpack.c.l.b16 %v940
    %v1477 = vunpack.c.l.b16 %v941
    %v1478 = vunpack.c.l.b16 %v942
    %v1479 = vunpack.c.l.b16 %v943
    %v1480 = vunpack.c.l.b16 %v944
    %v1481 = vunpack.c.l.b16 %v945
    %v1482 = vunpack.c.l.b16 %v946
    %v1483 = vunpack.c.l.b16 %v947
    %v1484 = vunpack.c.l.b16 %v948
    %v1485 = vunpack.c.l.b16 %v949
    %v1486 = vunpack.c.l.b16 %v950
    %v1487 = vunpack.c.l.b16 %v951
    %v1488 = vunpack.c.l.b16 %v952
    %v1489 = vunpack.c.l.b16 %v953
    %v1490 = vunpack.c.l.b16 %v954
    %v1491 = vunpack.c.l.b16 %v955
    %v1492 = vunpack.c.l.b16 %v956
    %v1493 = vunpack.c.l.b16 %v957
    %v1494 = vunpack.c.l.b16 %v958
    %v1495 = vunpack.c.l.b16 %v959
    %v1496 = vunpack.c.l.b16 %v960
    %v1497 = vunpack.c.l.b16 %v961
    %v1498 = vunpack.c.l.b16 %v962
    %v1499 = vunpack.c.l.b16 %v963
    %v1500 = vunpack.c.l.b16 %v964
    %v1501 = vunpack.c.l.b16 %v965
    %v1502 = vunpack.c.l.b16 %v966
    %v1503 = vunpack.c.l.b16 %v967
    %v1504 = vunpack.c.l.b16 %v968
    %v1505 = vunpack.c.l.b16 %v969
    %v1506 = vunpack.c.l.b16 %v970
    %v1507 = vunpack.c.l.b16 %v971
    %v1508 = vunpack.c.l.b16 %v972
    %v1509 = vunpack.c.l.b16 %v973
    %v1510 = vunpack.c.l.b16 %v974
    %v1511 = vunpack.c.l.b16 %v975
    %v1512 = vunpack.c.l.b16 %v976
    %v1513 = vunpack.c.l.b16 %v977
    %v1514 = vunpack.c.l.b16 %v978
    %v1515 = vunpack.c.l.b16 %v979
    %v1516 = vunpack.c.l.b16 %v980
    %v1517 = vunpack.c.l.b16 %v981
    %v1518 = vunpack.c.l.b16 %v982
    %v1519 = vunpack.c.l.b16 %v983
    %v1520 = vunpack.c.l.b16 %v984
    %v1521 = vunpack.c.l.b16 %v985
    %v1522 = vunpack.c.l.b16 %v986
    %v1523 = vunpack.c.l.b16 %v987
    %v1524 = vunpack.c.l.b16 %v988
    %v1525 = vunpack.c.l.b16 %v989
    %v1526 = vunpack.c.l.b16 %v990
    %v1527 = vpack.c.b16 %v1400, %v1399
    %v1528 = vpack.c.b16 %v1402, %v1401
    %v1529 = vpack.c.b16 %v1404, %v1403
    %v1530 = vpack.c.b16 %v1406, %v1405
    %v1531 = vpack.c.b16 %v1408, %v1407
    %v1532 = vpack.c.b16 %v1410, %v1409
    %v1533 = vpack.c.b16 %v1412, %v1411
    %v1534 = vpack.c.b16 %v1414, %v1413
    %v1535 = vpack.c.b16 %v1416, %v1415
    %v1536 = vpack.c.b16 %v1418, %v1417
    %v1537 = vpack.c.b16 %v1420, %v1419
    %v1538 = vpack.c.b16 %v1422, %v1421
    %v1539 = vpack.c.b16 %v1424, %v1423
    %v1540 = vpack.c.b16 %v1426, %v1425
    %v1541 = vpack.c.b16 %v1428, %v1427
    %v1542 = vpack.c.b16 %v1430, %v1429
    %v1543 = vpack.c.b16 %v1432, %v1431
    %v1544 = vpack.c.b16 %v1434, %v1433
    %v1545 = vpack.c.b16 %v1436, %v1435
    %v1546 = vpack.c.b16 %v1438, %v1437
    %v1547 = vpack.c.b16 %v1440, %v1439
    %v1548 = vpack.c.b16 %v1442, %v1441
    %v1549 = vpack.c.b16 %v1444, %v1443
    %v1550 = vpack.c.b16 %v1446, %v1445
    %v1551 = vpack.c.b16 %v1448, %v1447
    %v1552 = vpack.c.b16 %v1450, %v1449
    %v1553 = vpack.c.b16 %v1452, %v1451
    %v1554 = vpack.c.b16 %v1454, %v1453
    %v1555 = vpack.c.b16 %v1456, %v1455
    %v1556 = vpack.c.b16 %v1458, %v1457
    %v1557 = vpack.c.b16 %v1460, %v1459
    %v1558 = vpack.c.b16 %v1462, %v1461
    %v1559 = vpack.c.b16 %v1464, %v1463
    %v1560 = vpack.c.b16 %v1466, %v1465
    %v1561 = vpack.c.b16 %v1468, %v1467
    %v1562 = vpack.c.b16 %v1470, %v1469
    %v1563 = vpack.c.b16 %v1472, %v1471
    %v1564 = vpack.c.b16 %v1474, %v1473
    %v1565 = vpack.c.b16 %v1476, %v1475
    %v1566 = vpack.c.b16 %v1478, %v1477
    %v1567 = vpack.c.b16 %v1480, %v1479
    %v1568 = vpack.c.b16 %v1482, %v1481
    %v1569 = vpack.c.b16 %v1484, %v1483
    %v1570 = vpack.c.b16 %v1486, %v1485
    %v1571 = vpack.c.b16 %v1488, %v1487
    %v1572 = vpack.c.b16 %v1490, %v1489
    %v1573 = vpack.c.b16 %v1492, %v1491
    %v1574 = vpack.c.b16 %v1494, %v1493
    %v1575 = vpack.c.b16 %v1496, %v1495
    %v1576 = vpack.c.b16 %v1498, %v1497
    %v1577 = vpack.c.b16 %v1500, %v1499
    %v1578 = vpack.c.b16 %v1502, %v1501
    %v1579 = vpack.c.b16 %v1504, %v1503
    %v1580 = vpack.c.b16 %v1506, %v1505
    %v1581 = vpack.c.b16 %v1508, %v1507
    %v1582 = vpack.c.b16 %v1510, %v1509
    %v1583 = vpack.c.b16 %v1512, %v1511
    %v1584 = vpack.c.b16 %v1514, %v1513
    %v1585 = vpack.c.b16 %v1516, %v1515
    %v1586 = vpack.c.b16 %v1518, %v1517
    %v1587 = vpack.c.b16 %v1520, %v1519
    %v1588 = vpack.c.b16 %v1522, %v1521
    %v1589 = vpack.c.b16 %v1524, %v1523
    %v1590 = vpack.c.b16 %v1526, %v1525
    %1655 = vmatpush.bf16.msra.mxu0 %v1534
    %1656 = vmatpush.bf16.msra.mxu0 %v1533
    %1657 = vmatpush.bf16.msra.mxu0 %v1532
    %1658 = vmatpush.bf16.msra.mxu0 %v1531
    %1659 = vmatpush.bf16.msra.mxu0 %v1530
    %1660 = vmatpush.bf16.msra.mxu0 %v1529
    %1661 = vmatpush.bf16.msra.mxu0 %v1528
    %1662 = vmatpush.bf16.msra.mxu0 %v1527
    %1663 = vmatmul.bf16.gmra.mxu0 %v1263
    %v1664 = vpop.f32.mrf.mxu0
    %v1665 = vadd.f32 0.0, %v1664
    %v1666 = vpop.f32.mrf.mxu0
    %v1667 = vadd.f32 0.0, %v1666
    %1668 = vdwg.mxu0
    %1669 = vmatpush.bf16.msra.mxu0 %v1542
    %1670 = vmatpush.bf16.msra.mxu0 %v1541
    %1671 = vmatpush.bf16.msra.mxu0 %v1540
    %1672 = vmatpush.bf16.msra.mxu0 %v1539
    %1673 = vmatpush.bf16.msra.mxu0 %v1538
    %1674 = vmatpush.bf16.msra.mxu0 %v1537
    %1675 = vmatpush.bf16.msra.mxu0 %v1536
    %1676 = vmatpush.bf16.msra.mxu0 %v1535
    %1677 = vmatmul.bf16.gmra.mxu0 %v1264
    %v1678 = vpop.f32.mrf.mxu0
    %v1679 = vadd.f32 %v1665, %v1678
    %v1680 = vpop.f32.mrf.mxu0
    %v1681 = vadd.f32 %v1667, %v1680
    %1682 = vdwg.mxu0
    %1683 = vmatpush.bf16.msra.mxu0 %v1550
    %1684 = vmatpush.bf16.msra.mxu0 %v1549
    %1685 = vmatpush.bf16.msra.mxu0 %v1548
    %1686 = vmatpush.bf16.msra.mxu0 %v1547
    %1687 = vmatpush.bf16.msra.mxu0 %v1546
    %1688 = vmatpush.bf16.msra.mxu0 %v1545
    %1689 = vmatpush.bf16.msra.mxu0 %v1544
    %1690 = vmatpush.bf16.msra.mxu0 %v1543
    %1691 = vmatmul.bf16.gmra.mxu0 %v1265
    %v1692 = vpop.f32.mrf.mxu0
    %v1693 = vadd.f32 %v1679, %v1692
    %v1694 = vpop.f32.mrf.mxu0
    %v1695 = vadd.f32 %v1681, %v1694
    %1696 = vdwg.mxu0
    %1697 = vmatpush.bf16.msra.mxu0 %v1558
    %1698 = vmatpush.bf16.msra.mxu0 %v1557
    %1699 = vmatpush.bf16.msra.mxu0 %v1556
    %1700 = vmatpush.bf16.msra.mxu0 %v1555
    %1701 = vmatpush.bf16.msra.mxu0 %v1554
    %1702 = vmatpush.bf16.msra.mxu0 %v1553
    %1703 = vmatpush.bf16.msra.mxu0 %v1552
    %1704 = vmatpush.bf16.msra.mxu0 %v1551
    %1705 = vmatmul.bf16.gmra.mxu0 %v1266
    %v1706 = vpop.f32.mrf.mxu0
    %v1707 = vadd.f32 %v1693, %v1706
    %v1708 = vpop.f32.mrf.mxu0
    %v1709 = vadd.f32 %v1695, %v1708
    %1710 = vdwg.mxu0
    %1711 = vmatpush.bf16.msra.mxu0 %v1566
    %1712 = vmatpush.bf16.msra.mxu0 %v1565
    %1713 = vmatpush.bf16.msra.mxu0 %v1564
    %1714 = vmatpush.bf16.msra.mxu0 %v1563
    %1715 = vmatpush.bf16.msra.mxu0 %v1562
    %1716 = vmatpush.bf16.msra.mxu0 %v1561
    %1717 = vmatpush.bf16.msra.mxu0 %v1560
    %1718 = vmatpush.bf16.msra.mxu0 %v1559
    %1719 = vmatmul.bf16.gmra.mxu0 %v1267
    %v1720 = vpop.f32.mrf.mxu0
    %v1721 = vadd.f32 %v1707, %v1720
    %v1722 = vpop.f32.mrf.mxu0
    %v1723 = vadd.f32 %v1709, %v1722
    %1724 = vdwg.mxu0
    %1725 = vmatpush.bf16.msra.mxu0 %v1574
    %1726 = vmatpush.bf16.msra.mxu0 %v1573
    %1727 = vmatpush.bf16.msra.mxu0 %v1572
    %1728 = vmatpush.bf16.msra.mxu0 %v1571
    %1729 = vmatpush.bf16.msra.mxu0 %v1570
    %1730 = vmatpush.bf16.msra.mxu0 %v1569
    %1731 = vmatpush.bf16.msra.mxu0 %v1568
    %1732 = vmatpush.bf16.msra.mxu0 %v1567
    %1733 = vmatmul.bf16.gmra.mxu0 %v1268
    %v1734 = vpop.f32.mrf.mxu0
    %v1735 = vadd.f32 %v1721, %v1734
    %v1736 = vpop.f32.mrf.mxu0
    %v1737 = vadd.f32 %v1723, %v1736
    %1738 = vdwg.mxu0
    %1739 = vmatpush.bf16.msra.mxu0 %v1582
    %1740 = vmatpush.bf16.msra.mxu0 %v1581
    %1741 = vmatpush.bf16.msra.mxu0 %v1580
    %1742 = vmatpush.bf16.msra.mxu0 %v1579
    %1743 = vmatpush.bf16.msra.mxu0 %v1578
    %1744 = vmatpush.bf16.msra.mxu0 %v1577
    %1745 = vmatpush.bf16.msra.mxu0 %v1576
    %1746 = vmatpush.bf16.msra.mxu0 %v1575
    %1747 = vmatmul.bf16.gmra.mxu0 %v1269
    %v1748 = vpop.f32.mrf.mxu0
    %v1749 = vadd.f32 %v1735, %v1748
    %v1750 = vpop.f32.mrf.mxu0
    %v1751 = vadd.f32 %v1737, %v1750
    %1752 = vdwg.mxu0
    %1753 = vmatpush.bf16.msra.mxu0 %v1590
    %1754 = vmatpush.bf16.msra.mxu0 %v1589
    %1755 = vmatpush.bf16.msra.mxu0 %v1588
    %1756 = vmatpush.bf16.msra.mxu0 %v1587
    %1757 = vmatpush.bf16.msra.mxu0 %v1586
    %1758 = vmatpush.bf16.msra.mxu0 %v1585
    %1759 = vmatpush.bf16.msra.mxu0 %v1584
    %1760 = vmatpush.bf16.msra.mxu0 %v1583
    %1761 = vmatmul.bf16.gmra.mxu0 %v1270
    %v1762 = vpop.f32.mrf.mxu0
    %v1763 = vadd.f32 %v1749, %v1762
    %v1764 = vpop.f32.mrf.mxu0
    %v1765 = vadd.f32 %v1751, %v1764
    %1766 = vdwg.mxu0
    %v1767 = vpack.c.bf16 %v1765, %v1763
    %v1770 = vunpack.c.l.b16 %v845
    %v1771 = vunpack.c.l.b16 %v846
    %v1772 = vpack.c.b16 %v1771, %v1770
    %v1774 = vsel %vm264, %v1772, 0
    %1776 = vmatpush.bf16.msra.mxu0 0
    %1777 = vmatpush.bf16.msra.mxu0 0
    %1778 = vmatpush.bf16.msra.mxu0 0
    %1779 = vmatpush.bf16.msra.mxu0 0
    %1780 = vmatpush.bf16.msra.mxu0 0
    %1781 = vmatpush.bf16.msra.mxu0 0
    %1782 = vmatpush.bf16.msra.mxu0 0
    %1783 = vmatpush.bf16.msra.mxu0 %v1767
    %1784 = vmatmul.bf16.gmra.mxu0 %v1774
    %v1785 = vpop.f32.mrf.mxu0
    %v1786 = vadd.f32 %v1001, %v1785
    %v1787 = vpop.f32.mrf.mxu0
    %v1788 = vadd.f32 %v1001, %v1787
    %1789 = vdwg.mxu0
    %v1790 = vmax.f32 %v1786, 0.0
    %v1791 = vmax.f32 %v1788, 0.0
    %v1792 = vpack.c.bf16 %v1791, %v1790
    %v1797 = vunpack.c.l.b16 %v991
    %v1798 = vunpack.c.l.b16 %v992
    %v1799 = vunpack.c.l.b16 %v993
    %v1800 = vunpack.c.l.b16 %v994
    %v1801 = vpack.c.b16 %v1798, %v1797
    %v1802 = vpack.c.b16 %v1800, %v1799
    %v1806 = vsel %vm1115, %v1792, 0
    %1808 = vmatpush.bf16.msra.mxu0 0
    %1809 = vmatpush.bf16.msra.mxu0 0
    %1810 = vmatpush.bf16.msra.mxu0 0
    %1811 = vmatpush.bf16.msra.mxu0 0
    %1812 = vmatpush.bf16.msra.mxu0 0
    %1813 = vmatpush.bf16.msra.mxu0 0
    %1814 = vmatpush.bf16.msra.mxu0 %v1802
    %1815 = vmatpush.bf16.msra.mxu0 %v1801
    %1816 = vmatmul.bf16.gmra.mxu0 %v1806
    %v1817 = vpop.f32.mrf.mxu0
    %v1818 = vadd.f32 %v1005, %v1817
    %v1819 = vpop.f32.mrf.mxu0
    %v1820 = vadd.f32 %v1005, %v1819
    %1821 = vdwg.mxu0
    %v1826 = vunpack.c.l.b16 %v995
    %v1827 = vunpack.c.l.b16 %v996
    %v1828 = vunpack.c.l.b16 %v997
    %v1829 = vunpack.c.l.b16 %v998
    %v1830 = vpack.c.b16 %v1827, %v1826
    %v1831 = vpack.c.b16 %v1829, %v1828
    %v1835 = vsel %vm1115, %v1011, 0
    %1837 = vmatpush.bf16.msra.mxu0 0
    %1838 = vmatpush.bf16.msra.mxu0 0
    %1839 = vmatpush.bf16.msra.mxu0 0
    %1840 = vmatpush.bf16.msra.mxu0 0
    %1841 = vmatpush.bf16.msra.mxu0 0
    %1842 = vmatpush.bf16.msra.mxu0 0
    %1843 = vmatpush.bf16.msra.mxu0 %v1831
    %1844 = vmatpush.bf16.msra.mxu0 %v1830
    %1845 = vmatmul.bf16.gmra.mxu0 %v1835
    %v1846 = vpop.f32.mrf.mxu0
    %v1847 = vadd.f32 %v1009, %v1846
    %v1848 = vpop.f32.mrf.mxu0
    %v1849 = vadd.f32 %v1009, %v1848
    %1850 = vdwg.mxu0
    %v1851 = vadd.f32 %v1818, %v1847
    %v1852 = vadd.f32 %v1820, %v1849
    %v1853 = vxor.u32 %v1851, 2147483648
    %v1854 = vxor.u32 %v1852, 2147483648
    %v1855 = vmul.f32 %v1853, 1.442695
    %v1856 = vpow.pop %v1855
    %v1857 = vmul.f32 %v1854, 1.442695
    %v1858 = vpow.pop %v1857
    %v1859 = vadd.f32 %v1856, 1.0
    %v1860 = vadd.f32 %v1858, 1.0
    %v1861 = vrcp.pop %v1859
    %v1862 = vmul.f32 %v1859, %v1861
    %v1863 = vsub.f32 1.0, %v1862
    %v1864 = vmul.f32 %v1861, %v1863
    %v1865 = vadd.f32 %v1861, %v1864
    %vm1866 = vweird.f32 %v1859
    %vm1867 = vweird.f32 %v1861
    %vm1868 = vmor %vm1866, %vm1867
    %v1869 = vsel %vm1868, %v1861, %v1865
    %v1870 = vand.u32 2147483647, %v1859
    %vm1871 = vcmp.eq.f32.partialorder %v1870, 8.507059e+37
    %v1872 = vand.u32 %v1859, 2147483648
    %v1873 = vor.u32 1.1754944e-38, %v1872
    %v1874 = vsel %vm1871, %v1873, %v1869
    %v1875 = vmul.f32 1.0, %v1874
    %v1876 = vrcp.pop %v1860
    %v1877 = vmul.f32 %v1860, %v1876
    %v1878 = vsub.f32 1.0, %v1877
    %v1879 = vmul.f32 %v1876, %v1878
    %v1880 = vadd.f32 %v1876, %v1879
    %vm1881 = vweird.f32 %v1860
    %vm1882 = vweird.f32 %v1876
    %vm1883 = vmor %vm1881, %vm1882
    %v1884 = vsel %vm1883, %v1876, %v1880
    %v1885 = vand.u32 2147483647, %v1860
    %vm1886 = vcmp.eq.f32.partialorder %v1885, 8.507059e+37
    %v1887 = vand.u32 %v1860, 2147483648
    %v1888 = vor.u32 1.1754944e-38, %v1887
    %v1889 = vsel %vm1886, %v1888, %v1884
    %v1890 = vmul.f32 1.0, %v1889
    %1893 = vrot.lane.b32.xlu0 %v1847, 64
    %v1894 = vpop.permute.xlu0 %1893
    %1895 = vrot.lane.b32.xlu0 %v1849, 64
    %v1896 = vpop.permute.xlu0 %1895
    %v1899 = vmul.f32 %v1875, %v1894
    %v1900 = vmul.f32 %v1890, %v1896
    %1903 = vrot.lane.b32.xlu0 %v1899, 64
    %v1904 = vpop.permute.xlu0 %1903
    %1905 = vrot.lane.b32.xlu0 %v1900, 64
    %v1906 = vpop.permute.xlu0 %1905
    %v1909 = vadd.f32 %v1818, %v1904
    %v1910 = vadd.f32 %v1820, %v1906
    %v1911 = vtanh.pop %v1909
    %v1912 = vtanh.pop %v1910
    %v1913 = vsub.f32 1.0, %v1875
    %v1914 = vsub.f32 1.0, %v1890
    %1917 = vrot.lane.b32.xlu0 %v1911, 96
    %v1918 = vpop.permute.xlu0 %1917
    %1919 = vrot.lane.b32.xlu0 %v1912, 96
    %v1920 = vpop.permute.xlu0 %1919
    %v1923 = vmul.f32 %v1913, %v1918
    %v1924 = vmul.f32 %v1914, %v1920
    %1927 = vrot.lane.b32.xlu0 %v282, 32
    %v1928 = vpop.permute.xlu0 %1927
    %1929 = vrot.lane.b32.xlu0 %v283, 32
    %v1930 = vpop.permute.xlu0 %1929
    %v1933 = vmul.f32 %v1875, %v1928
    %v1934 = vmul.f32 %v1890, %v1930
    %v1935 = vadd.f32 %v1923, %v1933
    %v1936 = vadd.f32 %v1924, %v1934
    %v1937 = vpack.c.bf16 %v1936, %v1935
    %1939 = vrot.lane.b32.xlu0 %v1937, 96
    %v1940 = vpop.permute.xlu0 %1939
    %1942 = vmatpush.bf16.msra.mxu0 0
    %1943 = vmatpush.bf16.msra.mxu0 0
    %1944 = vmatpush.bf16.msra.mxu0 0
    %1945 = vmatpush.bf16.msra.mxu0 0
    %1946 = vmatpush.bf16.msra.mxu0 0
    %1947 = vmatpush.bf16.msra.mxu0 0
    %1948 = vmatpush.bf16.msra.mxu0 0
    %1949 = vmatpush.bf16.msra.mxu0 %v1940
    %1950 = vmatmul.bf16.gmra.mxu0 %v1018
    %v1951 = vpop.f32.mrf.mxu0
    %v1952 = vadd.f32 0.0, %v1951
    %v1953 = vpop.f32.mrf.mxu0
    %v1954 = vadd.f32 0.0, %v1953
    %1955 = vdwg.mxu0
    %v1956 = vpack.c.bf16 %v1954, %v1952
    %v1958 = vsel %vm1115, %v1956, 0
    %1960 = vmatpush.bf16.msra.mxu0 0
    %1961 = vmatpush.bf16.msra.mxu0 0
    %1962 = vmatpush.bf16.msra.mxu0 0
    %1963 = vmatpush.bf16.msra.mxu0 0
    %1964 = vmatpush.bf16.msra.mxu0 0
    %1965 = vmatpush.bf16.msra.mxu0 0
    %1966 = vmatpush.bf16.msra.mxu0 %v1091
    %1967 = vmatpush.bf16.msra.mxu0 %v1083
    %1968 = vmatmul.bf16.gmra.mxu0 %v1958
    %v1969 = vpop.f32.mrf.mxu0
    %v1970 = vadd.f32 0.0, %v1969
    %v1971 = vpop.f32.mrf.mxu0
    %v1972 = vadd.f32 0.0, %v1971
    %1973 = vdwg.mxu0
    %1974 = vmatpush.bf16.msra.mxu0 0
    %1975 = vmatpush.bf16.msra.mxu0 0
    %1976 = vmatpush.bf16.msra.mxu0 0
    %1977 = vmatpush.bf16.msra.mxu0 0
    %1978 = vmatpush.bf16.msra.mxu0 0
    %1979 = vmatpush.bf16.msra.mxu0 0
    %1980 = vmatpush.bf16.msra.mxu0 %v1092
    %1981 = vmatpush.bf16.msra.mxu0 %v1084
    %1982 = vmatmul.bf16.gmra.mxu0 %v1958
    %v1983 = vpop.f32.mrf.mxu0
    %v1984 = vadd.f32 0.0, %v1983
    %v1985 = vpop.f32.mrf.mxu0
    %v1986 = vadd.f32 0.0, %v1985
    %1987 = vdwg.mxu0
    %1988 = vmatpush.bf16.msra.mxu0 0
    %1989 = vmatpush.bf16.msra.mxu0 0
    %1990 = vmatpush.bf16.msra.mxu0 0
    %1991 = vmatpush.bf16.msra.mxu0 0
    %1992 = vmatpush.bf16.msra.mxu0 0
    %1993 = vmatpush.bf16.msra.mxu0 0
    %1994 = vmatpush.bf16.msra.mxu0 %v1093
    %1995 = vmatpush.bf16.msra.mxu0 %v1085
    %1996 = vmatmul.bf16.gmra.mxu0 %v1958
    %v1997 = vpop.f32.mrf.mxu0
    %v1998 = vadd.f32 0.0, %v1997
    %v1999 = vpop.f32.mrf.mxu0
    %v2000 = vadd.f32 0.0, %v1999
    %2001 = vdwg.mxu0
    %2002 = vmatpush.bf16.msra.mxu0 0
    %2003 = vmatpush.bf16.msra.mxu0 0
    %2004 = vmatpush.bf16.msra.mxu0 0
    %2005 = vmatpush.bf16.msra.mxu0 0
    %2006 = vmatpush.bf16.msra.mxu0 0
    %2007 = vmatpush.bf16.msra.mxu0 0
    %2008 = vmatpush.bf16.msra.mxu0 %v1094
    %2009 = vmatpush.bf16.msra.mxu0 %v1086
    %2010 = vmatmul.bf16.gmra.mxu0 %v1958
    %v2011 = vpop.f32.mrf.mxu0
    %v2012 = vadd.f32 0.0, %v2011
    %v2013 = vpop.f32.mrf.mxu0
    %v2014 = vadd.f32 0.0, %v2013
    %2015 = vdwg.mxu0
    %2016 = vmatpush.bf16.msra.mxu0 0
    %2017 = vmatpush.bf16.msra.mxu0 0
    %2018 = vmatpush.bf16.msra.mxu0 0
    %2019 = vmatpush.bf16.msra.mxu0 0
    %2020 = vmatpush.bf16.msra.mxu0 0
    %2021 = vmatpush.bf16.msra.mxu0 0
    %2022 = vmatpush.bf16.msra.mxu0 %v1095
    %2023 = vmatpush.bf16.msra.mxu0 %v1087
    %2024 = vmatmul.bf16.gmra.mxu0 %v1958
    %v2025 = vpop.f32.mrf.mxu0
    %v2026 = vadd.f32 0.0, %v2025
    %v2027 = vpop.f32.mrf.mxu0
    %v2028 = vadd.f32 0.0, %v2027
    %2029 = vdwg.mxu0
    %2030 = vmatpush.bf16.msra.mxu0 0
    %2031 = vmatpush.bf16.msra.mxu0 0
    %2032 = vmatpush.bf16.msra.mxu0 0
    %2033 = vmatpush.bf16.msra.mxu0 0
    %2034 = vmatpush.bf16.msra.mxu0 0
    %2035 = vmatpush.bf16.msra.mxu0 0
    %2036 = vmatpush.bf16.msra.mxu0 %v1096
    %2037 = vmatpush.bf16.msra.mxu0 %v1088
    %2038 = vmatmul.bf16.gmra.mxu0 %v1958
    %v2039 = vpop.f32.mrf.mxu0
    %v2040 = vadd.f32 0.0, %v2039
    %v2041 = vpop.f32.mrf.mxu0
    %v2042 = vadd.f32 0.0, %v2041
    %2043 = vdwg.mxu0
    %2044 = vmatpush.bf16.msra.mxu0 0
    %2045 = vmatpush.bf16.msra.mxu0 0
    %2046 = vmatpush.bf16.msra.mxu0 0
    %2047 = vmatpush.bf16.msra.mxu0 0
    %2048 = vmatpush.bf16.msra.mxu0 0
    %2049 = vmatpush.bf16.msra.mxu0 0
    %2050 = vmatpush.bf16.msra.mxu0 %v1097
    %2051 = vmatpush.bf16.msra.mxu0 %v1089
    %2052 = vmatmul.bf16.gmra.mxu0 %v1958
    %v2053 = vpop.f32.mrf.mxu0
    %v2054 = vadd.f32 0.0, %v2053
    %v2055 = vpop.f32.mrf.mxu0
    %v2056 = vadd.f32 0.0, %v2055
    %2057 = vdwg.mxu0
    %2058 = vmatpush.bf16.msra.mxu0 0
    %2059 = vmatpush.bf16.msra.mxu0 0
    %2060 = vmatpush.bf16.msra.mxu0 0
    %2061 = vmatpush.bf16.msra.mxu0 0
    %2062 = vmatpush.bf16.msra.mxu0 0
    %2063 = vmatpush.bf16.msra.mxu0 0
    %2064 = vmatpush.bf16.msra.mxu0 %v1098
    %2065 = vmatpush.bf16.msra.mxu0 %v1090
    %2066 = vmatmul.bf16.gmra.mxu0 %v1958
    %v2067 = vpop.f32.mrf.mxu0
    %v2068 = vadd.f32 0.0, %v2067
    %v2069 = vpop.f32.mrf.mxu0
    %v2070 = vadd.f32 0.0, %v2069
    %2071 = vdwg.mxu0
    %v2072 = vmul.f32 %v1970, %v1231
    %v2073 = vmul.f32 %v1984, %v1232
    %v2074 = vmul.f32 %v1998, %v1233
    %v2075 = vmul.f32 %v2012, %v1234
    %v2076 = vmul.f32 %v2026, %v1235
    %v2077 = vmul.f32 %v2040, %v1236
    %v2078 = vmul.f32 %v2054, %v1237
    %v2079 = vmul.f32 %v2068, %v1238
    %v2080 = vmul.f32 %v1972, %v1239
    %v2081 = vmul.f32 %v1986, %v1240
    %v2082 = vmul.f32 %v2000, %v1241
    %v2083 = vmul.f32 %v2014, %v1242
    %v2084 = vmul.f32 %v2028, %v1243
    %v2085 = vmul.f32 %v2042, %v1244
    %v2086 = vmul.f32 %v2056, %v1245
    %v2087 = vmul.f32 %v2070, %v1246
    %v2088 = vpack.c.bf16 %v2080, %v2072
    %v2089 = vpack.c.bf16 %v2081, %v2073
    %v2090 = vpack.c.bf16 %v2082, %v2074
    %v2091 = vpack.c.bf16 %v2083, %v2075
    %v2092 = vpack.c.bf16 %v2084, %v2076
    %v2093 = vpack.c.bf16 %v2085, %v2077
    %v2094 = vpack.c.bf16 %v2086, %v2078
    %v2095 = vpack.c.bf16 %v2087, %v2079
    %2096 = vmatpush.bf16.msra.mxu0 %v1534
    %2097 = vmatpush.bf16.msra.mxu0 %v1533
    %2098 = vmatpush.bf16.msra.mxu0 %v1532
    %2099 = vmatpush.bf16.msra.mxu0 %v1531
    %2100 = vmatpush.bf16.msra.mxu0 %v1530
    %2101 = vmatpush.bf16.msra.mxu0 %v1529
    %2102 = vmatpush.bf16.msra.mxu0 %v1528
    %2103 = vmatpush.bf16.msra.mxu0 %v1527
    %2104 = vmatmul.bf16.gmra.mxu0 %v2088
    %v2105 = vpop.f32.mrf.mxu0
    %v2106 = vadd.f32 0.0, %v2105
    %v2107 = vpop.f32.mrf.mxu0
    %v2108 = vadd.f32 0.0, %v2107
    %2109 = vdwg.mxu0
    %2110 = vmatpush.bf16.msra.mxu0 %v1542
    %2111 = vmatpush.bf16.msra.mxu0 %v1541
    %2112 = vmatpush.bf16.msra.mxu0 %v1540
    %2113 = vmatpush.bf16.msra.mxu0 %v1539
    %2114 = vmatpush.bf16.msra.mxu0 %v1538
    %2115 = vmatpush.bf16.msra.mxu0 %v1537
    %2116 = vmatpush.bf16.msra.mxu0 %v1536
    %2117 = vmatpush.bf16.msra.mxu0 %v1535
    %2118 = vmatmul.bf16.gmra.mxu0 %v2089
    %v2119 = vpop.f32.mrf.mxu0
    %v2120 = vadd.f32 %v2106, %v2119
    %v2121 = vpop.f32.mrf.mxu0
    %v2122 = vadd.f32 %v2108, %v2121
    %2123 = vdwg.mxu0
    %2124 = vmatpush.bf16.msra.mxu0 %v1550
    %2125 = vmatpush.bf16.msra.mxu0 %v1549
    %2126 = vmatpush.bf16.msra.mxu0 %v1548
    %2127 = vmatpush.bf16.msra.mxu0 %v1547
    %2128 = vmatpush.bf16.msra.mxu0 %v1546
    %2129 = vmatpush.bf16.msra.mxu0 %v1545
    %2130 = vmatpush.bf16.msra.mxu0 %v1544
    %2131 = vmatpush.bf16.msra.mxu0 %v1543
    %2132 = vmatmul.bf16.gmra.mxu0 %v2090
    %v2133 = vpop.f32.mrf.mxu0
    %v2134 = vadd.f32 %v2120, %v2133
    %v2135 = vpop.f32.mrf.mxu0
    %v2136 = vadd.f32 %v2122, %v2135
    %2137 = vdwg.mxu0
    %2138 = vmatpush.bf16.msra.mxu0 %v1558
    %2139 = vmatpush.bf16.msra.mxu0 %v1557
    %2140 = vmatpush.bf16.msra.mxu0 %v1556
    %2141 = vmatpush.bf16.msra.mxu0 %v1555
    %2142 = vmatpush.bf16.msra.mxu0 %v1554
    %2143 = vmatpush.bf16.msra.mxu0 %v1553
    %2144 = vmatpush.bf16.msra.mxu0 %v1552
    %2145 = vmatpush.bf16.msra.mxu0 %v1551
    %2146 = vmatmul.bf16.gmra.mxu0 %v2091
    %v2147 = vpop.f32.mrf.mxu0
    %v2148 = vadd.f32 %v2134, %v2147
    %v2149 = vpop.f32.mrf.mxu0
    %v2150 = vadd.f32 %v2136, %v2149
    %2151 = vdwg.mxu0
    %2152 = vmatpush.bf16.msra.mxu0 %v1566
    %2153 = vmatpush.bf16.msra.mxu0 %v1565
    %2154 = vmatpush.bf16.msra.mxu0 %v1564
    %2155 = vmatpush.bf16.msra.mxu0 %v1563
    %2156 = vmatpush.bf16.msra.mxu0 %v1562
    %2157 = vmatpush.bf16.msra.mxu0 %v1561
    %2158 = vmatpush.bf16.msra.mxu0 %v1560
    %2159 = vmatpush.bf16.msra.mxu0 %v1559
    %2160 = vmatmul.bf16.gmra.mxu0 %v2092
    %v2161 = vpop.f32.mrf.mxu0
    %v2162 = vadd.f32 %v2148, %v2161
    %v2163 = vpop.f32.mrf.mxu0
    %v2164 = vadd.f32 %v2150, %v2163
    %2165 = vdwg.mxu0
    %2166 = vmatpush.bf16.msra.mxu0 %v1574
    %2167 = vmatpush.bf16.msra.mxu0 %v1573
    %2168 = vmatpush.bf16.msra.mxu0 %v1572
    %2169 = vmatpush.bf16.msra.mxu0 %v1571
    %2170 = vmatpush.bf16.msra.mxu0 %v1570
    %2171 = vmatpush.bf16.msra.mxu0 %v1569
    %2172 = vmatpush.bf16.msra.mxu0 %v1568
    %2173 = vmatpush.bf16.msra.mxu0 %v1567
    %2174 = vmatmul.bf16.gmra.mxu0 %v2093
    %v2175 = vpop.f32.mrf.mxu0
    %v2176 = vadd.f32 %v2162, %v2175
    %v2177 = vpop.f32.mrf.mxu0
    %v2178 = vadd.f32 %v2164, %v2177
    %2179 = vdwg.mxu0
    %2180 = vmatpush.bf16.msra.mxu0 %v1582
    %2181 = vmatpush.bf16.msra.mxu0 %v1581
    %2182 = vmatpush.bf16.msra.mxu0 %v1580
    %2183 = vmatpush.bf16.msra.mxu0 %v1579
    %2184 = vmatpush.bf16.msra.mxu0 %v1578
    %2185 = vmatpush.bf16.msra.mxu0 %v1577
    %2186 = vmatpush.bf16.msra.mxu0 %v1576
    %2187 = vmatpush.bf16.msra.mxu0 %v1575
    %2188 = vmatmul.bf16.gmra.mxu0 %v2094
    %v2189 = vpop.f32.mrf.mxu0
    %v2190 = vadd.f32 %v2176, %v2189
    %v2191 = vpop.f32.mrf.mxu0
    %v2192 = vadd.f32 %v2178, %v2191
    %2193 = vdwg.mxu0
    %2194 = vmatpush.bf16.msra.mxu0 %v1590
    %2195 = vmatpush.bf16.msra.mxu0 %v1589
    %2196 = vmatpush.bf16.msra.mxu0 %v1588
    %2197 = vmatpush.bf16.msra.mxu0 %v1587
    %2198 = vmatpush.bf16.msra.mxu0 %v1586
    %2199 = vmatpush.bf16.msra.mxu0 %v1585
    %2200 = vmatpush.bf16.msra.mxu0 %v1584
    %2201 = vmatpush.bf16.msra.mxu0 %v1583
    %2202 = vmatmul.bf16.gmra.mxu0 %v2095
    %v2203 = vpop.f32.mrf.mxu0
    %v2204 = vadd.f32 %v2190, %v2203
    %v2205 = vpop.f32.mrf.mxu0
    %v2206 = vadd.f32 %v2192, %v2205
    %2207 = vdwg.mxu0
    %v2208 = vpack.c.bf16 %v2206, %v2204
    %2209 = vmatpush.bf16.msra.mxu0 0
    %2210 = vmatpush.bf16.msra.mxu0 0
    %2211 = vmatpush.bf16.msra.mxu0 0
    %2212 = vmatpush.bf16.msra.mxu0 0
    %2213 = vmatpush.bf16.msra.mxu0 0
    %2214 = vmatpush.bf16.msra.mxu0 0
    %2215 = vmatpush.bf16.msra.mxu0 0
    %2216 = vmatpush.bf16.msra.mxu0 %v2208
    %2217 = vmatmul.bf16.gmra.mxu0 %v1774
    %v2218 = vpop.f32.mrf.mxu0
    %v2219 = vadd.f32 %v1001, %v2218
    %v2220 = vpop.f32.mrf.mxu0
    %v2221 = vadd.f32 %v1001, %v2220
    %2222 = vdwg.mxu0
    %v2223 = vmax.f32 %v2219, 0.0
    %v2224 = vmax.f32 %v2221, 0.0
    %v2225 = vpack.c.bf16 %v2224, %v2223
    %v2227 = vsel %vm1115, %v2225, 0
    %2229 = vmatpush.bf16.msra.mxu0 0
    %2230 = vmatpush.bf16.msra.mxu0 0
    %2231 = vmatpush.bf16.msra.mxu0 0
    %2232 = vmatpush.bf16.msra.mxu0 0
    %2233 = vmatpush.bf16.msra.mxu0 0
    %2234 = vmatpush.bf16.msra.mxu0 0
    %2235 = vmatpush.bf16.msra.mxu0 %v1802
    %2236 = vmatpush.bf16.msra.mxu0 %v1801
    %2237 = vmatmul.bf16.gmra.mxu0 %v2227
    %v2238 = vpop.f32.mrf.mxu0
    %v2239 = vadd.f32 %v1005, %v2238
    %v2240 = vpop.f32.mrf.mxu0
    %v2241 = vadd.f32 %v1005, %v2240
    %2242 = vdwg.mxu0
    %v2244 = vsel %vm1115, %v1940, 0
    %2246 = vmatpush.bf16.msra.mxu0 0
    %2247 = vmatpush.bf16.msra.mxu0 0
    %2248 = vmatpush.bf16.msra.mxu0 0
    %2249 = vmatpush.bf16.msra.mxu0 0
    %2250 = vmatpush.bf16.msra.mxu0 0
    %2251 = vmatpush.bf16.msra.mxu0 0
    %2252 = vmatpush.bf16.msra.mxu0 %v1831
    %2253 = vmatpush.bf16.msra.mxu0 %v1830
    %2254 = vmatmul.bf16.gmra.mxu0 %v2244
    %v2255 = vpop.f32.mrf.mxu0
    %v2256 = vadd.f32 %v1009, %v2255
    %v2257 = vpop.f32.mrf.mxu0
    %v2258 = vadd.f32 %v1009, %v2257
    %2259 = vdwg.mxu0
    %v2260 = vadd.f32 %v2239, %v2256
    %v2261 = vadd.f32 %v2241, %v2258
    %v2262 = vxor.u32 %v2260, 2147483648
    %v2263 = vxor.u32 %v2261, 2147483648
    %v2264 = vmul.f32 %v2262, 1.442695
    %v2265 = vpow.pop %v2264
    %v2266 = vmul.f32 %v2263, 1.442695
    %v2267 = vpow.pop %v2266
    %v2268 = vadd.f32 %v2265, 1.0
    %v2269 = vadd.f32 %v2267, 1.0
    %v2270 = vrcp.pop %v2268
    %v2271 = vmul.f32 %v2268, %v2270
    %v2272 = vsub.f32 1.0, %v2271
    %v2273 = vmul.f32 %v2270, %v2272
    %v2274 = vadd.f32 %v2270, %v2273
    %vm2275 = vweird.f32 %v2268
    %vm2276 = vweird.f32 %v2270
    %vm2277 = vmor %vm2275, %vm2276
    %v2278 = vsel %vm2277, %v2270, %v2274
    %v2279 = vand.u32 2147483647, %v2268
    %vm2280 = vcmp.eq.f32.partialorder %v2279, 8.507059e+37
    %v2281 = vand.u32 %v2268, 2147483648
    %v2282 = vor.u32 1.1754944e-38, %v2281
    %v2283 = vsel %vm2280, %v2282, %v2278
    %v2284 = vmul.f32 1.0, %v2283
    %v2285 = vrcp.pop %v2269
    %v2286 = vmul.f32 %v2269, %v2285
    %v2287 = vsub.f32 1.0, %v2286
    %v2288 = vmul.f32 %v2285, %v2287
    %v2289 = vadd.f32 %v2285, %v2288
    %vm2290 = vweird.f32 %v2269
    %vm2291 = vweird.f32 %v2285
    %vm2292 = vmor %vm2290, %vm2291
    %v2293 = vsel %vm2292, %v2285, %v2289
    %v2294 = vand.u32 2147483647, %v2269
    %vm2295 = vcmp.eq.f32.partialorder %v2294, 8.507059e+37
    %v2296 = vand.u32 %v2269, 2147483648
    %v2297 = vor.u32 1.1754944e-38, %v2296
    %v2298 = vsel %vm2295, %v2297, %v2293
    %v2299 = vmul.f32 1.0, %v2298
    %2302 = vrot.lane.b32.xlu0 %v2256, 64
    %v2303 = vpop.permute.xlu0 %2302
    %2304 = vrot.lane.b32.xlu0 %v2258, 64
    %v2305 = vpop.permute.xlu0 %2304
    %v2308 = vmul.f32 %v2284, %v2303
    %v2309 = vmul.f32 %v2299, %v2305
    %2312 = vrot.lane.b32.xlu0 %v2308, 64
    %v2313 = vpop.permute.xlu0 %2312
    %2314 = vrot.lane.b32.xlu0 %v2309, 64
    %v2315 = vpop.permute.xlu0 %2314
    %v2318 = vadd.f32 %v2239, %v2313
    %v2319 = vadd.f32 %v2241, %v2315
    %v2320 = vtanh.pop %v2318
    %v2321 = vtanh.pop %v2319
    %v2322 = vsub.f32 1.0, %v2284
    %v2323 = vsub.f32 1.0, %v2299
    %2326 = vrot.lane.b32.xlu0 %v2320, 96
    %v2327 = vpop.permute.xlu0 %2326
    %2328 = vrot.lane.b32.xlu0 %v2321, 96
    %v2329 = vpop.permute.xlu0 %2328
    %v2332 = vmul.f32 %v2322, %v2327
    %v2333 = vmul.f32 %v2323, %v2329
    %v2334 = vmul.f32 %v2284, %v1935
    %v2335 = vmul.f32 %v2299, %v1936
    %v2336 = vadd.f32 %v2332, %v2334
    %v2337 = vadd.f32 %v2333, %v2335
    %v2338 = vpack.c.bf16 %v2337, %v2336
    %2340 = vrot.lane.b32.xlu0 %v2338, 96
    %v2341 = vpop.permute.xlu0 %2340
    %2343 = vmatpush.bf16.msra.mxu0 0
    %2344 = vmatpush.bf16.msra.mxu0 0
    %2345 = vmatpush.bf16.msra.mxu0 0
    %2346 = vmatpush.bf16.msra.mxu0 0
    %2347 = vmatpush.bf16.msra.mxu0 0
    %2348 = vmatpush.bf16.msra.mxu0 0
    %2349 = vmatpush.bf16.msra.mxu0 0
    %2350 = vmatpush.bf16.msra.mxu0 %v2341
    %2351 = vmatmul.bf16.gmra.mxu0 %v1018
    %v2352 = vpop.f32.mrf.mxu0
    %v2353 = vadd.f32 0.0, %v2352
    %v2354 = vpop.f32.mrf.mxu0
    %v2355 = vadd.f32 0.0, %v2354
    %2356 = vdwg.mxu0
    %v2357 = vpack.c.bf16 %v2355, %v2353
    %v2359 = vsel %vm1115, %v2357, 0
    %2361 = vmatpush.bf16.msra.mxu0 0
    %2362 = vmatpush.bf16.msra.mxu0 0
    %2363 = vmatpush.bf16.msra.mxu0 0
    %2364 = vmatpush.bf16.msra.mxu0 0
    %2365 = vmatpush.bf16.msra.mxu0 0
    %2366 = vmatpush.bf16.msra.mxu0 0
    %2367 = vmatpush.bf16.msra.mxu0 %v1091
    %2368 = vmatpush.bf16.msra.mxu0 %v1083
    %2369 = vmatmul.bf16.gmra.mxu0 %v2359
    %v2370 = vpop.f32.mrf.mxu0
    %v2371 = vadd.f32 0.0, %v2370
    %v2372 = vpop.f32.mrf.mxu0
    %v2373 = vadd.f32 0.0, %v2372
    %2374 = vdwg.mxu0
    %2375 = vmatpush.bf16.msra.mxu0 0
    %2376 = vmatpush.bf16.msra.mxu0 0
    %2377 = vmatpush.bf16.msra.mxu0 0
    %2378 = vmatpush.bf16.msra.mxu0 0
    %2379 = vmatpush.bf16.msra.mxu0 0
    %2380 = vmatpush.bf16.msra.mxu0 0
    %2381 = vmatpush.bf16.msra.mxu0 %v1092
    %2382 = vmatpush.bf16.msra.mxu0 %v1084
    %2383 = vmatmul.bf16.gmra.mxu0 %v2359
    %v2384 = vpop.f32.mrf.mxu0
    %v2385 = vadd.f32 0.0, %v2384
    %v2386 = vpop.f32.mrf.mxu0
    %v2387 = vadd.f32 0.0, %v2386
    %2388 = vdwg.mxu0
    %2389 = vmatpush.bf16.msra.mxu0 0
    %2390 = vmatpush.bf16.msra.mxu0 0
    %2391 = vmatpush.bf16.msra.mxu0 0
    %2392 = vmatpush.bf16.msra.mxu0 0
    %2393 = vmatpush.bf16.msra.mxu0 0
    %2394 = vmatpush.bf16.msra.mxu0 0
    %2395 = vmatpush.bf16.msra.mxu0 %v1093
    %2396 = vmatpush.bf16.msra.mxu0 %v1085
    %2397 = vmatmul.bf16.gmra.mxu0 %v2359
    %v2398 = vpop.f32.mrf.mxu0
    %v2399 = vadd.f32 0.0, %v2398
    %v2400 = vpop.f32.mrf.mxu0
    %v2401 = vadd.f32 0.0, %v2400
    %2402 = vdwg.mxu0
    %2403 = vmatpush.bf16.msra.mxu0 0
    %2404 = vmatpush.bf16.msra.mxu0 0
    %2405 = vmatpush.bf16.msra.mxu0 0
    %2406 = vmatpush.bf16.msra.mxu0 0
    %2407 = vmatpush.bf16.msra.mxu0 0
    %2408 = vmatpush.bf16.msra.mxu0 0
    %2409 = vmatpush.bf16.msra.mxu0 %v1094
    %2410 = vmatpush.bf16.msra.mxu0 %v1086
    %2411 = vmatmul.bf16.gmra.mxu0 %v2359
    %v2412 = vpop.f32.mrf.mxu0
    %v2413 = vadd.f32 0.0, %v2412
    %v2414 = vpop.f32.mrf.mxu0
    %v2415 = vadd.f32 0.0, %v2414
    %2416 = vdwg.mxu0
    %2417 = vmatpush.bf16.msra.mxu0 0
    %2418 = vmatpush.bf16.msra.mxu0 0
    %2419 = vmatpush.bf16.msra.mxu0 0
    %2420 = vmatpush.bf16.msra.mxu0 0
    %2421 = vmatpush.bf16.msra.mxu0 0
    %2422 = vmatpush.bf16.msra.mxu0 0
    %2423 = vmatpush.bf16.msra.mxu0 %v1095
    %2424 = vmatpush.bf16.msra.mxu0 %v1087
    %2425 = vmatmul.bf16.gmra.mxu0 %v2359
    %v2426 = vpop.f32.mrf.mxu0
    %v2427 = vadd.f32 0.0, %v2426
    %v2428 = vpop.f32.mrf.mxu0
    %v2429 = vadd.f32 0.0, %v2428
    %2430 = vdwg.mxu0
    %2431 = vmatpush.bf16.msra.mxu0 0
    %2432 = vmatpush.bf16.msra.mxu0 0
    %2433 = vmatpush.bf16.msra.mxu0 0
    %2434 = vmatpush.bf16.msra.mxu0 0
    %2435 = vmatpush.bf16.msra.mxu0 0
    %2436 = vmatpush.bf16.msra.mxu0 0
    %2437 = vmatpush.bf16.msra.mxu0 %v1096
    %2438 = vmatpush.bf16.msra.mxu0 %v1088
    %2439 = vmatmul.bf16.gmra.mxu0 %v2359
    %v2440 = vpop.f32.mrf.mxu0
    %v2441 = vadd.f32 0.0, %v2440
    %v2442 = vpop.f32.mrf.mxu0
    %v2443 = vadd.f32 0.0, %v2442
    %2444 = vdwg.mxu0
    %2445 = vmatpush.bf16.msra.mxu0 0
    %2446 = vmatpush.bf16.msra.mxu0 0
    %2447 = vmatpush.bf16.msra.mxu0 0
    %2448 = vmatpush.bf16.msra.mxu0 0
    %2449 = vmatpush.bf16.msra.mxu0 0
    %2450 = vmatpush.bf16.msra.mxu0 0
    %2451 = vmatpush.bf16.msra.mxu0 %v1097
    %2452 = vmatpush.bf16.msra.mxu0 %v1089
    %2453 = vmatmul.bf16.gmra.mxu0 %v2359
    %v2454 = vpop.f32.mrf.mxu0
    %v2455 = vadd.f32 0.0, %v2454
    %v2456 = vpop.f32.mrf.mxu0
    %v2457 = vadd.f32 0.0, %v2456
    %2458 = vdwg.mxu0
    %2459 = vmatpush.bf16.msra.mxu0 0
    %2460 = vmatpush.bf16.msra.mxu0 0
    %2461 = vmatpush.bf16.msra.mxu0 0
    %2462 = vmatpush.bf16.msra.mxu0 0
    %2463 = vmatpush.bf16.msra.mxu0 0
    %2464 = vmatpush.bf16.msra.mxu0 0
    %2465 = vmatpush.bf16.msra.mxu0 %v1098
    %2466 = vmatpush.bf16.msra.mxu0 %v1090
    %2467 = vmatmul.bf16.gmra.mxu0 %v2359
    %v2468 = vpop.f32.mrf.mxu0
    %v2469 = vadd.f32 0.0, %v2468
    %v2470 = vpop.f32.mrf.mxu0
    %v2471 = vadd.f32 0.0, %v2470
    %2472 = vdwg.mxu0
    %v2473 = vmul.f32 %v2371, %v1231
    %v2474 = vmul.f32 %v2385, %v1232
    %v2475 = vmul.f32 %v2399, %v1233
    %v2476 = vmul.f32 %v2413, %v1234
    %v2477 = vmul.f32 %v2427, %v1235
    %v2478 = vmul.f32 %v2441, %v1236
    %v2479 = vmul.f32 %v2455, %v1237
    %v2480 = vmul.f32 %v2469, %v1238
    %v2481 = vmul.f32 %v2373, %v1239
    %v2482 = vmul.f32 %v2387, %v1240
    %v2483 = vmul.f32 %v2401, %v1241
    %v2484 = vmul.f32 %v2415, %v1242
    %v2485 = vmul.f32 %v2429, %v1243
    %v2486 = vmul.f32 %v2443, %v1244
    %v2487 = vmul.f32 %v2457, %v1245
    %v2488 = vmul.f32 %v2471, %v1246
    %v2489 = vpack.c.bf16 %v2481, %v2473
    %v2490 = vpack.c.bf16 %v2482, %v2474
    %v2491 = vpack.c.bf16 %v2483, %v2475
    %v2492 = vpack.c.bf16 %v2484, %v2476
    %v2493 = vpack.c.bf16 %v2485, %v2477
    %v2494 = vpack.c.bf16 %v2486, %v2478
    %v2495 = vpack.c.bf16 %v2487, %v2479
    %v2496 = vpack.c.bf16 %v2488, %v2480
    %2497 = vmatpush.bf16.msra.mxu0 %v1534
    %2498 = vmatpush.bf16.msra.mxu0 %v1533
    %2499 = vmatpush.bf16.msra.mxu0 %v1532
    %2500 = vmatpush.bf16.msra.mxu0 %v1531
    %2501 = vmatpush.bf16.msra.mxu0 %v1530
    %2502 = vmatpush.bf16.msra.mxu0 %v1529
    %2503 = vmatpush.bf16.msra.mxu0 %v1528
    %2504 = vmatpush.bf16.msra.mxu0 %v1527
    %2505 = vmatmul.bf16.gmra.mxu0 %v2489
    %v2506 = vpop.f32.mrf.mxu0
    %v2507 = vadd.f32 0.0, %v2506
    %v2508 = vpop.f32.mrf.mxu0
    %v2509 = vadd.f32 0.0, %v2508
    %2510 = vdwg.mxu0
    %2511 = vmatpush.bf16.msra.mxu0 %v1542
    %2512 = vmatpush.bf16.msra.mxu0 %v1541
    %2513 = vmatpush.bf16.msra.mxu0 %v1540
    %2514 = vmatpush.bf16.msra.mxu0 %v1539
    %2515 = vmatpush.bf16.msra.mxu0 %v1538
    %2516 = vmatpush.bf16.msra.mxu0 %v1537
    %2517 = vmatpush.bf16.msra.mxu0 %v1536
    %2518 = vmatpush.bf16.msra.mxu0 %v1535
    %2519 = vmatmul.bf16.gmra.mxu0 %v2490
    %v2520 = vpop.f32.mrf.mxu0
    %v2521 = vadd.f32 %v2507, %v2520
    %v2522 = vpop.f32.mrf.mxu0
    %v2523 = vadd.f32 %v2509, %v2522
    %2524 = vdwg.mxu0
    %2525 = vmatpush.bf16.msra.mxu0 %v1550
    %2526 = vmatpush.bf16.msra.mxu0 %v1549
    %2527 = vmatpush.bf16.msra.mxu0 %v1548
    %2528 = vmatpush.bf16.msra.mxu0 %v1547
    %2529 = vmatpush.bf16.msra.mxu0 %v1546
    %2530 = vmatpush.bf16.msra.mxu0 %v1545
    %2531 = vmatpush.bf16.msra.mxu0 %v1544
    %2532 = vmatpush.bf16.msra.mxu0 %v1543
    %2533 = vmatmul.bf16.gmra.mxu0 %v2491
    %v2534 = vpop.f32.mrf.mxu0
    %v2535 = vadd.f32 %v2521, %v2534
    %v2536 = vpop.f32.mrf.mxu0
    %v2537 = vadd.f32 %v2523, %v2536
    %2538 = vdwg.mxu0
    %2539 = vmatpush.bf16.msra.mxu0 %v1558
    %2540 = vmatpush.bf16.msra.mxu0 %v1557
    %2541 = vmatpush.bf16.msra.mxu0 %v1556
    %2542 = vmatpush.bf16.msra.mxu0 %v1555
    %2543 = vmatpush.bf16.msra.mxu0 %v1554
    %2544 = vmatpush.bf16.msra.mxu0 %v1553
    %2545 = vmatpush.bf16.msra.mxu0 %v1552
    %2546 = vmatpush.bf16.msra.mxu0 %v1551
    %2547 = vmatmul.bf16.gmra.mxu0 %v2492
    %v2548 = vpop.f32.mrf.mxu0
    %v2549 = vadd.f32 %v2535, %v2548
    %v2550 = vpop.f32.mrf.mxu0
    %v2551 = vadd.f32 %v2537, %v2550
    %2552 = vdwg.mxu0
    %2553 = vmatpush.bf16.msra.mxu0 %v1566
    %2554 = vmatpush.bf16.msra.mxu0 %v1565
    %2555 = vmatpush.bf16.msra.mxu0 %v1564
    %2556 = vmatpush.bf16.msra.mxu0 %v1563
    %2557 = vmatpush.bf16.msra.mxu0 %v1562
    %2558 = vmatpush.bf16.msra.mxu0 %v1561
    %2559 = vmatpush.bf16.msra.mxu0 %v1560
    %2560 = vmatpush.bf16.msra.mxu0 %v1559
    %2561 = vmatmul.bf16.gmra.mxu0 %v2493
    %v2562 = vpop.f32.mrf.mxu0
    %v2563 = vadd.f32 %v2549, %v2562
    %v2564 = vpop.f32.mrf.mxu0
    %v2565 = vadd.f32 %v2551, %v2564
    %2566 = vdwg.mxu0
    %2567 = vmatpush.bf16.msra.mxu0 %v1574
    %2568 = vmatpush.bf16.msra.mxu0 %v1573
    %2569 = vmatpush.bf16.msra.mxu0 %v1572
    %2570 = vmatpush.bf16.msra.mxu0 %v1571
    %2571 = vmatpush.bf16.msra.mxu0 %v1570
    %2572 = vmatpush.bf16.msra.mxu0 %v1569
    %2573 = vmatpush.bf16.msra.mxu0 %v1568
    %2574 = vmatpush.bf16.msra.mxu0 %v1567
    %2575 = vmatmul.bf16.gmra.mxu0 %v2494
    %v2576 = vpop.f32.mrf.mxu0
    %v2577 = vadd.f32 %v2563, %v2576
    %v2578 = vpop.f32.mrf.mxu0
    %v2579 = vadd.f32 %v2565, %v2578
    %2580 = vdwg.mxu0
    %2581 = vmatpush.bf16.msra.mxu0 %v1582
    %2582 = vmatpush.bf16.msra.mxu0 %v1581
    %2583 = vmatpush.bf16.msra.mxu0 %v1580
    %2584 = vmatpush.bf16.msra.mxu0 %v1579
    %2585 = vmatpush.bf16.msra.mxu0 %v1578
    %2586 = vmatpush.bf16.msra.mxu0 %v1577
    %2587 = vmatpush.bf16.msra.mxu0 %v1576
    %2588 = vmatpush.bf16.msra.mxu0 %v1575
    %2589 = vmatmul.bf16.gmra.mxu0 %v2495
    %v2590 = vpop.f32.mrf.mxu0
    %v2591 = vadd.f32 %v2577, %v2590
    %v2592 = vpop.f32.mrf.mxu0
    %v2593 = vadd.f32 %v2579, %v2592
    %2594 = vdwg.mxu0
    %2595 = vmatpush.bf16.msra.mxu0 %v1590
    %2596 = vmatpush.bf16.msra.mxu0 %v1589
    %2597 = vmatpush.bf16.msra.mxu0 %v1588
    %2598 = vmatpush.bf16.msra.mxu0 %v1587
    %2599 = vmatpush.bf16.msra.mxu0 %v1586
    %2600 = vmatpush.bf16.msra.mxu0 %v1585
    %2601 = vmatpush.bf16.msra.mxu0 %v1584
    %2602 = vmatpush.bf16.msra.mxu0 %v1583
    %2603 = vmatmul.bf16.gmra.mxu0 %v2496
    %v2604 = vpop.f32.mrf.mxu0
    %v2605 = vadd.f32 %v2591, %v2604
    %v2606 = vpop.f32.mrf.mxu0
    %v2607 = vadd.f32 %v2593, %v2606
    %2608 = vdwg.mxu0
    %v2609 = vpack.c.bf16 %v2607, %v2605
    %2610 = vmatpush.bf16.msra.mxu0 0
    %2611 = vmatpush.bf16.msra.mxu0 0
    %2612 = vmatpush.bf16.msra.mxu0 0
    %2613 = vmatpush.bf16.msra.mxu0 0
    %2614 = vmatpush.bf16.msra.mxu0 0
    %2615 = vmatpush.bf16.msra.mxu0 0
    %2616 = vmatpush.bf16.msra.mxu0 0
    %2617 = vmatpush.bf16.msra.mxu0 %v2609
    %2618 = vmatmul.bf16.gmra.mxu0 %v1774
    %v2619 = vpop.f32.mrf.mxu0
    %v2620 = vadd.f32 %v1001, %v2619
    %v2621 = vpop.f32.mrf.mxu0
    %v2622 = vadd.f32 %v1001, %v2621
    %2623 = vdwg.mxu0
    %v2624 = vmax.f32 %v2620, 0.0
    %v2625 = vmax.f32 %v2622, 0.0
    %v2626 = vpack.c.bf16 %v2625, %v2624
    %v2628 = vsel %vm1115, %v2626, 0
    %2630 = vmatpush.bf16.msra.mxu0 0
    %2631 = vmatpush.bf16.msra.mxu0 0
    %2632 = vmatpush.bf16.msra.mxu0 0
    %2633 = vmatpush.bf16.msra.mxu0 0
    %2634 = vmatpush.bf16.msra.mxu0 0
    %2635 = vmatpush.bf16.msra.mxu0 0
    %2636 = vmatpush.bf16.msra.mxu0 %v1802
    %2637 = vmatpush.bf16.msra.mxu0 %v1801
    %2638 = vmatmul.bf16.gmra.mxu0 %v2628
    %v2639 = vpop.f32.mrf.mxu0
    %v2640 = vadd.f32 %v1005, %v2639
    %v2641 = vpop.f32.mrf.mxu0
    %v2642 = vadd.f32 %v1005, %v2641
    %2643 = vdwg.mxu0
    %v2645 = vsel %vm1115, %v2341, 0
    %2647 = vmatpush.bf16.msra.mxu0 0
    %2648 = vmatpush.bf16.msra.mxu0 0
    %2649 = vmatpush.bf16.msra.mxu0 0
    %2650 = vmatpush.bf16.msra.mxu0 0
    %2651 = vmatpush.bf16.msra.mxu0 0
    %2652 = vmatpush.bf16.msra.mxu0 0
    %2653 = vmatpush.bf16.msra.mxu0 %v1831
    %2654 = vmatpush.bf16.msra.mxu0 %v1830
    %2655 = vmatmul.bf16.gmra.mxu0 %v2645
    %v2656 = vpop.f32.mrf.mxu0
    %v2657 = vadd.f32 %v1009, %v2656
    %v2658 = vpop.f32.mrf.mxu0
    %v2659 = vadd.f32 %v1009, %v2658
    %2660 = vdwg.mxu0
    %v2661 = vadd.f32 %v2640, %v2657
    %v2662 = vadd.f32 %v2642, %v2659
    %v2663 = vxor.u32 %v2661, 2147483648
    %v2664 = vxor.u32 %v2662, 2147483648
    %v2665 = vmul.f32 %v2663, 1.442695
    %v2666 = vpow.pop %v2665
    %v2667 = vmul.f32 %v2664, 1.442695
    %v2668 = vpow.pop %v2667
    %v2669 = vadd.f32 %v2666, 1.0
    %v2670 = vadd.f32 %v2668, 1.0
    %v2671 = vrcp.pop %v2669
    %v2672 = vmul.f32 %v2669, %v2671
    %v2673 = vsub.f32 1.0, %v2672
    %v2674 = vmul.f32 %v2671, %v2673
    %v2675 = vadd.f32 %v2671, %v2674
    %vm2676 = vweird.f32 %v2669
    %vm2677 = vweird.f32 %v2671
    %vm2678 = vmor %vm2676, %vm2677
    %v2679 = vsel %vm2678, %v2671, %v2675
    %v2680 = vand.u32 2147483647, %v2669
    %vm2681 = vcmp.eq.f32.partialorder %v2680, 8.507059e+37
    %v2682 = vand.u32 %v2669, 2147483648
    %v2683 = vor.u32 1.1754944e-38, %v2682
    %v2684 = vsel %vm2681, %v2683, %v2679
    %v2685 = vmul.f32 1.0, %v2684
    %v2686 = vrcp.pop %v2670
    %v2687 = vmul.f32 %v2670, %v2686
    %v2688 = vsub.f32 1.0, %v2687
    %v2689 = vmul.f32 %v2686, %v2688
    %v2690 = vadd.f32 %v2686, %v2689
    %vm2691 = vweird.f32 %v2670
    %vm2692 = vweird.f32 %v2686
    %vm2693 = vmor %vm2691, %vm2692
    %v2694 = vsel %vm2693, %v2686, %v2690
    %v2695 = vand.u32 2147483647, %v2670
    %vm2696 = vcmp.eq.f32.partialorder %v2695, 8.507059e+37
    %v2697 = vand.u32 %v2670, 2147483648
    %v2698 = vor.u32 1.1754944e-38, %v2697
    %v2699 = vsel %vm2696, %v2698, %v2694
    %v2700 = vmul.f32 1.0, %v2699
    %2703 = vrot.lane.b32.xlu0 %v2657, 64
    %v2704 = vpop.permute.xlu0 %2703
    %2705 = vrot.lane.b32.xlu0 %v2659, 64
    %v2706 = vpop.permute.xlu0 %2705
    %v2709 = vmul.f32 %v2685, %v2704
    %v2710 = vmul.f32 %v2700, %v2706
    %2713 = vrot.lane.b32.xlu0 %v2709, 64
    %v2714 = vpop.permute.xlu0 %2713
    %2715 = vrot.lane.b32.xlu0 %v2710, 64
    %v2716 = vpop.permute.xlu0 %2715
    %v2719 = vadd.f32 %v2640, %v2714
    %v2720 = vadd.f32 %v2642, %v2716
    %v2721 = vtanh.pop %v2719
    %v2722 = vtanh.pop %v2720
    %v2723 = vsub.f32 1.0, %v2685
    %v2724 = vsub.f32 1.0, %v2700
    %2727 = vrot.lane.b32.xlu0 %v2721, 96
    %v2728 = vpop.permute.xlu0 %2727
    %2729 = vrot.lane.b32.xlu0 %v2722, 96
    %v2730 = vpop.permute.xlu0 %2729
    %v2733 = vmul.f32 %v2723, %v2728
    %v2734 = vmul.f32 %v2724, %v2730
    %v2735 = vmul.f32 %v2685, %v2336
    %v2736 = vmul.f32 %v2700, %v2337
    %v2737 = vadd.f32 %v2733, %v2735
    %v2738 = vadd.f32 %v2734, %v2736
    %2741 = vrot.lane.b32.xlu0 %v2737, 96
    %v2742 = vpop.permute.xlu0 %2741
    %2743 = vrot.lane.b32.xlu0 %v2738, 96
    %v2744 = vpop.permute.xlu0 %2743
    %2747 = vst.msk [vmem:[#allocation23] sm:$0xff] %vm1115, %v2742
    %2748 = vst.msk [vmem:[#allocation23 + $0x8] sm:$0xff] %vm1115, %v2744
    %v2749 = vld [vmem:[%s4] sm:$0xf]
    %v2750 = vunpack.c.l.bf16 %v2749
    %vm2751 = vcmp.gt.f32.partialorder %v2750, 0.0
    %v2752 = vpack.c.bf16 %v2738, %v2737
    %v2753 = vld [vmem:[#allocation20] sm:$0xf]
    %v2754 = vld [vmem:[#allocation20 + $0x4] sm:$0xf]
    %v2755 = vld [vmem:[#allocation20 + $0x8] sm:$0xf]
    %v2756 = vld [vmem:[#allocation20 + $0xc] sm:$0xf]
    %v2757 = vld [vmem:[#allocation20 + $0x10] sm:$0xf]
    %v2758 = vld [vmem:[#allocation20 + $0x14] sm:$0xf]
    %v2759 = vld [vmem:[#allocation20 + $0x18] sm:$0xf]
    %v2760 = vld [vmem:[#allocation20 + $0x1c] sm:$0xf]
    %v2761 = vld [vmem:[#allocation20 + $0x20] sm:$0xf]
    %v2762 = vld [vmem:[#allocation20 + $0x24] sm:$0xf]
    %v2763 = vld [vmem:[#allocation20 + $0x28] sm:$0xf]
    %v2764 = vld [vmem:[#allocation20 + $0x2c] sm:$0xf]
    %v2765 = vld [vmem:[%s17] sm:$0x1]
    %v2767 = vperm.slane %v2765, 0
    %v2769 = vpack.c.bf16 0.0, 0.0
    %v2782 = vunpack.c.l.b16 %v2753
    %v2783 = vunpack.c.l.b16 %v2754
    %v2784 = vunpack.c.l.b16 %v2755
    %v2785 = vunpack.c.l.b16 %v2756
    %v2786 = vunpack.c.l.b16 %v2757
    %v2787 = vunpack.c.l.b16 %v2758
    %v2788 = vunpack.c.l.b16 %v2759
    %v2789 = vunpack.c.l.b16 %v2760
    %v2790 = vunpack.c.l.b16 %v2761
    %v2791 = vunpack.c.l.b16 %v2762
    %v2792 = vunpack.c.l.b16 %v2763
    %v2793 = vunpack.c.l.b16 %v2764
    %v2794 = vpack.c.b16 %v2783, %v2782
    %v2795 = vpack.c.b16 %v2785, %v2784
    %v2796 = vpack.c.b16 %v2787, %v2786
    %v2797 = vpack.c.b16 %v2789, %v2788
    %v2798 = vpack.c.b16 %v2791, %v2790
    %v2799 = vpack.c.b16 %v2793, %v2792
    %vm2806 = vcmask 785408
    %v2808 = vsel %vm2806, %v2769, 0
    %2810 = vmatpush.bf16.msra.mxu0 0
    %2811 = vmatpush.bf16.msra.mxu0 0
    %2812 = vmatpush.bf16.msra.mxu0 %v2799
    %2813 = vmatpush.bf16.msra.mxu0 %v2798
    %2814 = vmatpush.bf16.msra.mxu0 %v2797
    %2815 = vmatpush.bf16.msra.mxu0 %v2796
    %2816 = vmatpush.bf16.msra.mxu0 %v2795
    %2817 = vmatpush.bf16.msra.mxu0 %v2794
    %2818 = vmatmul.bf16.gmra.mxu0 %v2808
    %v2819 = vpop.f32.mrf.mxu0
    %v2820 = vadd.f32 %v2767, %v2819
    %v2821 = vpop.f32.mrf.mxu0
    %2822 = vdwg.mxu0
    %v2823 = vxor.u32 %v2820, 2147483648
    %v2824 = vmul.f32 %v2823, 1.442695
    %v2825 = vpow.pop %v2824
    %v2826 = vadd.f32 %v2825, 1.0
    %v2827 = vrcp.pop %v2826
    %v2828 = vmul.f32 %v2826, %v2827
    %v2829 = vsub.f32 1.0, %v2828
    %v2830 = vmul.f32 %v2827, %v2829
    %v2831 = vadd.f32 %v2827, %v2830
    %vm2832 = vweird.f32 %v2826
    %vm2833 = vweird.f32 %v2827
    %vm2834 = vmor %vm2832, %vm2833
    %v2835 = vsel %vm2834, %v2827, %v2831
    %v2836 = vand.u32 2147483647, %v2826
    %vm2837 = vcmp.eq.f32.partialorder %v2836, 8.507059e+37
    %v2838 = vand.u32 %v2826, 2147483648
    %v2839 = vor.u32 1.1754944e-38, %v2838
    %v2840 = vsel %vm2837, %v2839, %v2835
    %v2841 = vmul.f32 1.0, %v2840
    %v2842 = vtanh.pop %v2820
    %v2843 = vmul.f32 %v2841, 0.0
    %2845 = vrot.lane.b32.xlu0 %v2842, 64
    %v2846 = vpop.permute.xlu0 %2845
    %v2848 = vmul.f32 %v2841, %v2846
    %2850 = vrot.lane.b32.xlu0 %v2848, 32
    %v2851 = vpop.permute.xlu0 %2850
    %v2853 = vadd.f32 %v2843, %v2851
    %v2854 = vtanh.pop %v2853
    %2856 = vrot.lane.b32.xlu0 %v2854, 64
    %v2857 = vpop.permute.xlu0 %2856
    %v2859 = vmul.f32 %v2841, %v2857
    %v2860 = vpack.c.bf16 %v2859, %v2859
    %2862 = vrot.lane.b32.xlu0 %v2860, 32
    %v2863 = vpop.permute.xlu0 %2862
    %2865 = vrot.lane.b32.xlu0 %v2752, 96
    %v2866 = vpop.permute.xlu0 %2865
    %v2868 = vsel %vm1115, %v2863, 0
    %v2871 = vsel %vm1115, %v2866, 0
    %2873 = vmatpush.bf16.xpose.msra.mxu0 0
    %2874 = vmatpush.bf16.xpose.msra.mxu0 0
    %2875 = vmatpush.bf16.xpose.msra.mxu0 0
    %2876 = vmatpush.bf16.xpose.msra.mxu0 0
    %2877 = vmatpush.bf16.xpose.msra.mxu0 0
    %2878 = vmatpush.bf16.xpose.msra.mxu0 0
    %2879 = vmatpush.bf16.xpose.msra.mxu0 0
    %2880 = vmatpush.bf16.xpose.msra.mxu0 %v2871
    %2881 = vmatmul.bf16.gmra.mxu0 %v2868
    %v2882 = vpop.f32.mrf.mxu0
    %v2883 = vadd.f32 0.0, %v2882
    %v2884 = vpop.f32.mrf.mxu0
    %2885 = vdwg.mxu0
    %v2886 = vsel %vm2751, %v2883, -1e+30
    %v2887 = vsel %vm264, %v2886, -inf
    %2888 = vmax.xlane.f32.xlu0 %v2887
    %v2889 = vpop.xlane.xlu0 %2888
    %v2890 = vsub.f32 %v2886, %v2889
    %v2891 = vmul.f32 %v2890, 1.442695
    %v2892 = vpow.pop %v2891
    %v2893 = vsel %vm264, %v2892, 0.0
    %2894 = vadd.xlane.f32.xlu0 %v2893
    %v2895 = vpop.xlane.xlu0 %2894
    %v2896 = vrcp.pop %v2895
    %v2897 = vmul.f32 %v2892, %v2896
    %v2898 = vpack.c.bf16 %v2897, %v2897
    %v2901 = vsel %vm264, %v2898, 0
    %2903 = vmatpush.bf16.msra.mxu0 0
    %2904 = vmatpush.bf16.msra.mxu0 0
    %2905 = vmatpush.bf16.msra.mxu0 0
    %2906 = vmatpush.bf16.msra.mxu0 0
    %2907 = vmatpush.bf16.msra.mxu0 0
    %2908 = vmatpush.bf16.msra.mxu0 0
    %2909 = vmatpush.bf16.msra.mxu0 0
    %2910 = vmatpush.bf16.msra.mxu0 %v2866
    %2911 = vmatmul.bf16.gmra.mxu0 %v2901
    %v2912 = vpop.f32.mrf.mxu0
    %v2913 = vadd.f32 0.0, %v2912
    %v2914 = vpop.f32.mrf.mxu0
    %2915 = vdwg.mxu0
    %2917 = vrot.lane.b32.xlu0 %v2859, 32
    %v2918 = vpop.permute.xlu0 %2917
    %2921 = vrot.lane.b32.xlu0 %v2913, 32
    %v2922 = vpop.permute.xlu0 %2921
    %2924 = vrot.lane.b32.xlu0 %v2859, 96
    %v2925 = vpop.permute.xlu0 %2924
    %v2927 = vsel %vm1115, %v2918, %v2922
    %vm2928 = vcmask 523264
    %v2929 = vsel %vm2928, %v2927, %v2925
    %v2930 = vpack.c.bf16 %v2929, %v2929
    %v2932 = vsel %vm2806, %v2930, 0
    %2934 = vmatpush.bf16.msra.mxu0 0
    %2935 = vmatpush.bf16.msra.mxu0 0
    %2936 = vmatpush.bf16.msra.mxu0 %v2799
    %2937 = vmatpush.bf16.msra.mxu0 %v2798
    %2938 = vmatpush.bf16.msra.mxu0 %v2797
    %2939 = vmatpush.bf16.msra.mxu0 %v2796
    %2940 = vmatpush.bf16.msra.mxu0 %v2795
    %2941 = vmatpush.bf16.msra.mxu0 %v2794
    %2942 = vmatmul.bf16.gmra.mxu0 %v2932
    %v2943 = vpop.f32.mrf.mxu0
    %v2944 = vadd.f32 %v2767, %v2943
    %v2945 = vpop.f32.mrf.mxu0
    %2946 = vdwg.mxu0
    %v2947 = vxor.u32 %v2944, 2147483648
    %v2948 = vmul.f32 %v2947, 1.442695
    %v2949 = vpow.pop %v2948
    %v2950 = vadd.f32 %v2949, 1.0
    %v2951 = vrcp.pop %v2950
    %v2952 = vmul.f32 %v2950, %v2951
    %v2953 = vsub.f32 1.0, %v2952
    %v2954 = vmul.f32 %v2951, %v2953
    %v2955 = vadd.f32 %v2951, %v2954
    %vm2956 = vweird.f32 %v2950
    %vm2957 = vweird.f32 %v2951
    %vm2958 = vmor %vm2956, %vm2957
    %v2959 = vsel %vm2958, %v2951, %v2955
    %v2960 = vand.u32 2147483647, %v2950
    %vm2961 = vcmp.eq.f32.partialorder %v2960, 8.507059e+37
    %v2962 = vand.u32 %v2950, 2147483648
    %v2963 = vor.u32 1.1754944e-38, %v2962
    %v2964 = vsel %vm2961, %v2963, %v2959
    %v2965 = vmul.f32 1.0, %v2964
    %v2966 = vtanh.pop %v2944
    %v2967 = vmul.f32 %v2965, %v2853
    %2969 = vrot.lane.b32.xlu0 %v2966, 64
    %v2970 = vpop.permute.xlu0 %2969
    %v2972 = vmul.f32 %v2965, %v2970
    %2974 = vrot.lane.b32.xlu0 %v2972, 32
    %v2975 = vpop.permute.xlu0 %2974
    %v2977 = vadd.f32 %v2967, %v2975
    %v2978 = vtanh.pop %v2977
    %2980 = vrot.lane.b32.xlu0 %v2978, 64
    %v2981 = vpop.permute.xlu0 %2980
    %v2983 = vmul.f32 %v2965, %v2981
    %v2984 = vpack.c.bf16 %v2983, %v2983
    %2986 = vrot.lane.b32.xlu0 %v2984, 32
    %v2987 = vpop.permute.xlu0 %2986
    %v2989 = vsel %vm1115, %v2987, 0
    %2991 = vmatpush.bf16.xpose.msra.mxu0 0
    %2992 = vmatpush.bf16.xpose.msra.mxu0 0
    %2993 = vmatpush.bf16.xpose.msra.mxu0 0
    %2994 = vmatpush.bf16.xpose.msra.mxu0 0
    %2995 = vmatpush.bf16.xpose.msra.mxu0 0
    %2996 = vmatpush.bf16.xpose.msra.mxu0 0
    %2997 = vmatpush.bf16.xpose.msra.mxu0 0
    %2998 = vmatpush.bf16.xpose.msra.mxu0 %v2871
    %2999 = vmatmul.bf16.gmra.mxu0 %v2989
    %v3000 = vpop.f32.mrf.mxu0
    %v3001 = vadd.f32 0.0, %v3000
    %v3002 = vpop.f32.mrf.mxu0
    %3003 = vdwg.mxu0
    %v3004 = vsel %vm2751, %v3001, -1e+30
    %v3005 = vsel %vm264, %v3004, -inf
    %3006 = vmax.xlane.f32.xlu0 %v3005
    %v3007 = vpop.xlane.xlu0 %3006
    %v3008 = vsub.f32 %v3004, %v3007
    %v3009 = vmul.f32 %v3008, 1.442695
    %v3010 = vpow.pop %v3009
    %v3011 = vsel %vm264, %v3010, 0.0
    %3012 = vadd.xlane.f32.xlu0 %v3011
    %v3013 = vpop.xlane.xlu0 %3012
    %v3014 = vrcp.pop %v3013
    %v3015 = vmul.f32 %v3010, %v3014
    %v3016 = vpack.c.bf16 %v3015, %v3015
    %v3018 = vsel %vm264, %v3016, 0
    %3020 = vmatpush.bf16.msra.mxu0 0
    %3021 = vmatpush.bf16.msra.mxu0 0
    %3022 = vmatpush.bf16.msra.mxu0 0
    %3023 = vmatpush.bf16.msra.mxu0 0
    %3024 = vmatpush.bf16.msra.mxu0 0
    %3025 = vmatpush.bf16.msra.mxu0 0
    %3026 = vmatpush.bf16.msra.mxu0 0
    %3027 = vmatpush.bf16.msra.mxu0 %v2866
    %3028 = vmatmul.bf16.gmra.mxu0 %v3018
    %v3029 = vpop.f32.mrf.mxu0
    %v3030 = vadd.f32 0.0, %v3029
    %v3031 = vpop.f32.mrf.mxu0
    %3032 = vdwg.mxu0
    %3034 = vrot.lane.b32.xlu0 %v2983, 32
    %v3035 = vpop.permute.xlu0 %3034
    %3038 = vrot.lane.b32.xlu0 %v3030, 32
    %v3039 = vpop.permute.xlu0 %3038
    %3041 = vrot.lane.b32.xlu0 %v2983, 96
    %v3042 = vpop.permute.xlu0 %3041
    %v3044 = vsel %vm1115, %v3035, %v3039
    %v3045 = vsel %vm2928, %v3044, %v3042
    %v3046 = vpack.c.bf16 %v3045, %v3045
    %v3048 = vsel %vm2806, %v3046, 0
    %3050 = vmatpush.bf16.msra.mxu0 0
    %3051 = vmatpush.bf16.msra.mxu0 0
    %3052 = vmatpush.bf16.msra.mxu0 %v2799
    %3053 = vmatpush.bf16.msra.mxu0 %v2798
    %3054 = vmatpush.bf16.msra.mxu0 %v2797
    %3055 = vmatpush.bf16.msra.mxu0 %v2796
    %3056 = vmatpush.bf16.msra.mxu0 %v2795
    %3057 = vmatpush.bf16.msra.mxu0 %v2794
    %3058 = vmatmul.bf16.gmra.mxu0 %v3048
    %v3059 = vpop.f32.mrf.mxu0
    %v3060 = vadd.f32 %v2767, %v3059
    %v3061 = vpop.f32.mrf.mxu0
    %3062 = vdwg.mxu0
    %v3063 = vxor.u32 %v3060, 2147483648
    %v3064 = vmul.f32 %v3063, 1.442695
    %v3065 = vpow.pop %v3064
    %v3066 = vadd.f32 %v3065, 1.0
    %v3067 = vrcp.pop %v3066
    %v3068 = vmul.f32 %v3066, %v3067
    %v3069 = vsub.f32 1.0, %v3068
    %v3070 = vmul.f32 %v3067, %v3069
    %v3071 = vadd.f32 %v3067, %v3070
    %vm3072 = vweird.f32 %v3066
    %vm3073 = vweird.f32 %v3067
    %vm3074 = vmor %vm3072, %vm3073
    %v3075 = vsel %vm3074, %v3067, %v3071
    %v3076 = vand.u32 2147483647, %v3066
    %vm3077 = vcmp.eq.f32.partialorder %v3076, 8.507059e+37
    %v3078 = vand.u32 %v3066, 2147483648
    %v3079 = vor.u32 1.1754944e-38, %v3078
    %v3080 = vsel %vm3077, %v3079, %v3075
    %v3081 = vmul.f32 1.0, %v3080
    %v3082 = vtanh.pop %v3060
    %v3083 = vmul.f32 %v3081, %v2977
    %3085 = vrot.lane.b32.xlu0 %v3082, 64
    %v3086 = vpop.permute.xlu0 %3085
    %v3088 = vmul.f32 %v3081, %v3086
    %3090 = vrot.lane.b32.xlu0 %v3088, 32
    %v3091 = vpop.permute.xlu0 %3090
    %v3093 = vadd.f32 %v3083, %v3091
    %v3094 = vtanh.pop %v3093
    %3096 = vrot.lane.b32.xlu0 %v3094, 64
    %v3097 = vpop.permute.xlu0 %3096
    %v3099 = vmul.f32 %v3081, %v3097
    %v3100 = vpack.c.bf16 %v3099, %v3099
    %3102 = vrot.lane.b32.xlu0 %v3100, 32
    %v3103 = vpop.permute.xlu0 %3102
    %v3105 = vsel %vm1115, %v3103, 0
    %3107 = vmatpush.bf16.xpose.msra.mxu0 0
    %3108 = vmatpush.bf16.xpose.msra.mxu0 0
    %3109 = vmatpush.bf16.xpose.msra.mxu0 0
    %3110 = vmatpush.bf16.xpose.msra.mxu0 0
    %3111 = vmatpush.bf16.xpose.msra.mxu0 0
    %3112 = vmatpush.bf16.xpose.msra.mxu0 0
    %3113 = vmatpush.bf16.xpose.msra.mxu0 0
    %3114 = vmatpush.bf16.xpose.msra.mxu0 %v2871
    %3115 = vmatmul.bf16.gmra.mxu0 %v3105
    %v3116 = vpop.f32.mrf.mxu0
    %v3117 = vadd.f32 0.0, %v3116
    %v3118 = vpop.f32.mrf.mxu0
    %3119 = vdwg.mxu0
    %v3120 = vsel %vm2751, %v3117, -1e+30
    %v3121 = vsel %vm264, %v3120, -inf
    %3122 = vmax.xlane.f32.xlu0 %v3121
    %v3123 = vpop.xlane.xlu0 %3122
    %v3124 = vsub.f32 %v3120, %v3123
    %v3125 = vmul.f32 %v3124, 1.442695
    %v3126 = vpow.pop %v3125
    %v3127 = vsel %vm264, %v3126, 0.0
    %3128 = vadd.xlane.f32.xlu0 %v3127
    %v3129 = vpop.xlane.xlu0 %3128
    %v3130 = vrcp.pop %v3129
    %v3131 = vmul.f32 %v3126, %v3130
    %v3132 = vpack.c.bf16 %v3131, %v3131
    %v3134 = vsel %vm264, %v3132, 0
    %3136 = vmatpush.bf16.msra.mxu0 0
    %3137 = vmatpush.bf16.msra.mxu0 0
    %3138 = vmatpush.bf16.msra.mxu0 0
    %3139 = vmatpush.bf16.msra.mxu0 0
    %3140 = vmatpush.bf16.msra.mxu0 0
    %3141 = vmatpush.bf16.msra.mxu0 0
    %3142 = vmatpush.bf16.msra.mxu0 0
    %3143 = vmatpush.bf16.msra.mxu0 %v2866
    %3144 = vmatmul.bf16.gmra.mxu0 %v3134
    %v3145 = vpop.f32.mrf.mxu0
    %v3146 = vadd.f32 0.0, %v3145
    %v3147 = vpop.f32.mrf.mxu0
    %3148 = vdwg.mxu0
    %3150 = vrot.lane.b32.xlu0 %v3099, 32
    %v3151 = vpop.permute.xlu0 %3150
    %3154 = vrot.lane.b32.xlu0 %v3146, 32
    %v3155 = vpop.permute.xlu0 %3154
    %v3157 = vsel %vm1115, %v3151, %v3155
    %3158 = vst.msk [vmem:[#allocation22] sm:$0xff] %vm2928, %v3157
    // Predicated region
    $region130: #{tpu_custom_call.1} parent=1 // pred_check
      _
    $region131: #{tpu_custom_call.1} parent=1 // pred_check_branch
      %3160 = sbr.rel (0) target = $region133
    $region132: #{tpu_custom_call.1} parent=1 // pred_region
      %3162 = vsyncadd [#allocation4], 0
      %s3164 = sshll.u32 [#allocation22], 4
      %s3165 = int_to_ptr.vmem [resolvable:$true] %s3164
      %s3166 = sshll.u32 %s20, 4
      %s3167 = int_to_ptr.hbm [resolvable:$true] %s3166
      %3169 = dma.vmem_to_hbm [thread:$0]  %s3165, 128, %s3167, [#allocation4]
    $region133: #{tpu_custom_call.1} parent=1 // pred_fallthru
      _
    // Predicated region
    $region134: #{tpu_custom_call.1} parent=1 // pred_check
      _
    $region135: #{tpu_custom_call.1} parent=1 // pred_check_branch
      %3171 = sbr.rel (0) target = $region137
    $region136: #{tpu_custom_call.1} parent=1 // pred_region
      %3173 = vsyncadd [#allocation24], 0
      %s3174 = sshll.u32 [#allocation23], 4
      %s3175 = int_to_ptr.vmem [resolvable:$true] %s3174
      %s3176 = sshll.u32 %s21, 4
      %s3177 = int_to_ptr.hbm [resolvable:$true] %s3176
      %3182 = dma.vmem_to_hbm [thread:$0]  %s3175, 256, %s3177, [#allocation24], 128, 128, 8
    $region137: #{tpu_custom_call.1} parent=1 // pred_fallthru
      _
    // Predicated region
    $region138: #{tpu_custom_call.1} parent=1 // pred_check
      _
    $region139: #{tpu_custom_call.1} parent=1 // pred_check_branch
      %3184 = sbr.rel (0) target = $region141
    $region140: #{tpu_custom_call.1} parent=1 // pred_region
      %3186 = dma.done [#allocation4], 128
    $region141: #{tpu_custom_call.1} parent=1 // pred_fallthru
      _
    // Predicated region
    $region142: #{tpu_custom_call.1} parent=1 // pred_check
      _
    $region143: #{tpu_custom_call.1} parent=1 // pred_check_branch
      %3188 = sbr.rel (0) target = $region145
    $region144: #{tpu_custom_call.1} parent=1 // pred_region
      %3190 = dma.done [#allocation24], 256
    $region145: #{tpu_custom_call.1} parent=1 // pred_fallthru
      _
    %3191 = vsyncpa [#allocation3], 1
    %3192 = vsyncpa [#allocation6], 1
    %3193 = vsyncpa [#allocation9], 1
    %3194 = vsyncpa [#allocation12], 1
    %3195 = vsyncpa [#allocation15], 1
    %3196 = vsyncpa [#allocation18], 1
    %3197 = vsyncpa [#allocation21], 1
    %3198 = vsyncpa [#allocation4], 1
    %3199 = vsyncpa [#allocation24], 1

</llo_original>
